<compile_context>
chip_gen: v7x
topology: tpu7x:2x2x1
jax: 0.10.0
libtpu: 0.0.40
codegen_flags: <defaults>
</compile_context>

<pallas_src>
import jax
import jax.numpy as jnp
from jax.experimental import pallas as pl
from jax.experimental.pallas import tpu as pltpu

# ---------------- config (small, RoBERTa-shaped) ----------------
VOCAB = 100
PAD_ID = 1            # RoBERTa padding_idx
HIDDEN = 64
N_LAYERS = 2
N_HEADS = 2
HEAD_DIM = HIDDEN // N_HEADS
FFN = 128
MAX_LEN = 16          # max_length (sequence length)
BATCH = 2
LN_EPS = 1e-5


# ---------------- in-kernel helpers ----------------
def _gelu(x):
    # TODO(synk): HF RoBERTa uses exact erf-based GELU; tanh approximation is
    # used for robust Mosaic lowering (numerically very close).
    return 0.5 * x * (1.0 + jnp.tanh(0.7978845608028654 * (x + 0.044715 * x * x * x)))


def _ln(x, g, b, eps=LN_EPS):
    mean = jnp.mean(x, axis=-1, keepdims=True)
    var = jnp.mean(jnp.square(x - mean), axis=-1, keepdims=True)
    return (x - mean) * jax.lax.rsqrt(var + eps) * g + b


def _bf16(x):
    return x.astype(jnp.bfloat16)


# ---------------- fused encoder kernel (one grid step = one batch element) --
def _encoder_kernel(emb_ref, mb_ref, eg_ref, eb_ref,
                    wqkv_ref, bqkv_ref, wo_ref, bo_ref,
                    ln1g_ref, ln1b_ref, w1_ref, b1_ref, w2_ref, b2_ref,
                    ln2g_ref, ln2b_ref, pw_ref, pb_ref,
                    seq_ref, pooled_ref):
    scale = 1.0 / (HEAD_DIM ** 0.5)

    # embedding LayerNorm (fused)
    x = emb_ref[0].astype(jnp.float32)                       # [S, H]
    h = _ln(x, eg_ref[...], eb_ref[...])                     # [S, H] f32

    bias = mb_ref[0]                                         # [1, S] additive mask

    # all transformer layers, weights resident in VMEM
    for l in range(N_LAYERS):
        # ---- fused QKV projection: one [H, 3H] matmul ----
        qkv = jnp.dot(_bf16(h), wqkv_ref[l],
                      preferred_element_type=jnp.float32) + bqkv_ref[l]   # [S, 3H]

        # ---- attention: head split via static lane slices ----
        ctx_heads = []
        for hd in range(N_HEADS):
            lo = hd * HEAD_DIM
            qh = qkv[:, lo:lo + HEAD_DIM]                            # [S, dh]
            kh = qkv[:, HIDDEN + lo:HIDDEN + lo + HEAD_DIM]          # [S, dh]
            vh = qkv[:, 2 * HIDDEN + lo:2 * HIDDEN + lo + HEAD_DIM]  # [S, dh]
            s = jax.lax.dot_general(_bf16(qh), _bf16(kh),
                                    (((1,), (1,)), ((), ())),
                                    preferred_element_type=jnp.float32)  # [S, S]
            s = s * scale + bias
            m = jnp.max(s, axis=-1, keepdims=True)
            p = jnp.exp(s - m)
            p = p * pl.reciprocal(jnp.sum(p, axis=-1, keepdims=True), approx=True)
            ctx_heads.append(jnp.dot(_bf16(p), _bf16(vh),
                                     preferred_element_type=jnp.float32))
        ctx = jnp.concatenate(ctx_heads, axis=-1)                    # [S, H]

        attn_out = jnp.dot(_bf16(ctx), wo_ref[l],
                           preferred_element_type=jnp.float32) + bo_ref[l]
        h = _ln(attn_out + h, ln1g_ref[l], ln1b_ref[l])

        # ---- feed forward ----
        inter = jnp.dot(_bf16(h), w1_ref[l],
                        preferred_element_type=jnp.float32) + b1_ref[l]
        inter = _gelu(inter)
        ffn_out = jnp.dot(_bf16(inter), w2_ref[l],
                          preferred_element_type=jnp.float32) + b2_ref[l]
        h = _ln(ffn_out + h, ln2g_ref[l], ln2b_ref[l])

    # sequence output
    seq_ref[0] = h.astype(seq_ref.dtype)

    # pooled output: dense + tanh on the <s> (CLS) token
    cls = h[0:1, :]                                                  # [1, H]
    pooled = jnp.tanh(jnp.dot(_bf16(cls), pw_ref[...],
                              preferred_element_type=jnp.float32) + pb_ref[...])
    pooled_ref[0] = pooled.astype(pooled_ref.dtype)


def encoder_forward(params, emb, mask_bias):
    """emb: [B, S, H] f32, mask_bias: [B, 1, S] f32 -> (seq_out [B,S,H], pooled [B,1,H])."""
    B, S, H = emb.shape
    L = params["wqkv"].shape[0]

    def full(shape):
        return pl.BlockSpec(shape, lambda b, _n=len(shape): (0,) * _n)

    def per_batch(s1, s2):
        return pl.BlockSpec((1, s1, s2), lambda b: (b, 0, 0))

    return pl.pallas_call(
        _encoder_kernel,
        out_shape=(jax.ShapeDtypeStruct((B, S, H), jnp.float32),
                   jax.ShapeDtypeStruct((B, 1, H), jnp.float32)),
        grid=(B,),
        in_specs=[
            per_batch(S, H),                       # emb
            per_batch(1, S),                       # mask bias
            full((1, H)), full((1, H)),            # emb LN gamma / beta
            full((L, H, 3 * H)), full((L, 1, 3 * H)),   # fused QKV W / b
            full((L, H, H)), full((L, 1, H)),           # attn out proj W / b
            full((L, 1, H)), full((L, 1, H)),           # LN1 gamma / beta
            full((L, H, FFN)), full((L, 1, FFN)),       # FFN W1 / b1
            full((L, FFN, H)), full((L, 1, H)),         # FFN W2 / b2
            full((L, 1, H)), full((L, 1, H)),           # LN2 gamma / beta
            full((H, H)), full((1, H)),                 # pooler W / b
        ],
        out_specs=(per_batch(S, H), per_batch(1, H)),
        compiler_params=pltpu.CompilerParams(
            dimension_semantics=("parallel",)),
    )(emb, mask_bias,
      params["emb_ln_g"], params["emb_ln_b"],
      params["wqkv"], params["bqkv"], params["wo"], params["bo"],
      params["ln1_g"], params["ln1_b"], params["w1"], params["b1"],
      params["w2"], params["b2"], params["ln2_g"], params["ln2_b"],
      params["pool_w"], params["pool_b"])


# ---------------- parameter init (deterministic, synthetic) ----------------
def init_params(key):
    def nrm(k, shape, scale=0.02):
        return scale * jax.random.normal(k, shape, dtype=jnp.float32)

    keys = iter(jax.random.split(key, 64))
    H, L = HIDDEN, N_LAYERS
    p = {
        "word_emb": nrm(next(keys), (VOCAB, H)),
        "pos_emb": nrm(next(keys), (MAX_LEN + PAD_ID + 2, H)),
        "type_emb": nrm(next(keys), (1, H)),
        "emb_ln_g": jnp.ones((1, H), jnp.float32),
        "emb_ln_b": jnp.zeros((1, H), jnp.float32),
        # stacked per-layer weights; matmul weights stored in bf16 (MXU path),
        # biases / LN params in f32 (VPU elementwise stays f32).
        "wqkv": nrm(next(keys), (L, H, 3 * H)).astype(jnp.bfloat16),
        "bqkv": jnp.zeros((L, 1, 3 * H), jnp.float32),
        "wo": nrm(next(keys), (L, H, H)).astype(jnp.bfloat16),
        "bo": jnp.zeros((L, 1, H), jnp.float32),
        "ln1_g": jnp.ones((L, 1, H), jnp.float32),
        "ln1_b": jnp.zeros((L, 1, H), jnp.float32),
        "w1": nrm(next(keys), (L, H, FFN)).astype(jnp.bfloat16),
        "b1": jnp.zeros((L, 1, FFN), jnp.float32),
        "w2": nrm(next(keys), (L, FFN, H)).astype(jnp.bfloat16),
        "b2": jnp.zeros((L, 1, H), jnp.float32),
        "ln2_g": jnp.ones((L, 1, H), jnp.float32),
        "ln2_b": jnp.zeros((L, 1, H), jnp.float32),
        "pool_w": nrm(next(keys), (H, H)).astype(jnp.bfloat16),
        "pool_b": jnp.zeros((1, H), jnp.float32),
    }
    return p


# ---------------- forward pass (RobertaSentenceEncoder.forward) ----------------
def roberta_sentence_encoder(params, word, mask, pos1=None, pos2=None,
                             cat_entity_rep=False):
    B, S = word.shape
    # RoBERTa position ids: cumsum over non-pad tokens, offset by padding_idx.
    not_pad = (word != PAD_ID).astype(jnp.int32)
    position_ids = jnp.cumsum(not_pad, axis=1) * not_pad + PAD_ID

    # Embedding gathers stay in plain JAX (XLA gather); everything downstream
    # (emb LayerNorm + all layers + pooler) is one fused Pallas kernel.
    emb = (params["word_emb"][word]
           + params["pos_emb"][position_ids]
           + params["type_emb"][0])                                  # [B, S, H]
    mask_bias = ((1.0 - mask.astype(jnp.float32)) * -10000.0).reshape(B, 1, S)

    seq_out, pooled = encoder_forward(params, emb, mask_bias)

    if not cat_entity_rep:
        return pooled[:, 0, :]                                       # [B, H]
    else:
        idx = jnp.arange(B)
        h_state = seq_out[idx, pos1]                                 # [B, H]
        t_state = seq_out[idx, pos2]                                 # [B, H]
        return jnp.concatenate([h_state, t_state], axis=-1)          # [B, 2H]


# ---------------- demo ----------------
if __name__ == "__main__":
    key = jax.random.PRNGKey(0)
    pkey, wkey = jax.random.split(key)
    params = init_params(pkey)

    # Build inputs['word'] and inputs['mask'] (int32 token ids / attention mask).
    word = jax.random.randint(wkey, (BATCH, MAX_LEN), 2, VOCAB, dtype=jnp.int32)
    lens = jnp.array([MAX_LEN, MAX_LEN - 4], dtype=jnp.int32)
    positions = jnp.arange(MAX_LEN, dtype=jnp.int32)[None, :]
    mask = (positions < lens[:, None]).astype(jnp.int32)
    word = jnp.where(mask == 1, word, PAD_ID)
    word = word.at[:, 0].set(0)  # <s> token id

    # Default path (cat_entity_rep=False): returns pooled representation x.
    pooled = roberta_sentence_encoder(params, word, mask, cat_entity_rep=False)
    jax.block_until_ready(pooled)
    assert pooled.shape == (BATCH, HIDDEN)
    assert bool(jnp.all(jnp.isfinite(pooled)))

    # Entity-rep path as well (pos1/pos2 gather + concat).
    pos1 = jnp.array([1, 2], dtype=jnp.int32)
    pos2 = jnp.array([3, 5], dtype=jnp.int32)
    state = roberta_sentence_encoder(params, word, mask, pos1, pos2,
                                     cat_entity_rep=True)
    jax.block_until_ready(state)
    assert state.shape == (BATCH, 2 * HIDDEN)
    assert bool(jnp.all(jnp.isfinite(state)))

    print("KERNEL_OK")
</pallas_src>

<mosaic_0001>
module attributes {stable_mosaic.version = 11 : i64} {
  func.func @_encoder_kernel(%arg0: i32, %arg1: memref<1x16x64xf32, #tpu.memory_space<vmem>>, %arg2: memref<1x1x16xf32, #tpu.memory_space<vmem>>, %arg3: memref<1x64xf32, #tpu.memory_space<vmem>>, %arg4: memref<1x64xf32, #tpu.memory_space<vmem>>, %arg5: memref<2x64x192xbf16, #tpu.memory_space<vmem>>, %arg6: memref<2x1x192xf32, #tpu.memory_space<vmem>>, %arg7: memref<2x64x64xbf16, #tpu.memory_space<vmem>>, %arg8: memref<2x1x64xf32, #tpu.memory_space<vmem>>, %arg9: memref<2x1x64xf32, #tpu.memory_space<vmem>>, %arg10: memref<2x1x64xf32, #tpu.memory_space<vmem>>, %arg11: memref<2x64x128xbf16, #tpu.memory_space<vmem>>, %arg12: memref<2x1x128xf32, #tpu.memory_space<vmem>>, %arg13: memref<2x128x64xbf16, #tpu.memory_space<vmem>>, %arg14: memref<2x1x64xf32, #tpu.memory_space<vmem>>, %arg15: memref<2x1x64xf32, #tpu.memory_space<vmem>>, %arg16: memref<2x1x64xf32, #tpu.memory_space<vmem>>, %arg17: memref<64x64xbf16, #tpu.memory_space<vmem>>, %arg18: memref<1x64xf32, #tpu.memory_space<vmem>>, %arg19: memref<1x16x64xf32, #tpu.memory_space<vmem>>, %arg20: memref<1x1x64xf32, #tpu.memory_space<vmem>>) attributes {dimension_semantics = [#tpu.dimension_semantics<parallel>], iteration_bounds = array<i64: 2>, scalar_prefetch = 0 : i64, scratch_operands = 0 : i64, tpu.core_type = #tpu.core_type<tc>, window_params = [{transform_indices = @transform_0, window_bounds = array<i64: 1, 16, 64>}, {transform_indices = @transform_1, window_bounds = array<i64: 1, 1, 16>}, {pipeline_mode = #tpu.pipeline_mode<synchronous>, transform_indices = @transform_2, window_bounds = array<i64: 1, 64>}, {pipeline_mode = #tpu.pipeline_mode<synchronous>, transform_indices = @transform_3, window_bounds = array<i64: 1, 64>}, {pipeline_mode = #tpu.pipeline_mode<synchronous>, transform_indices = @transform_4, window_bounds = array<i64: 2, 64, 192>}, {pipeline_mode = #tpu.pipeline_mode<synchronous>, transform_indices = @transform_5, window_bounds = array<i64: 2, 1, 192>}, {pipeline_mode = #tpu.pipeline_mode<synchronous>, transform_indices = @transform_6, window_bounds = array<i64: 2, 64, 64>}, {pipeline_mode = #tpu.pipeline_mode<synchronous>, transform_indices = @transform_7, window_bounds = array<i64: 2, 1, 64>}, {pipeline_mode = #tpu.pipeline_mode<synchronous>, transform_indices = @transform_8, window_bounds = array<i64: 2, 1, 64>}, {pipeline_mode = #tpu.pipeline_mode<synchronous>, transform_indices = @transform_9, window_bounds = array<i64: 2, 1, 64>}, {pipeline_mode = #tpu.pipeline_mode<synchronous>, transform_indices = @transform_10, window_bounds = array<i64: 2, 64, 128>}, {pipeline_mode = #tpu.pipeline_mode<synchronous>, transform_indices = @transform_11, window_bounds = array<i64: 2, 1, 128>}, {pipeline_mode = #tpu.pipeline_mode<synchronous>, transform_indices = @transform_12, window_bounds = array<i64: 2, 128, 64>}, {pipeline_mode = #tpu.pipeline_mode<synchronous>, transform_indices = @transform_13, window_bounds = array<i64: 2, 1, 64>}, {pipeline_mode = #tpu.pipeline_mode<synchronous>, transform_indices = @transform_14, window_bounds = array<i64: 2, 1, 64>}, {pipeline_mode = #tpu.pipeline_mode<synchronous>, transform_indices = @transform_15, window_bounds = array<i64: 2, 1, 64>}, {pipeline_mode = #tpu.pipeline_mode<synchronous>, transform_indices = @transform_16, window_bounds = array<i64: 64, 64>}, {pipeline_mode = #tpu.pipeline_mode<synchronous>, transform_indices = @transform_17, window_bounds = array<i64: 1, 64>}, {transform_indices = @transform_18, window_bounds = array<i64: 1, 16, 64>}, {transform_indices = @transform_19, window_bounds = array<i64: 1, 1, 64>}]} {
    %c0 = arith.constant 0 : index
    %c0_0 = arith.constant 0 : index
    %c0_1 = arith.constant 0 : index
    %0 = vector.load %arg1[%c0, %c0_0, %c0_1] : memref<1x16x64xf32, #tpu.memory_space<vmem>>, vector<1x16x64xf32>
    %1 = vector.shape_cast %0 : vector<1x16x64xf32> to vector<16x64xf32>
    %c0_2 = arith.constant 0 : index
    %c0_3 = arith.constant 0 : index
    %2 = vector.load %arg3[%c0_2, %c0_3] : memref<1x64xf32, #tpu.memory_space<vmem>>, vector<1x64xf32>
    %c0_4 = arith.constant 0 : index
    %c0_5 = arith.constant 0 : index
    %3 = vector.load %arg4[%c0_4, %c0_5] : memref<1x64xf32, #tpu.memory_space<vmem>>, vector<1x64xf32>
    %cst = arith.constant dense<0.000000e+00> : vector<16xf32>
    %4 = vector.multi_reduction <add>, %1, %cst [1] : vector<16x64xf32> to vector<16xf32>
    %5 = vector.shape_cast %4 : vector<16xf32> to vector<16x1xf32>
    %cst_6 = arith.constant 6.400000e+01 : f32
    %6 = vector.broadcast %cst_6 : f32 to vector<16x1xf32>
    %7 = arith.divf %5, %6 : vector<16x1xf32>
    %8 = vector.broadcast %7 : vector<16x1xf32> to vector<16x64xf32>
    %9 = arith.subf %1, %8 : vector<16x64xf32>
    %10 = arith.mulf %9, %9 : vector<16x64xf32>
    %cst_7 = arith.constant dense<0.000000e+00> : vector<16xf32>
    %11 = vector.multi_reduction <add>, %10, %cst_7 [1] : vector<16x64xf32> to vector<16xf32>
    %12 = vector.shape_cast %11 : vector<16xf32> to vector<16x1xf32>
    %cst_8 = arith.constant 6.400000e+01 : f32
    %13 = vector.broadcast %cst_8 : f32 to vector<16x1xf32>
    %14 = arith.divf %12, %13 : vector<16x1xf32>
    %15 = vector.broadcast %7 : vector<16x1xf32> to vector<16x64xf32>
    %16 = arith.subf %1, %15 : vector<16x64xf32>
    %cst_9 = arith.constant 9.99999974E-6 : f32
    %17 = vector.broadcast %cst_9 : f32 to vector<16x1xf32>
    %18 = arith.addf %14, %17 : vector<16x1xf32>
    %19 = math.rsqrt %18 : vector<16x1xf32>
    %20 = vector.broadcast %19 : vector<16x1xf32> to vector<16x64xf32>
    %21 = arith.mulf %16, %20 : vector<16x64xf32>
    %22 = vector.broadcast %2 : vector<1x64xf32> to vector<16x64xf32>
    %23 = arith.mulf %21, %22 : vector<16x64xf32>
    %24 = vector.broadcast %3 : vector<1x64xf32> to vector<16x64xf32>
    %25 = arith.addf %23, %24 : vector<16x64xf32>
    %c0_10 = arith.constant 0 : index
    %c0_11 = arith.constant 0 : index
    %c0_12 = arith.constant 0 : index
    %26 = vector.load %arg2[%c0_10, %c0_11, %c0_12] : memref<1x1x16xf32, #tpu.memory_space<vmem>>, vector<1x1x16xf32>
    %27 = vector.shape_cast %26 : vector<1x1x16xf32> to vector<1x16xf32>
    %28 = arith.truncf %25 : vector<16x64xf32> to vector<16x64xbf16>
    %c0_13 = arith.constant 0 : index
    %c0_14 = arith.constant 0 : index
    %c0_15 = arith.constant 0 : index
    %29 = vector.load %arg5[%c0_13, %c0_14, %c0_15] : memref<2x64x192xbf16, #tpu.memory_space<vmem>>, vector<1x64x192xbf16>
    %30 = vector.shape_cast %29 : vector<1x64x192xbf16> to vector<64x192xbf16>
    %cst_16 = arith.constant dense<0.000000e+00> : vector<16x192xf32>
    %31 = tpu.matmul %28, %30, %cst_16 {dimension_numbers = #tpu.dot_dimension_numbers<[1], [0], [0], [1], [0, 0, 1, 1], [], []>} : vector<16x64xbf16>, vector<64x192xbf16>, vector<16x192xf32> -> vector<16x192xf32>
    %c0_17 = arith.constant 0 : index
    %c0_18 = arith.constant 0 : index
    %c0_19 = arith.constant 0 : index
    %32 = vector.load %arg6[%c0_17, %c0_18, %c0_19] : memref<2x1x192xf32, #tpu.memory_space<vmem>>, vector<1x1x192xf32>
    %33 = vector.shape_cast %32 : vector<1x1x192xf32> to vector<1x192xf32>
    %34 = vector.broadcast %33 : vector<1x192xf32> to vector<16x192xf32>
    %35 = arith.addf %31, %34 : vector<16x192xf32>
    %36 = vector.extract_strided_slice %35 {offsets = [0, 0], sizes = [16, 32], strides = [1, 1]} : vector<16x192xf32> to vector<16x32xf32>
    %37 = vector.extract_strided_slice %35 {offsets = [0, 64], sizes = [16, 32], strides = [1, 1]} : vector<16x192xf32> to vector<16x32xf32>
    %38 = vector.extract_strided_slice %35 {offsets = [0, 128], sizes = [16, 32], strides = [1, 1]} : vector<16x192xf32> to vector<16x32xf32>
    %39 = arith.truncf %36 : vector<16x32xf32> to vector<16x32xbf16>
    %40 = arith.truncf %37 : vector<16x32xf32> to vector<16x32xbf16>
    %cst_20 = arith.constant dense<0.000000e+00> : vector<16x16xf32>
    %41 = tpu.matmul %39, %40, %cst_20 {dimension_numbers = #tpu.dot_dimension_numbers<[1], [1], [0], [0], [0, 0, 1, 0], [], []>} : vector<16x32xbf16>, vector<16x32xbf16>, vector<16x16xf32> -> vector<16x16xf32>
    %cst_21 = arith.constant 0.176776692 : f32
    %42 = vector.broadcast %cst_21 : f32 to vector<16x16xf32>
    %43 = arith.mulf %41, %42 : vector<16x16xf32>
    %44 = vector.broadcast %27 : vector<1x16xf32> to vector<16x16xf32>
    %45 = arith.addf %43, %44 : vector<16x16xf32>
    %cst_22 = arith.constant dense<0xFF800000> : vector<16xf32>
    %46 = vector.multi_reduction <maximumf>, %45, %cst_22 [1] : vector<16x16xf32> to vector<16xf32>
    %47 = vector.shape_cast %46 : vector<16xf32> to vector<16x1xf32>
    %48 = vector.broadcast %47 : vector<16x1xf32> to vector<16x16xf32>
    %49 = arith.subf %45, %48 : vector<16x16xf32>
    %50 = math.exp %49 : vector<16x16xf32>
    %cst_23 = arith.constant dense<0.000000e+00> : vector<16xf32>
    %51 = vector.multi_reduction <add>, %50, %cst_23 [1] : vector<16x16xf32> to vector<16xf32>
    %52 = vector.shape_cast %51 : vector<16xf32> to vector<16x1xf32>
    %53 = tpu.reciprocal %52 {approx = true} : vector<16x1xf32> -> vector<16x1xf32>
    %54 = vector.broadcast %53 : vector<16x1xf32> to vector<16x16xf32>
    %55 = arith.mulf %50, %54 : vector<16x16xf32>
    %56 = arith.truncf %55 : vector<16x16xf32> to vector<16x16xbf16>
    %57 = arith.truncf %38 : vector<16x32xf32> to vector<16x32xbf16>
    %cst_24 = arith.constant dense<0.000000e+00> : vector<16x32xf32>
    %58 = tpu.matmul %56, %57, %cst_24 {dimension_numbers = #tpu.dot_dimension_numbers<[1], [0], [0], [1], [0, 0, 1, 1], [], []>} : vector<16x16xbf16>, vector<16x32xbf16>, vector<16x32xf32> -> vector<16x32xf32>
    %59 = vector.extract_strided_slice %35 {offsets = [0, 32], sizes = [16, 32], strides = [1, 1]} : vector<16x192xf32> to vector<16x32xf32>
    %60 = vector.extract_strided_slice %35 {offsets = [0, 96], sizes = [16, 32], strides = [1, 1]} : vector<16x192xf32> to vector<16x32xf32>
    %61 = vector.extract_strided_slice %35 {offsets = [0, 160], sizes = [16, 32], strides = [1, 1]} : vector<16x192xf32> to vector<16x32xf32>
    %62 = arith.truncf %59 : vector<16x32xf32> to vector<16x32xbf16>
    %63 = arith.truncf %60 : vector<16x32xf32> to vector<16x32xbf16>
    %cst_25 = arith.constant dense<0.000000e+00> : vector<16x16xf32>
    %64 = tpu.matmul %62, %63, %cst_25 {dimension_numbers = #tpu.dot_dimension_numbers<[1], [1], [0], [0], [0, 0, 1, 0], [], []>} : vector<16x32xbf16>, vector<16x32xbf16>, vector<16x16xf32> -> vector<16x16xf32>
    %cst_26 = arith.constant 0.176776692 : f32
    %65 = vector.broadcast %cst_26 : f32 to vector<16x16xf32>
    %66 = arith.mulf %64, %65 : vector<16x16xf32>
    %67 = vector.broadcast %27 : vector<1x16xf32> to vector<16x16xf32>
    %68 = arith.addf %66, %67 : vector<16x16xf32>
    %cst_27 = arith.constant dense<0xFF800000> : vector<16xf32>
    %69 = vector.multi_reduction <maximumf>, %68, %cst_27 [1] : vector<16x16xf32> to vector<16xf32>
    %70 = vector.shape_cast %69 : vector<16xf32> to vector<16x1xf32>
    %71 = vector.broadcast %70 : vector<16x1xf32> to vector<16x16xf32>
    %72 = arith.subf %68, %71 : vector<16x16xf32>
    %73 = math.exp %72 : vector<16x16xf32>
    %cst_28 = arith.constant dense<0.000000e+00> : vector<16xf32>
    %74 = vector.multi_reduction <add>, %73, %cst_28 [1] : vector<16x16xf32> to vector<16xf32>
    %75 = vector.shape_cast %74 : vector<16xf32> to vector<16x1xf32>
    %76 = tpu.reciprocal %75 {approx = true} : vector<16x1xf32> -> vector<16x1xf32>
    %77 = vector.broadcast %76 : vector<16x1xf32> to vector<16x16xf32>
    %78 = arith.mulf %73, %77 : vector<16x16xf32>
    %79 = arith.truncf %78 : vector<16x16xf32> to vector<16x16xbf16>
    %80 = arith.truncf %61 : vector<16x32xf32> to vector<16x32xbf16>
    %cst_29 = arith.constant dense<0.000000e+00> : vector<16x32xf32>
    %81 = tpu.matmul %79, %80, %cst_29 {dimension_numbers = #tpu.dot_dimension_numbers<[1], [0], [0], [1], [0, 0, 1, 1], [], []>} : vector<16x16xbf16>, vector<16x32xbf16>, vector<16x32xf32> -> vector<16x32xf32>
    %82 = tpu.concatenate %58, %81 in 1 : vector<16x32xf32>, vector<16x32xf32> -> vector<16x64xf32>
    %83 = arith.truncf %82 : vector<16x64xf32> to vector<16x64xbf16>
    %c0_30 = arith.constant 0 : index
    %c0_31 = arith.constant 0 : index
    %c0_32 = arith.constant 0 : index
    %84 = vector.load %arg7[%c0_30, %c0_31, %c0_32] : memref<2x64x64xbf16, #tpu.memory_space<vmem>>, vector<1x64x64xbf16>
    %85 = vector.shape_cast %84 : vector<1x64x64xbf16> to vector<64x64xbf16>
    %cst_33 = arith.constant dense<0.000000e+00> : vector<16x64xf32>
    %86 = tpu.matmul %83, %85, %cst_33 {dimension_numbers = #tpu.dot_dimension_numbers<[1], [0], [0], [1], [0, 0, 1, 1], [], []>} : vector<16x64xbf16>, vector<64x64xbf16>, vector<16x64xf32> -> vector<16x64xf32>
    %c0_34 = arith.constant 0 : index
    %c0_35 = arith.constant 0 : index
    %c0_36 = arith.constant 0 : index
    %87 = vector.load %arg8[%c0_34, %c0_35, %c0_36] : memref<2x1x64xf32, #tpu.memory_space<vmem>>, vector<1x1x64xf32>
    %88 = vector.shape_cast %87 : vector<1x1x64xf32> to vector<1x64xf32>
    %89 = vector.broadcast %88 : vector<1x64xf32> to vector<16x64xf32>
    %90 = arith.addf %86, %89 : vector<16x64xf32>
    %91 = arith.addf %90, %25 : vector<16x64xf32>
    %c0_37 = arith.constant 0 : index
    %c0_38 = arith.constant 0 : index
    %c0_39 = arith.constant 0 : index
    %92 = vector.load %arg9[%c0_37, %c0_38, %c0_39] : memref<2x1x64xf32, #tpu.memory_space<vmem>>, vector<1x1x64xf32>
    %93 = vector.shape_cast %92 : vector<1x1x64xf32> to vector<1x64xf32>
    %c0_40 = arith.constant 0 : index
    %c0_41 = arith.constant 0 : index
    %c0_42 = arith.constant 0 : index
    %94 = vector.load %arg10[%c0_40, %c0_41, %c0_42] : memref<2x1x64xf32, #tpu.memory_space<vmem>>, vector<1x1x64xf32>
    %95 = vector.shape_cast %94 : vector<1x1x64xf32> to vector<1x64xf32>
    %cst_43 = arith.constant dense<0.000000e+00> : vector<16xf32>
    %96 = vector.multi_reduction <add>, %91, %cst_43 [1] : vector<16x64xf32> to vector<16xf32>
    %97 = vector.shape_cast %96 : vector<16xf32> to vector<16x1xf32>
    %cst_44 = arith.constant 6.400000e+01 : f32
    %98 = vector.broadcast %cst_44 : f32 to vector<16x1xf32>
    %99 = arith.divf %97, %98 : vector<16x1xf32>
    %100 = vector.broadcast %99 : vector<16x1xf32> to vector<16x64xf32>
    %101 = arith.subf %91, %100 : vector<16x64xf32>
    %102 = arith.mulf %101, %101 : vector<16x64xf32>
    %cst_45 = arith.constant dense<0.000000e+00> : vector<16xf32>
    %103 = vector.multi_reduction <add>, %102, %cst_45 [1] : vector<16x64xf32> to vector<16xf32>
    %104 = vector.shape_cast %103 : vector<16xf32> to vector<16x1xf32>
    %cst_46 = arith.constant 6.400000e+01 : f32
    %105 = vector.broadcast %cst_46 : f32 to vector<16x1xf32>
    %106 = arith.divf %104, %105 : vector<16x1xf32>
    %107 = vector.broadcast %99 : vector<16x1xf32> to vector<16x64xf32>
    %108 = arith.subf %91, %107 : vector<16x64xf32>
    %cst_47 = arith.constant 9.99999974E-6 : f32
    %109 = vector.broadcast %cst_47 : f32 to vector<16x1xf32>
    %110 = arith.addf %106, %109 : vector<16x1xf32>
    %111 = math.rsqrt %110 : vector<16x1xf32>
    %112 = vector.broadcast %111 : vector<16x1xf32> to vector<16x64xf32>
    %113 = arith.mulf %108, %112 : vector<16x64xf32>
    %114 = vector.broadcast %93 : vector<1x64xf32> to vector<16x64xf32>
    %115 = arith.mulf %113, %114 : vector<16x64xf32>
    %116 = vector.broadcast %95 : vector<1x64xf32> to vector<16x64xf32>
    %117 = arith.addf %115, %116 : vector<16x64xf32>
    %118 = arith.truncf %117 : vector<16x64xf32> to vector<16x64xbf16>
    %c0_48 = arith.constant 0 : index
    %c0_49 = arith.constant 0 : index
    %c0_50 = arith.constant 0 : index
    %119 = vector.load %arg11[%c0_48, %c0_49, %c0_50] : memref<2x64x128xbf16, #tpu.memory_space<vmem>>, vector<1x64x128xbf16>
    %120 = vector.shape_cast %119 : vector<1x64x128xbf16> to vector<64x128xbf16>
    %cst_51 = arith.constant dense<0.000000e+00> : vector<16x128xf32>
    %121 = tpu.matmul %118, %120, %cst_51 {dimension_numbers = #tpu.dot_dimension_numbers<[1], [0], [0], [1], [0, 0, 1, 1], [], []>} : vector<16x64xbf16>, vector<64x128xbf16>, vector<16x128xf32> -> vector<16x128xf32>
    %c0_52 = arith.constant 0 : index
    %c0_53 = arith.constant 0 : index
    %c0_54 = arith.constant 0 : index
    %122 = vector.load %arg12[%c0_52, %c0_53, %c0_54] : memref<2x1x128xf32, #tpu.memory_space<vmem>>, vector<1x1x128xf32>
    %123 = vector.shape_cast %122 : vector<1x1x128xf32> to vector<1x128xf32>
    %124 = vector.broadcast %123 : vector<1x128xf32> to vector<16x128xf32>
    %125 = arith.addf %121, %124 : vector<16x128xf32>
    %cst_55 = arith.constant 5.000000e-01 : f32
    %126 = vector.broadcast %cst_55 : f32 to vector<16x128xf32>
    %127 = arith.mulf %126, %125 : vector<16x128xf32>
    %cst_56 = arith.constant 4.471500e-02 : f32
    %128 = vector.broadcast %cst_56 : f32 to vector<16x128xf32>
    %129 = arith.mulf %128, %125 : vector<16x128xf32>
    %130 = arith.mulf %129, %125 : vector<16x128xf32>
    %131 = arith.mulf %130, %125 : vector<16x128xf32>
    %132 = arith.addf %125, %131 : vector<16x128xf32>
    %cst_57 = arith.constant 0.797884583 : f32
    %133 = vector.broadcast %cst_57 : f32 to vector<16x128xf32>
    %134 = arith.mulf %133, %132 : vector<16x128xf32>
    %135 = math.tanh %134 : vector<16x128xf32>
    %cst_58 = arith.constant 1.000000e+00 : f32
    %136 = vector.broadcast %cst_58 : f32 to vector<16x128xf32>
    %137 = arith.addf %136, %135 : vector<16x128xf32>
    %138 = arith.mulf %127, %137 : vector<16x128xf32>
    %139 = arith.truncf %138 : vector<16x128xf32> to vector<16x128xbf16>
    %c0_59 = arith.constant 0 : index
    %c0_60 = arith.constant 0 : index
    %c0_61 = arith.constant 0 : index
    %140 = vector.load %arg13[%c0_59, %c0_60, %c0_61] : memref<2x128x64xbf16, #tpu.memory_space<vmem>>, vector<1x128x64xbf16>
    %141 = vector.shape_cast %140 : vector<1x128x64xbf16> to vector<128x64xbf16>
    %cst_62 = arith.constant dense<0.000000e+00> : vector<16x64xf32>
    %142 = tpu.matmul %139, %141, %cst_62 {dimension_numbers = #tpu.dot_dimension_numbers<[1], [0], [0], [1], [0, 0, 1, 1], [], []>} : vector<16x128xbf16>, vector<128x64xbf16>, vector<16x64xf32> -> vector<16x64xf32>
    %c0_63 = arith.constant 0 : index
    %c0_64 = arith.constant 0 : index
    %c0_65 = arith.constant 0 : index
    %143 = vector.load %arg14[%c0_63, %c0_64, %c0_65] : memref<2x1x64xf32, #tpu.memory_space<vmem>>, vector<1x1x64xf32>
    %144 = vector.shape_cast %143 : vector<1x1x64xf32> to vector<1x64xf32>
    %145 = vector.broadcast %144 : vector<1x64xf32> to vector<16x64xf32>
    %146 = arith.addf %142, %145 : vector<16x64xf32>
    %147 = arith.addf %146, %117 : vector<16x64xf32>
    %c0_66 = arith.constant 0 : index
    %c0_67 = arith.constant 0 : index
    %c0_68 = arith.constant 0 : index
    %148 = vector.load %arg15[%c0_66, %c0_67, %c0_68] : memref<2x1x64xf32, #tpu.memory_space<vmem>>, vector<1x1x64xf32>
    %149 = vector.shape_cast %148 : vector<1x1x64xf32> to vector<1x64xf32>
    %c0_69 = arith.constant 0 : index
    %c0_70 = arith.constant 0 : index
    %c0_71 = arith.constant 0 : index
    %150 = vector.load %arg16[%c0_69, %c0_70, %c0_71] : memref<2x1x64xf32, #tpu.memory_space<vmem>>, vector<1x1x64xf32>
    %151 = vector.shape_cast %150 : vector<1x1x64xf32> to vector<1x64xf32>
    %cst_72 = arith.constant dense<0.000000e+00> : vector<16xf32>
    %152 = vector.multi_reduction <add>, %147, %cst_72 [1] : vector<16x64xf32> to vector<16xf32>
    %153 = vector.shape_cast %152 : vector<16xf32> to vector<16x1xf32>
    %cst_73 = arith.constant 6.400000e+01 : f32
    %154 = vector.broadcast %cst_73 : f32 to vector<16x1xf32>
    %155 = arith.divf %153, %154 : vector<16x1xf32>
    %156 = vector.broadcast %155 : vector<16x1xf32> to vector<16x64xf32>
    %157 = arith.subf %147, %156 : vector<16x64xf32>
    %158 = arith.mulf %157, %157 : vector<16x64xf32>
    %cst_74 = arith.constant dense<0.000000e+00> : vector<16xf32>
    %159 = vector.multi_reduction <add>, %158, %cst_74 [1] : vector<16x64xf32> to vector<16xf32>
    %160 = vector.shape_cast %159 : vector<16xf32> to vector<16x1xf32>
    %cst_75 = arith.constant 6.400000e+01 : f32
    %161 = vector.broadcast %cst_75 : f32 to vector<16x1xf32>
    %162 = arith.divf %160, %161 : vector<16x1xf32>
    %163 = vector.broadcast %155 : vector<16x1xf32> to vector<16x64xf32>
    %164 = arith.subf %147, %163 : vector<16x64xf32>
    %cst_76 = arith.constant 9.99999974E-6 : f32
    %165 = vector.broadcast %cst_76 : f32 to vector<16x1xf32>
    %166 = arith.addf %162, %165 : vector<16x1xf32>
    %167 = math.rsqrt %166 : vector<16x1xf32>
    %168 = vector.broadcast %167 : vector<16x1xf32> to vector<16x64xf32>
    %169 = arith.mulf %164, %168 : vector<16x64xf32>
    %170 = vector.broadcast %149 : vector<1x64xf32> to vector<16x64xf32>
    %171 = arith.mulf %169, %170 : vector<16x64xf32>
    %172 = vector.broadcast %151 : vector<1x64xf32> to vector<16x64xf32>
    %173 = arith.addf %171, %172 : vector<16x64xf32>
    %174 = arith.truncf %173 : vector<16x64xf32> to vector<16x64xbf16>
    %c1 = arith.constant 1 : index
    %c0_77 = arith.constant 0 : index
    %c0_78 = arith.constant 0 : index
    %175 = vector.load %arg5[%c1, %c0_77, %c0_78] : memref<2x64x192xbf16, #tpu.memory_space<vmem>>, vector<1x64x192xbf16>
    %176 = vector.shape_cast %175 : vector<1x64x192xbf16> to vector<64x192xbf16>
    %cst_79 = arith.constant dense<0.000000e+00> : vector<16x192xf32>
    %177 = tpu.matmul %174, %176, %cst_79 {dimension_numbers = #tpu.dot_dimension_numbers<[1], [0], [0], [1], [0, 0, 1, 1], [], []>} : vector<16x64xbf16>, vector<64x192xbf16>, vector<16x192xf32> -> vector<16x192xf32>
    %c1_80 = arith.constant 1 : index
    %c0_81 = arith.constant 0 : index
    %c0_82 = arith.constant 0 : index
    %178 = vector.load %arg6[%c1_80, %c0_81, %c0_82] : memref<2x1x192xf32, #tpu.memory_space<vmem>>, vector<1x1x192xf32>
    %179 = vector.shape_cast %178 : vector<1x1x192xf32> to vector<1x192xf32>
    %180 = vector.broadcast %179 : vector<1x192xf32> to vector<16x192xf32>
    %181 = arith.addf %177, %180 : vector<16x192xf32>
    %182 = vector.extract_strided_slice %181 {offsets = [0, 0], sizes = [16, 32], strides = [1, 1]} : vector<16x192xf32> to vector<16x32xf32>
    %183 = vector.extract_strided_slice %181 {offsets = [0, 64], sizes = [16, 32], strides = [1, 1]} : vector<16x192xf32> to vector<16x32xf32>
    %184 = vector.extract_strided_slice %181 {offsets = [0, 128], sizes = [16, 32], strides = [1, 1]} : vector<16x192xf32> to vector<16x32xf32>
    %185 = arith.truncf %182 : vector<16x32xf32> to vector<16x32xbf16>
    %186 = arith.truncf %183 : vector<16x32xf32> to vector<16x32xbf16>
    %cst_83 = arith.constant dense<0.000000e+00> : vector<16x16xf32>
    %187 = tpu.matmul %185, %186, %cst_83 {dimension_numbers = #tpu.dot_dimension_numbers<[1], [1], [0], [0], [0, 0, 1, 0], [], []>} : vector<16x32xbf16>, vector<16x32xbf16>, vector<16x16xf32> -> vector<16x16xf32>
    %cst_84 = arith.constant 0.176776692 : f32
    %188 = vector.broadcast %cst_84 : f32 to vector<16x16xf32>
    %189 = arith.mulf %187, %188 : vector<16x16xf32>
    %190 = vector.broadcast %27 : vector<1x16xf32> to vector<16x16xf32>
    %191 = arith.addf %189, %190 : vector<16x16xf32>
    %cst_85 = arith.constant dense<0xFF800000> : vector<16xf32>
    %192 = vector.multi_reduction <maximumf>, %191, %cst_85 [1] : vector<16x16xf32> to vector<16xf32>
    %193 = vector.shape_cast %192 : vector<16xf32> to vector<16x1xf32>
    %194 = vector.broadcast %193 : vector<16x1xf32> to vector<16x16xf32>
    %195 = arith.subf %191, %194 : vector<16x16xf32>
    %196 = math.exp %195 : vector<16x16xf32>
    %cst_86 = arith.constant dense<0.000000e+00> : vector<16xf32>
    %197 = vector.multi_reduction <add>, %196, %cst_86 [1] : vector<16x16xf32> to vector<16xf32>
    %198 = vector.shape_cast %197 : vector<16xf32> to vector<16x1xf32>
    %199 = tpu.reciprocal %198 {approx = true} : vector<16x1xf32> -> vector<16x1xf32>
    %200 = vector.broadcast %199 : vector<16x1xf32> to vector<16x16xf32>
    %201 = arith.mulf %196, %200 : vector<16x16xf32>
    %202 = arith.truncf %201 : vector<16x16xf32> to vector<16x16xbf16>
    %203 = arith.truncf %184 : vector<16x32xf32> to vector<16x32xbf16>
    %cst_87 = arith.constant dense<0.000000e+00> : vector<16x32xf32>
    %204 = tpu.matmul %202, %203, %cst_87 {dimension_numbers = #tpu.dot_dimension_numbers<[1], [0], [0], [1], [0, 0, 1, 1], [], []>} : vector<16x16xbf16>, vector<16x32xbf16>, vector<16x32xf32> -> vector<16x32xf32>
    %205 = vector.extract_strided_slice %181 {offsets = [0, 32], sizes = [16, 32], strides = [1, 1]} : vector<16x192xf32> to vector<16x32xf32>
    %206 = vector.extract_strided_slice %181 {offsets = [0, 96], sizes = [16, 32], strides = [1, 1]} : vector<16x192xf32> to vector<16x32xf32>
    %207 = vector.extract_strided_slice %181 {offsets = [0, 160], sizes = [16, 32], strides = [1, 1]} : vector<16x192xf32> to vector<16x32xf32>
    %208 = arith.truncf %205 : vector<16x32xf32> to vector<16x32xbf16>
    %209 = arith.truncf %206 : vector<16x32xf32> to vector<16x32xbf16>
    %cst_88 = arith.constant dense<0.000000e+00> : vector<16x16xf32>
    %210 = tpu.matmul %208, %209, %cst_88 {dimension_numbers = #tpu.dot_dimension_numbers<[1], [1], [0], [0], [0, 0, 1, 0], [], []>} : vector<16x32xbf16>, vector<16x32xbf16>, vector<16x16xf32> -> vector<16x16xf32>
    %cst_89 = arith.constant 0.176776692 : f32
    %211 = vector.broadcast %cst_89 : f32 to vector<16x16xf32>
    %212 = arith.mulf %210, %211 : vector<16x16xf32>
    %213 = vector.broadcast %27 : vector<1x16xf32> to vector<16x16xf32>
    %214 = arith.addf %212, %213 : vector<16x16xf32>
    %cst_90 = arith.constant dense<0xFF800000> : vector<16xf32>
    %215 = vector.multi_reduction <maximumf>, %214, %cst_90 [1] : vector<16x16xf32> to vector<16xf32>
    %216 = vector.shape_cast %215 : vector<16xf32> to vector<16x1xf32>
    %217 = vector.broadcast %216 : vector<16x1xf32> to vector<16x16xf32>
    %218 = arith.subf %214, %217 : vector<16x16xf32>
    %219 = math.exp %218 : vector<16x16xf32>
    %cst_91 = arith.constant dense<0.000000e+00> : vector<16xf32>
    %220 = vector.multi_reduction <add>, %219, %cst_91 [1] : vector<16x16xf32> to vector<16xf32>
    %221 = vector.shape_cast %220 : vector<16xf32> to vector<16x1xf32>
    %222 = tpu.reciprocal %221 {approx = true} : vector<16x1xf32> -> vector<16x1xf32>
    %223 = vector.broadcast %222 : vector<16x1xf32> to vector<16x16xf32>
    %224 = arith.mulf %219, %223 : vector<16x16xf32>
    %225 = arith.truncf %224 : vector<16x16xf32> to vector<16x16xbf16>
    %226 = arith.truncf %207 : vector<16x32xf32> to vector<16x32xbf16>
    %cst_92 = arith.constant dense<0.000000e+00> : vector<16x32xf32>
    %227 = tpu.matmul %225, %226, %cst_92 {dimension_numbers = #tpu.dot_dimension_numbers<[1], [0], [0], [1], [0, 0, 1, 1], [], []>} : vector<16x16xbf16>, vector<16x32xbf16>, vector<16x32xf32> -> vector<16x32xf32>
    %228 = tpu.concatenate %204, %227 in 1 : vector<16x32xf32>, vector<16x32xf32> -> vector<16x64xf32>
    %229 = arith.truncf %228 : vector<16x64xf32> to vector<16x64xbf16>
    %c1_93 = arith.constant 1 : index
    %c0_94 = arith.constant 0 : index
    %c0_95 = arith.constant 0 : index
    %230 = vector.load %arg7[%c1_93, %c0_94, %c0_95] : memref<2x64x64xbf16, #tpu.memory_space<vmem>>, vector<1x64x64xbf16>
    %231 = vector.shape_cast %230 : vector<1x64x64xbf16> to vector<64x64xbf16>
    %cst_96 = arith.constant dense<0.000000e+00> : vector<16x64xf32>
    %232 = tpu.matmul %229, %231, %cst_96 {dimension_numbers = #tpu.dot_dimension_numbers<[1], [0], [0], [1], [0, 0, 1, 1], [], []>} : vector<16x64xbf16>, vector<64x64xbf16>, vector<16x64xf32> -> vector<16x64xf32>
    %c1_97 = arith.constant 1 : index
    %c0_98 = arith.constant 0 : index
    %c0_99 = arith.constant 0 : index
    %233 = vector.load %arg8[%c1_97, %c0_98, %c0_99] : memref<2x1x64xf32, #tpu.memory_space<vmem>>, vector<1x1x64xf32>
    %234 = vector.shape_cast %233 : vector<1x1x64xf32> to vector<1x64xf32>
    %235 = vector.broadcast %234 : vector<1x64xf32> to vector<16x64xf32>
    %236 = arith.addf %232, %235 : vector<16x64xf32>
    %237 = arith.addf %236, %173 : vector<16x64xf32>
    %c1_100 = arith.constant 1 : index
    %c0_101 = arith.constant 0 : index
    %c0_102 = arith.constant 0 : index
    %238 = vector.load %arg9[%c1_100, %c0_101, %c0_102] : memref<2x1x64xf32, #tpu.memory_space<vmem>>, vector<1x1x64xf32>
    %239 = vector.shape_cast %238 : vector<1x1x64xf32> to vector<1x64xf32>
    %c1_103 = arith.constant 1 : index
    %c0_104 = arith.constant 0 : index
    %c0_105 = arith.constant 0 : index
    %240 = vector.load %arg10[%c1_103, %c0_104, %c0_105] : memref<2x1x64xf32, #tpu.memory_space<vmem>>, vector<1x1x64xf32>
    %241 = vector.shape_cast %240 : vector<1x1x64xf32> to vector<1x64xf32>
    %cst_106 = arith.constant dense<0.000000e+00> : vector<16xf32>
    %242 = vector.multi_reduction <add>, %237, %cst_106 [1] : vector<16x64xf32> to vector<16xf32>
    %243 = vector.shape_cast %242 : vector<16xf32> to vector<16x1xf32>
    %cst_107 = arith.constant 6.400000e+01 : f32
    %244 = vector.broadcast %cst_107 : f32 to vector<16x1xf32>
    %245 = arith.divf %243, %244 : vector<16x1xf32>
    %246 = vector.broadcast %245 : vector<16x1xf32> to vector<16x64xf32>
    %247 = arith.subf %237, %246 : vector<16x64xf32>
    %248 = arith.mulf %247, %247 : vector<16x64xf32>
    %cst_108 = arith.constant dense<0.000000e+00> : vector<16xf32>
    %249 = vector.multi_reduction <add>, %248, %cst_108 [1] : vector<16x64xf32> to vector<16xf32>
    %250 = vector.shape_cast %249 : vector<16xf32> to vector<16x1xf32>
    %cst_109 = arith.constant 6.400000e+01 : f32
    %251 = vector.broadcast %cst_109 : f32 to vector<16x1xf32>
    %252 = arith.divf %250, %251 : vector<16x1xf32>
    %253 = vector.broadcast %245 : vector<16x1xf32> to vector<16x64xf32>
    %254 = arith.subf %237, %253 : vector<16x64xf32>
    %cst_110 = arith.constant 9.99999974E-6 : f32
    %255 = vector.broadcast %cst_110 : f32 to vector<16x1xf32>
    %256 = arith.addf %252, %255 : vector<16x1xf32>
    %257 = math.rsqrt %256 : vector<16x1xf32>
    %258 = vector.broadcast %257 : vector<16x1xf32> to vector<16x64xf32>
    %259 = arith.mulf %254, %258 : vector<16x64xf32>
    %260 = vector.broadcast %239 : vector<1x64xf32> to vector<16x64xf32>
    %261 = arith.mulf %259, %260 : vector<16x64xf32>
    %262 = vector.broadcast %241 : vector<1x64xf32> to vector<16x64xf32>
    %263 = arith.addf %261, %262 : vector<16x64xf32>
    %264 = arith.truncf %263 : vector<16x64xf32> to vector<16x64xbf16>
    %c1_111 = arith.constant 1 : index
    %c0_112 = arith.constant 0 : index
    %c0_113 = arith.constant 0 : index
    %265 = vector.load %arg11[%c1_111, %c0_112, %c0_113] : memref<2x64x128xbf16, #tpu.memory_space<vmem>>, vector<1x64x128xbf16>
    %266 = vector.shape_cast %265 : vector<1x64x128xbf16> to vector<64x128xbf16>
    %cst_114 = arith.constant dense<0.000000e+00> : vector<16x128xf32>
    %267 = tpu.matmul %264, %266, %cst_114 {dimension_numbers = #tpu.dot_dimension_numbers<[1], [0], [0], [1], [0, 0, 1, 1], [], []>} : vector<16x64xbf16>, vector<64x128xbf16>, vector<16x128xf32> -> vector<16x128xf32>
    %c1_115 = arith.constant 1 : index
    %c0_116 = arith.constant 0 : index
    %c0_117 = arith.constant 0 : index
    %268 = vector.load %arg12[%c1_115, %c0_116, %c0_117] : memref<2x1x128xf32, #tpu.memory_space<vmem>>, vector<1x1x128xf32>
    %269 = vector.shape_cast %268 : vector<1x1x128xf32> to vector<1x128xf32>
    %270 = vector.broadcast %269 : vector<1x128xf32> to vector<16x128xf32>
    %271 = arith.addf %267, %270 : vector<16x128xf32>
    %cst_118 = arith.constant 5.000000e-01 : f32
    %272 = vector.broadcast %cst_118 : f32 to vector<16x128xf32>
    %273 = arith.mulf %272, %271 : vector<16x128xf32>
    %cst_119 = arith.constant 4.471500e-02 : f32
    %274 = vector.broadcast %cst_119 : f32 to vector<16x128xf32>
    %275 = arith.mulf %274, %271 : vector<16x128xf32>
    %276 = arith.mulf %275, %271 : vector<16x128xf32>
    %277 = arith.mulf %276, %271 : vector<16x128xf32>
    %278 = arith.addf %271, %277 : vector<16x128xf32>
    %cst_120 = arith.constant 0.797884583 : f32
    %279 = vector.broadcast %cst_120 : f32 to vector<16x128xf32>
    %280 = arith.mulf %279, %278 : vector<16x128xf32>
    %281 = math.tanh %280 : vector<16x128xf32>
    %cst_121 = arith.constant 1.000000e+00 : f32
    %282 = vector.broadcast %cst_121 : f32 to vector<16x128xf32>
    %283 = arith.addf %282, %281 : vector<16x128xf32>
    %284 = arith.mulf %273, %283 : vector<16x128xf32>
    %285 = arith.truncf %284 : vector<16x128xf32> to vector<16x128xbf16>
    %c1_122 = arith.constant 1 : index
    %c0_123 = arith.constant 0 : index
    %c0_124 = arith.constant 0 : index
    %286 = vector.load %arg13[%c1_122, %c0_123, %c0_124] : memref<2x128x64xbf16, #tpu.memory_space<vmem>>, vector<1x128x64xbf16>
    %287 = vector.shape_cast %286 : vector<1x128x64xbf16> to vector<128x64xbf16>
    %cst_125 = arith.constant dense<0.000000e+00> : vector<16x64xf32>
    %288 = tpu.matmul %285, %287, %cst_125 {dimension_numbers = #tpu.dot_dimension_numbers<[1], [0], [0], [1], [0, 0, 1, 1], [], []>} : vector<16x128xbf16>, vector<128x64xbf16>, vector<16x64xf32> -> vector<16x64xf32>
    %c1_126 = arith.constant 1 : index
    %c0_127 = arith.constant 0 : index
    %c0_128 = arith.constant 0 : index
    %289 = vector.load %arg14[%c1_126, %c0_127, %c0_128] : memref<2x1x64xf32, #tpu.memory_space<vmem>>, vector<1x1x64xf32>
    %290 = vector.shape_cast %289 : vector<1x1x64xf32> to vector<1x64xf32>
    %291 = vector.broadcast %290 : vector<1x64xf32> to vector<16x64xf32>
    %292 = arith.addf %288, %291 : vector<16x64xf32>
    %293 = arith.addf %292, %263 : vector<16x64xf32>
    %c1_129 = arith.constant 1 : index
    %c0_130 = arith.constant 0 : index
    %c0_131 = arith.constant 0 : index
    %294 = vector.load %arg15[%c1_129, %c0_130, %c0_131] : memref<2x1x64xf32, #tpu.memory_space<vmem>>, vector<1x1x64xf32>
    %295 = vector.shape_cast %294 : vector<1x1x64xf32> to vector<1x64xf32>
    %c1_132 = arith.constant 1 : index
    %c0_133 = arith.constant 0 : index
    %c0_134 = arith.constant 0 : index
    %296 = vector.load %arg16[%c1_132, %c0_133, %c0_134] : memref<2x1x64xf32, #tpu.memory_space<vmem>>, vector<1x1x64xf32>
    %297 = vector.shape_cast %296 : vector<1x1x64xf32> to vector<1x64xf32>
    %cst_135 = arith.constant dense<0.000000e+00> : vector<16xf32>
    %298 = vector.multi_reduction <add>, %293, %cst_135 [1] : vector<16x64xf32> to vector<16xf32>
    %299 = vector.shape_cast %298 : vector<16xf32> to vector<16x1xf32>
    %cst_136 = arith.constant 6.400000e+01 : f32
    %300 = vector.broadcast %cst_136 : f32 to vector<16x1xf32>
    %301 = arith.divf %299, %300 : vector<16x1xf32>
    %302 = vector.broadcast %301 : vector<16x1xf32> to vector<16x64xf32>
    %303 = arith.subf %293, %302 : vector<16x64xf32>
    %304 = arith.mulf %303, %303 : vector<16x64xf32>
    %cst_137 = arith.constant dense<0.000000e+00> : vector<16xf32>
    %305 = vector.multi_reduction <add>, %304, %cst_137 [1] : vector<16x64xf32> to vector<16xf32>
    %306 = vector.shape_cast %305 : vector<16xf32> to vector<16x1xf32>
    %cst_138 = arith.constant 6.400000e+01 : f32
    %307 = vector.broadcast %cst_138 : f32 to vector<16x1xf32>
    %308 = arith.divf %306, %307 : vector<16x1xf32>
    %309 = vector.broadcast %301 : vector<16x1xf32> to vector<16x64xf32>
    %310 = arith.subf %293, %309 : vector<16x64xf32>
    %cst_139 = arith.constant 9.99999974E-6 : f32
    %311 = vector.broadcast %cst_139 : f32 to vector<16x1xf32>
    %312 = arith.addf %308, %311 : vector<16x1xf32>
    %313 = math.rsqrt %312 : vector<16x1xf32>
    %314 = vector.broadcast %313 : vector<16x1xf32> to vector<16x64xf32>
    %315 = arith.mulf %310, %314 : vector<16x64xf32>
    %316 = vector.broadcast %295 : vector<1x64xf32> to vector<16x64xf32>
    %317 = arith.mulf %315, %316 : vector<16x64xf32>
    %318 = vector.broadcast %297 : vector<1x64xf32> to vector<16x64xf32>
    %319 = arith.addf %317, %318 : vector<16x64xf32>
    %c0_140 = arith.constant 0 : index
    %c0_141 = arith.constant 0 : index
    %c0_142 = arith.constant 0 : index
    %320 = vector.load %arg19[%c0_140, %c0_141, %c0_142] : memref<1x16x64xf32, #tpu.memory_space<vmem>>, vector<1x16x64xf32>
    %321 = vector.shape_cast %320 : vector<1x16x64xf32> to vector<16x64xf32>
    %322 = vector.shape_cast %319 : vector<16x64xf32> to vector<1x16x64xf32>
    tpu.vector_store %arg19[%c0_140, %c0_141, %c0_142], %322 {strides = array<i32>} : memref<1x16x64xf32, #tpu.memory_space<vmem>>, vector<1x16x64xf32>,
    %323 = vector.extract_strided_slice %319 {offsets = [0, 0], sizes = [1, 64], strides = [1, 1]} : vector<16x64xf32> to vector<1x64xf32>
    %324 = arith.truncf %323 : vector<1x64xf32> to vector<1x64xbf16>
    %c0_143 = arith.constant 0 : index
    %c0_144 = arith.constant 0 : index
    %325 = vector.load %arg17[%c0_143, %c0_144] : memref<64x64xbf16, #tpu.memory_space<vmem>>, vector<64x64xbf16>
    %cst_145 = arith.constant dense<0.000000e+00> : vector<1x64xf32>
    %326 = tpu.matmul %324, %325, %cst_145 {dimension_numbers = #tpu.dot_dimension_numbers<[1], [0], [0], [1], [0, 0, 1, 1], [], []>} : vector<1x64xbf16>, vector<64x64xbf16>, vector<1x64xf32> -> vector<1x64xf32>
    %c0_146 = arith.constant 0 : index
    %c0_147 = arith.constant 0 : index
    %327 = vector.load %arg18[%c0_146, %c0_147] : memref<1x64xf32, #tpu.memory_space<vmem>>, vector<1x64xf32>
    %328 = arith.addf %326, %327 : vector<1x64xf32>
    %329 = math.tanh %328 : vector<1x64xf32>
    %c0_148 = arith.constant 0 : index
    %c0_149 = arith.constant 0 : index
    %c0_150 = arith.constant 0 : index
    %330 = vector.load %arg20[%c0_148, %c0_149, %c0_150] : memref<1x1x64xf32, #tpu.memory_space<vmem>>, vector<1x1x64xf32>
    %331 = vector.shape_cast %330 : vector<1x1x64xf32> to vector<1x64xf32>
    %332 = vector.shape_cast %329 : vector<1x64xf32> to vector<1x1x64xf32>
    tpu.vector_store %arg20[%c0_148, %c0_149, %c0_150], %332 {strides = array<i32>} : memref<1x1x64xf32, #tpu.memory_space<vmem>>, vector<1x1x64xf32>,
    return
  }
  func.func @transform_0(%arg0: i32) -> (i32, i32, i32) {
    %c0_i32 = arith.constant 0 : i32
    %c0_i32_0 = arith.constant 0 : i32
    %c0_i32_1 = arith.constant 0 : i32
    return %arg0, %c0_i32, %c0_i32_0 : i32, i32, i32
  }
  func.func @transform_1(%arg0: i32) -> (i32, i32, i32) {
    %c0_i32 = arith.constant 0 : i32
    %c0_i32_0 = arith.constant 0 : i32
    %c0_i32_1 = arith.constant 0 : i32
    return %arg0, %c0_i32, %c0_i32_0 : i32, i32, i32
  }
  func.func @transform_2(%arg0: i32) -> (i32, i32) {
    %c0_i32 = arith.constant 0 : i32
    %c0_i32_0 = arith.constant 0 : i32
    %c0_i32_1 = arith.constant 0 : i32
    return %c0_i32, %c0_i32_0 : i32, i32
  }
  func.func @transform_3(%arg0: i32) -> (i32, i32) {
    %c0_i32 = arith.constant 0 : i32
    %c0_i32_0 = arith.constant 0 : i32
    %c0_i32_1 = arith.constant 0 : i32
    return %c0_i32, %c0_i32_0 : i32, i32
  }
  func.func @transform_4(%arg0: i32) -> (i32, i32, i32) {
    %c0_i32 = arith.constant 0 : i32
    %c0_i32_0 = arith.constant 0 : i32
    %c0_i32_1 = arith.constant 0 : i32
    %c0_i32_2 = arith.constant 0 : i32
    return %c0_i32, %c0_i32_0, %c0_i32_1 : i32, i32, i32
  }
  func.func @transform_5(%arg0: i32) -> (i32, i32, i32) {
    %c0_i32 = arith.constant 0 : i32
    %c0_i32_0 = arith.constant 0 : i32
    %c0_i32_1 = arith.constant 0 : i32
    %c0_i32_2 = arith.constant 0 : i32
    return %c0_i32, %c0_i32_0, %c0_i32_1 : i32, i32, i32
  }
  func.func @transform_6(%arg0: i32) -> (i32, i32, i32) {
    %c0_i32 = arith.constant 0 : i32
    %c0_i32_0 = arith.constant 0 : i32
    %c0_i32_1 = arith.constant 0 : i32
    %c0_i32_2 = arith.constant 0 : i32
    return %c0_i32, %c0_i32_0, %c0_i32_1 : i32, i32, i32
  }
  func.func @transform_7(%arg0: i32) -> (i32, i32, i32) {
    %c0_i32 = arith.constant 0 : i32
    %c0_i32_0 = arith.constant 0 : i32
    %c0_i32_1 = arith.constant 0 : i32
    %c0_i32_2 = arith.constant 0 : i32
    return %c0_i32, %c0_i32_0, %c0_i32_1 : i32, i32, i32
  }
  func.func @transform_8(%arg0: i32) -> (i32, i32, i32) {
    %c0_i32 = arith.constant 0 : i32
    %c0_i32_0 = arith.constant 0 : i32
    %c0_i32_1 = arith.constant 0 : i32
    %c0_i32_2 = arith.constant 0 : i32
    return %c0_i32, %c0_i32_0, %c0_i32_1 : i32, i32, i32
  }
  func.func @transform_9(%arg0: i32) -> (i32, i32, i32) {
    %c0_i32 = arith.constant 0 : i32
    %c0_i32_0 = arith.constant 0 : i32
    %c0_i32_1 = arith.constant 0 : i32
    %c0_i32_2 = arith.constant 0 : i32
    return %c0_i32, %c0_i32_0, %c0_i32_1 : i32, i32, i32
  }
  func.func @transform_10(%arg0: i32) -> (i32, i32, i32) {
    %c0_i32 = arith.constant 0 : i32
    %c0_i32_0 = arith.constant 0 : i32
    %c0_i32_1 = arith.constant 0 : i32
    %c0_i32_2 = arith.constant 0 : i32
    return %c0_i32, %c0_i32_0, %c0_i32_1 : i32, i32, i32
  }
  func.func @transform_11(%arg0: i32) -> (i32, i32, i32) {
    %c0_i32 = arith.constant 0 : i32
    %c0_i32_0 = arith.constant 0 : i32
    %c0_i32_1 = arith.constant 0 : i32
    %c0_i32_2 = arith.constant 0 : i32
    return %c0_i32, %c0_i32_0, %c0_i32_1 : i32, i32, i32
  }
  func.func @transform_12(%arg0: i32) -> (i32, i32, i32) {
    %c0_i32 = arith.constant 0 : i32
    %c0_i32_0 = arith.constant 0 : i32
    %c0_i32_1 = arith.constant 0 : i32
    %c0_i32_2 = arith.constant 0 : i32
    return %c0_i32, %c0_i32_0, %c0_i32_1 : i32, i32, i32
  }
  func.func @transform_13(%arg0: i32) -> (i32, i32, i32) {
    %c0_i32 = arith.constant 0 : i32
    %c0_i32_0 = arith.constant 0 : i32
    %c0_i32_1 = arith.constant 0 : i32
    %c0_i32_2 = arith.constant 0 : i32
    return %c0_i32, %c0_i32_0, %c0_i32_1 : i32, i32, i32
  }
  func.func @transform_14(%arg0: i32) -> (i32, i32, i32) {
    %c0_i32 = arith.constant 0 : i32
    %c0_i32_0 = arith.constant 0 : i32
    %c0_i32_1 = arith.constant 0 : i32
    %c0_i32_2 = arith.constant 0 : i32
    return %c0_i32, %c0_i32_0, %c0_i32_1 : i32, i32, i32
  }
  func.func @transform_15(%arg0: i32) -> (i32, i32, i32) {
    %c0_i32 = arith.constant 0 : i32
    %c0_i32_0 = arith.constant 0 : i32
    %c0_i32_1 = arith.constant 0 : i32
    %c0_i32_2 = arith.constant 0 : i32
    return %c0_i32, %c0_i32_0, %c0_i32_1 : i32, i32, i32
  }
  func.func @transform_16(%arg0: i32) -> (i32, i32) {
    %c0_i32 = arith.constant 0 : i32
    %c0_i32_0 = arith.constant 0 : i32
    %c0_i32_1 = arith.constant 0 : i32
    return %c0_i32, %c0_i32_0 : i32, i32
  }
  func.func @transform_17(%arg0: i32) -> (i32, i32) {
    %c0_i32 = arith.constant 0 : i32
    %c0_i32_0 = arith.constant 0 : i32
    %c0_i32_1 = arith.constant 0 : i32
    return %c0_i32, %c0_i32_0 : i32, i32
  }
  func.func @transform_18(%arg0: i32) -> (i32, i32, i32) {
    %c0_i32 = arith.constant 0 : i32
    %c0_i32_0 = arith.constant 0 : i32
    %c0_i32_1 = arith.constant 0 : i32
    return %arg0, %c0_i32, %c0_i32_0 : i32, i32, i32
  }
  func.func @transform_19(%arg0: i32) -> (i32, i32, i32) {
    %c0_i32 = arith.constant 0 : i32
    %c0_i32_0 = arith.constant 0 : i32
    %c0_i32_1 = arith.constant 0 : i32
    return %arg0, %c0_i32, %c0_i32_0 : i32, i32, i32
  }
}

</mosaic_0001>

<llo_original>
// kernel: tpu_custom_call.1
$region0: #{tpu_custom_call.1}
  #allocation0 [shape = 'u32[]', space=smem, size = 0x4, offset = 0x4, fixed_abs, tag = 'smem constant byte address 0x4 - core index']
  #allocation1 [shape = 'u32[144,128]{1,0:T(1,128)}', space=vmem, size = 0x12000, scoped, tag = 'internal scratch']
  %s0 = inlined_call_operand.hbm [shape: f32[2,16,64], index: 0, kind: input, shape index: {}]
  %s1 = inlined_call_operand.vmem [shape: f32[2,1,16], index: 1, kind: input, shape index: {}]
  %s2 = inlined_call_operand.hbm [shape: f32[1,64], index: 2, kind: input, shape index: {}]
  %s3 = inlined_call_operand.hbm [shape: f32[1,64], index: 3, kind: input, shape index: {}]
  %s4 = inlined_call_operand.vmem [shape: bf16[2,64,192], index: 4, kind: input, shape index: {}]
  %s5 = inlined_call_operand.hbm [shape: f32[2,1,192], index: 5, kind: input, shape index: {}]
  %s6 = inlined_call_operand.vmem [shape: bf16[2,64,64], index: 6, kind: input, shape index: {}]
  %s7 = inlined_call_operand.hbm [shape: f32[2,1,64], index: 7, kind: input, shape index: {}]
  %s8 = inlined_call_operand.hbm [shape: f32[2,1,64], index: 8, kind: input, shape index: {}]
  %s9 = inlined_call_operand.hbm [shape: f32[2,1,64], index: 9, kind: input, shape index: {}]
  %s10 = inlined_call_operand.hbm [shape: bf16[2,64,128], index: 10, kind: input, shape index: {}]
  %s11 = inlined_call_operand.vmem [shape: f32[2,1,128], index: 11, kind: input, shape index: {}]
  %s12 = inlined_call_operand.vmem [shape: bf16[2,128,64], index: 12, kind: input, shape index: {}]
  %s13 = inlined_call_operand.vmem [shape: f32[2,1,64], index: 13, kind: input, shape index: {}]
  %s14 = inlined_call_operand.vmem [shape: f32[2,1,64], index: 14, kind: input, shape index: {}]
  %s15 = inlined_call_operand.vmem [shape: f32[2,1,64], index: 15, kind: input, shape index: {}]
  %s16 = inlined_call_operand.vmem [shape: bf16[64,64], index: 16, kind: input, shape index: {}]
  %s17 = inlined_call_operand.vmem [shape: f32[1,64], index: 17, kind: input, shape index: {}]
  %s18 = inlined_call_operand.hbm [shape: f32[2,16,64], index: 18, kind: output, shape index: {0}]
  %s19 = inlined_call_operand.hbm [shape: f32[2,1,64], index: 19, kind: output, shape index: {1}]
  %20 = xla_tuple %s18, %s19
  %s21 = sld [smem:[#allocation0]]
  $region145: #{tpu_custom_call.1} parent=0
    _
  %s23 = ssub.s32 1, %s21
  %s24 = scalar_select 0, %s23, %s21
  $region1: #{tpu_custom_call.1} parent=0
    #allocation2 [shape = 'u8[16384]{0}', space=vmem, size = 0x4000, scoped, tag = 'input window, operand 0']
    #allocation3 [shape = 's32[2]{0}', space=sflag, size = 0x8, scoped, tag = 'scoped memory for tpu_custom_call.1']
    #allocation4 [shape = 's32[2]{0}', space=sflag, size = 0x8, scoped, tag = 'scoped memory for tpu_custom_call.1']
    #allocation5 [shape = 'u8[512]{0}', space=vmem, size = 0x400, scoped, tag = 'input window, operand 2, single buffered']
    #allocation6 [shape = 's32[1]{0}', space=sflag, size = 0x4, scoped, tag = 'scoped memory for tpu_custom_call.1']
    #allocation7 [shape = 'u8[512]{0}', space=vmem, size = 0x400, scoped, tag = 'input window, operand 3, single buffered']
    #allocation8 [shape = 'u8[2048]{0}', space=vmem, size = 0x800, scoped, tag = 'input window, operand 5, single buffered']
    #allocation9 [shape = 's32[1]{0}', space=sflag, size = 0x4, scoped, tag = 'scoped memory for tpu_custom_call.1']
    #allocation10 [shape = 'u8[1024]{0}', space=vmem, size = 0x400, scoped, tag = 'input window, operand 7, single buffered']
    #allocation11 [shape = 'u8[1024]{0}', space=vmem, size = 0x400, scoped, tag = 'input window, operand 8, single buffered']
    #allocation12 [shape = 's32[1]{0}', space=sflag, size = 0x4, scoped, tag = 'scoped memory for tpu_custom_call.1']
    #allocation13 [shape = 'u8[1024]{0}', space=vmem, size = 0x400, scoped, tag = 'input window, operand 9, single buffered']
    #allocation14 [shape = 'u8[32768]{0}', space=vmem, size = 0x8000, scoped, tag = 'input window, operand 10, single buffered']
    #allocation15 [shape = 's32[1]{0}', space=sflag, size = 0x4, scoped, tag = 'scoped memory for tpu_custom_call.1']
    #allocation16 [shape = 'u8[16384]{0}', space=vmem, size = 0x4000, scoped, tag = 'output window, operand 0']
    #allocation17 [shape = 'u8[1024]{0}', space=vmem, size = 0x400, scoped, tag = 'output window, operand 1']
    #allocation18 [shape = 's32[2]{0}', space=sflag, size = 0x8, scoped, tag = 'scoped memory for tpu_custom_call.1']
    %25 = vsyncpa [#allocation3], 0
    %s26 = scalar_lea.sflag [#allocation3], 1
    %27 = vsyncpa %s26, 0
    %28 = vsyncpa [#allocation6], 0
    %29 = vsyncpa [#allocation9], 0
    %30 = vsyncpa [#allocation12], 0
    %31 = vsyncpa [#allocation15], 0
    %32 = vsyncpa [#allocation4], 0
    %s33 = scalar_lea.sflag [#allocation4], 1
    %34 = vsyncpa %s33, 0
    %35 = vsyncpa [#allocation18], 0
    %s36 = scalar_lea.sflag [#allocation18], 1
    %37 = vsyncpa %s36, 0
    loop: start=0, step=1, limit=4
    $region2: #{tpu_custom_call.1} parent=1 // loop_pre_header
      _
    $region3: #{tpu_custom_call.1} parent=1 // loop_header
      %s39 = sphi 0, %s43
      %p40 = scmp.ge.s32.totalorder %s39, 4
      %s49 = sphi 0, %s51
      %s52 = sphi 0, %s49
      %s53 = sphi 0, %s52
      %s69 = sphi 0, %s53
      %s75 = sphi 0, %s77
      %s78 = sphi 0, %s75
      %s79 = sphi 0, %s78
      %s95 = sphi 0, %s79
      %s99 = sphi 0, %s99
      %s101 = sphi 0, %s99
      %s102 = sphi 0, %s101
      %s116 = sphi 0, %s102
      %s120 = sphi 0, %s120
      %s122 = sphi 0, %s120
      %s123 = sphi 0, %s122
      %s137 = sphi 0, %s123
      %s141 = sphi 0, %s141
      %s143 = sphi 0, %s141
      %s144 = sphi 0, %s143
      %s158 = sphi 0, %s144
      %s162 = sphi 0, %s162
      %s164 = sphi 0, %s162
      %s165 = sphi 0, %s164
      %s179 = sphi 0, %s165
      %s183 = sphi 0, %s183
      %s185 = sphi 0, %s183
      %s186 = sphi 0, %s185
      %s200 = sphi 0, %s186
      %s204 = sphi 0, %s204
      %s206 = sphi 0, %s204
      %s207 = sphi 0, %s206
      %s221 = sphi 0, %s207
      %s225 = sphi 0, %s225
      %s227 = sphi 0, %s225
      %s228 = sphi 0, %s227
      %s242 = sphi 0, %s228
      %s246 = sphi 0, %s246
      %s248 = sphi 0, %s246
      %s249 = sphi 0, %s248
      %s263 = sphi 0, %s249
      %s267 = sphi 0, %s267
      %s269 = sphi 0, %s267
      %s270 = sphi 0, %s269
      %s284 = sphi 0, %s270
      %s288 = sphi 0, %s288
      %s290 = sphi 0, %s288
      %s291 = sphi 0, %s290
      %s305 = sphi 0, %s291
      %s309 = sphi 0, %s309
      %s311 = sphi 0, %s309
      %s312 = sphi 0, %s311
      %s326 = sphi 0, %s312
      %s330 = sphi 0, %s330
      %s332 = sphi 0, %s330
      %s333 = sphi 0, %s332
      %s347 = sphi 0, %s333
      %s351 = sphi 0, %s351
      %s353 = sphi 0, %s351
      %s354 = sphi 0, %s353
      %s368 = sphi 0, %s354
      %s372 = sphi 0, %s372
      %s374 = sphi 0, %s372
      %s375 = sphi 0, %s374
      %s389 = sphi 0, %s375
      %s393 = sphi 0, %s393
      %s395 = sphi 0, %s393
      %s396 = sphi 0, %s395
      %s410 = sphi 0, %s396
      %s414 = sphi 0, %s414
      %s416 = sphi 0, %s414
      %s417 = sphi 0, %s416
      %s431 = sphi 0, %s417
      %s437 = sphi 0, %s439
      %s440 = sphi 0, %s437
      %s441 = sphi 0, %s440
      %s457 = sphi 0, %s441
      %s463 = sphi 0, %s465
      %s466 = sphi 0, %s463
      %s467 = sphi 0, %s466
      %s483 = sphi 0, %s467
    $region4: #{tpu_custom_call.1} parent=1 // loop_header_branch
      %42 = sbr.rel (%p40) target = $region8
    $region5: #{tpu_custom_call.1} parent=1 // loop_body
      %s44 = ssub.s32 %s39, 1
      %s45 = ssub.s32 %s39, 2
      %s46 = sadd.s32 %s39, 1
      %s47 = ssub.s32 %s39, %s46
      %p48 = scmp.eq.s32.totalorder %s47, 0
      %s50 = sadd.s32 %s49, 1
      %s51 = scalar_select %p48, %s49, %s50
      %p54 = pneg %p48
      %p55 = scmp.eq.s32.totalorder %s39, 1
      %p56 = por %p54, %p55
      %p57 = scmp.ne.s32.totalorder %s49, %s52
      %p58 = scmp.eq.s32.totalorder %s39, 0
      %p59 = por %p57, %p58
      %p60 = scmp.ne.s32.totalorder %s49, %s52
      %p61 = scmp.eq.s32.totalorder %s44, 1
      %p62 = por %p60, %p61
      %p63 = scmp.ne.s32.totalorder %s52, %s53
      %p64 = scmp.eq.s32.totalorder %s44, 0
      %p65 = por %p63, %p64
      %p66 = scmp.ne.s32.totalorder %s52, %s53
      %p67 = scmp.eq.s32.totalorder %s45, 1
      %p68 = por %p66, %p67
      %p70 = scmp.ne.s32.totalorder %s53, %s69
      %p71 = scmp.eq.s32.totalorder %s45, 0
      %p72 = por %p70, %p71
      %s73 = ssub.s32 %s39, %s46
      %p74 = scmp.eq.s32.totalorder %s73, 0
      %s76 = sadd.s32 %s75, 1
      %s77 = scalar_select %p74, %s75, %s76
      %p80 = pneg %p74
      %p81 = scmp.eq.s32.totalorder %s39, 1
      %p82 = por %p80, %p81
      %p83 = scmp.ne.s32.totalorder %s75, %s78
      %p84 = scmp.eq.s32.totalorder %s39, 0
      %p85 = por %p83, %p84
      %p86 = scmp.ne.s32.totalorder %s75, %s78
      %p87 = scmp.eq.s32.totalorder %s44, 1
      %p88 = por %p86, %p87
      %p89 = scmp.ne.s32.totalorder %s78, %s79
      %p90 = scmp.eq.s32.totalorder %s44, 0
      %p91 = por %p89, %p90
      %p92 = scmp.ne.s32.totalorder %s78, %s79
      %p93 = scmp.eq.s32.totalorder %s45, 1
      %p94 = por %p92, %p93
      %p96 = scmp.ne.s32.totalorder %s79, %s95
      %p97 = scmp.eq.s32.totalorder %s45, 0
      %p98 = por %p96, %p97
      %s100 = sadd.s32 %s99, 1
      %p103 = scmp.eq.s32.totalorder %s39, 1
      %p104 = scmp.ne.s32.totalorder %s99, %s101
      %p105 = scmp.eq.s32.totalorder %s39, 0
      %p106 = por %p104, %p105
      %p107 = scmp.ne.s32.totalorder %s99, %s101
      %p108 = scmp.eq.s32.totalorder %s44, 1
      %p109 = por %p107, %p108
      %p110 = scmp.ne.s32.totalorder %s101, %s102
      %p111 = scmp.eq.s32.totalorder %s44, 0
      %p112 = por %p110, %p111
      %p113 = scmp.ne.s32.totalorder %s101, %s102
      %p114 = scmp.eq.s32.totalorder %s45, 1
      %p115 = por %p113, %p114
      %p117 = scmp.ne.s32.totalorder %s102, %s116
      %p118 = scmp.eq.s32.totalorder %s45, 0
      %p119 = por %p117, %p118
      %s121 = sadd.s32 %s120, 1
      %p124 = scmp.eq.s32.totalorder %s39, 1
      %p125 = scmp.ne.s32.totalorder %s120, %s122
      %p126 = scmp.eq.s32.totalorder %s39, 0
      %p127 = por %p125, %p126
      %p128 = scmp.ne.s32.totalorder %s120, %s122
      %p129 = scmp.eq.s32.totalorder %s44, 1
      %p130 = por %p128, %p129
      %p131 = scmp.ne.s32.totalorder %s122, %s123
      %p132 = scmp.eq.s32.totalorder %s44, 0
      %p133 = por %p131, %p132
      %p134 = scmp.ne.s32.totalorder %s122, %s123
      %p135 = scmp.eq.s32.totalorder %s45, 1
      %p136 = por %p134, %p135
      %p138 = scmp.ne.s32.totalorder %s123, %s137
      %p139 = scmp.eq.s32.totalorder %s45, 0
      %p140 = por %p138, %p139
      %s142 = sadd.s32 %s141, 1
      %p145 = scmp.eq.s32.totalorder %s39, 1
      %p146 = scmp.ne.s32.totalorder %s141, %s143
      %p147 = scmp.eq.s32.totalorder %s39, 0
      %p148 = por %p146, %p147
      %p149 = scmp.ne.s32.totalorder %s141, %s143
      %p150 = scmp.eq.s32.totalorder %s44, 1
      %p151 = por %p149, %p150
      %p152 = scmp.ne.s32.totalorder %s143, %s144
      %p153 = scmp.eq.s32.totalorder %s44, 0
      %p154 = por %p152, %p153
      %p155 = scmp.ne.s32.totalorder %s143, %s144
      %p156 = scmp.eq.s32.totalorder %s45, 1
      %p157 = por %p155, %p156
      %p159 = scmp.ne.s32.totalorder %s144, %s158
      %p160 = scmp.eq.s32.totalorder %s45, 0
      %p161 = por %p159, %p160
      %s163 = sadd.s32 %s162, 1
      %p166 = scmp.eq.s32.totalorder %s39, 1
      %p167 = scmp.ne.s32.totalorder %s162, %s164
      %p168 = scmp.eq.s32.totalorder %s39, 0
      %p169 = por %p167, %p168
      %p170 = scmp.ne.s32.totalorder %s162, %s164
      %p171 = scmp.eq.s32.totalorder %s44, 1
      %p172 = por %p170, %p171
      %p173 = scmp.ne.s32.totalorder %s164, %s165
      %p174 = scmp.eq.s32.totalorder %s44, 0
      %p175 = por %p173, %p174
      %p176 = scmp.ne.s32.totalorder %s164, %s165
      %p177 = scmp.eq.s32.totalorder %s45, 1
      %p178 = por %p176, %p177
      %p180 = scmp.ne.s32.totalorder %s165, %s179
      %p181 = scmp.eq.s32.totalorder %s45, 0
      %p182 = por %p180, %p181
      %s184 = sadd.s32 %s183, 1
      %p187 = scmp.eq.s32.totalorder %s39, 1
      %p188 = scmp.ne.s32.totalorder %s183, %s185
      %p189 = scmp.eq.s32.totalorder %s39, 0
      %p190 = por %p188, %p189
      %p191 = scmp.ne.s32.totalorder %s183, %s185
      %p192 = scmp.eq.s32.totalorder %s44, 1
      %p193 = por %p191, %p192
      %p194 = scmp.ne.s32.totalorder %s185, %s186
      %p195 = scmp.eq.s32.totalorder %s44, 0
      %p196 = por %p194, %p195
      %p197 = scmp.ne.s32.totalorder %s185, %s186
      %p198 = scmp.eq.s32.totalorder %s45, 1
      %p199 = por %p197, %p198
      %p201 = scmp.ne.s32.totalorder %s186, %s200
      %p202 = scmp.eq.s32.totalorder %s45, 0
      %p203 = por %p201, %p202
      %s205 = sadd.s32 %s204, 1
      %p208 = scmp.eq.s32.totalorder %s39, 1
      %p209 = scmp.ne.s32.totalorder %s204, %s206
      %p210 = scmp.eq.s32.totalorder %s39, 0
      %p211 = por %p209, %p210
      %p212 = scmp.ne.s32.totalorder %s204, %s206
      %p213 = scmp.eq.s32.totalorder %s44, 1
      %p214 = por %p212, %p213
      %p215 = scmp.ne.s32.totalorder %s206, %s207
      %p216 = scmp.eq.s32.totalorder %s44, 0
      %p217 = por %p215, %p216
      %p218 = scmp.ne.s32.totalorder %s206, %s207
      %p219 = scmp.eq.s32.totalorder %s45, 1
      %p220 = por %p218, %p219
      %p222 = scmp.ne.s32.totalorder %s207, %s221
      %p223 = scmp.eq.s32.totalorder %s45, 0
      %p224 = por %p222, %p223
      %s226 = sadd.s32 %s225, 1
      %p229 = scmp.eq.s32.totalorder %s39, 1
      %p230 = scmp.ne.s32.totalorder %s225, %s227
      %p231 = scmp.eq.s32.totalorder %s39, 0
      %p232 = por %p230, %p231
      %p233 = scmp.ne.s32.totalorder %s225, %s227
      %p234 = scmp.eq.s32.totalorder %s44, 1
      %p235 = por %p233, %p234
      %p236 = scmp.ne.s32.totalorder %s227, %s228
      %p237 = scmp.eq.s32.totalorder %s44, 0
      %p238 = por %p236, %p237
      %p239 = scmp.ne.s32.totalorder %s227, %s228
      %p240 = scmp.eq.s32.totalorder %s45, 1
      %p241 = por %p239, %p240
      %p243 = scmp.ne.s32.totalorder %s228, %s242
      %p244 = scmp.eq.s32.totalorder %s45, 0
      %p245 = por %p243, %p244
      %s247 = sadd.s32 %s246, 1
      %p250 = scmp.eq.s32.totalorder %s39, 1
      %p251 = scmp.ne.s32.totalorder %s246, %s248
      %p252 = scmp.eq.s32.totalorder %s39, 0
      %p253 = por %p251, %p252
      %p254 = scmp.ne.s32.totalorder %s246, %s248
      %p255 = scmp.eq.s32.totalorder %s44, 1
      %p256 = por %p254, %p255
      %p257 = scmp.ne.s32.totalorder %s248, %s249
      %p258 = scmp.eq.s32.totalorder %s44, 0
      %p259 = por %p257, %p258
      %p260 = scmp.ne.s32.totalorder %s248, %s249
      %p261 = scmp.eq.s32.totalorder %s45, 1
      %p262 = por %p260, %p261
      %p264 = scmp.ne.s32.totalorder %s249, %s263
      %p265 = scmp.eq.s32.totalorder %s45, 0
      %p266 = por %p264, %p265
      %s268 = sadd.s32 %s267, 1
      %p271 = scmp.eq.s32.totalorder %s39, 1
      %p272 = scmp.ne.s32.totalorder %s267, %s269
      %p273 = scmp.eq.s32.totalorder %s39, 0
      %p274 = por %p272, %p273
      %p275 = scmp.ne.s32.totalorder %s267, %s269
      %p276 = scmp.eq.s32.totalorder %s44, 1
      %p277 = por %p275, %p276
      %p278 = scmp.ne.s32.totalorder %s269, %s270
      %p279 = scmp.eq.s32.totalorder %s44, 0
      %p280 = por %p278, %p279
      %p281 = scmp.ne.s32.totalorder %s269, %s270
      %p282 = scmp.eq.s32.totalorder %s45, 1
      %p283 = por %p281, %p282
      %p285 = scmp.ne.s32.totalorder %s270, %s284
      %p286 = scmp.eq.s32.totalorder %s45, 0
      %p287 = por %p285, %p286
      %s289 = sadd.s32 %s288, 1
      %p292 = scmp.eq.s32.totalorder %s39, 1
      %p293 = scmp.ne.s32.totalorder %s288, %s290
      %p294 = scmp.eq.s32.totalorder %s39, 0
      %p295 = por %p293, %p294
      %p296 = scmp.ne.s32.totalorder %s288, %s290
      %p297 = scmp.eq.s32.totalorder %s44, 1
      %p298 = por %p296, %p297
      %p299 = scmp.ne.s32.totalorder %s290, %s291
      %p300 = scmp.eq.s32.totalorder %s44, 0
      %p301 = por %p299, %p300
      %p302 = scmp.ne.s32.totalorder %s290, %s291
      %p303 = scmp.eq.s32.totalorder %s45, 1
      %p304 = por %p302, %p303
      %p306 = scmp.ne.s32.totalorder %s291, %s305
      %p307 = scmp.eq.s32.totalorder %s45, 0
      %p308 = por %p306, %p307
      %s310 = sadd.s32 %s309, 1
      %p313 = scmp.eq.s32.totalorder %s39, 1
      %p314 = scmp.ne.s32.totalorder %s309, %s311
      %p315 = scmp.eq.s32.totalorder %s39, 0
      %p316 = por %p314, %p315
      %p317 = scmp.ne.s32.totalorder %s309, %s311
      %p318 = scmp.eq.s32.totalorder %s44, 1
      %p319 = por %p317, %p318
      %p320 = scmp.ne.s32.totalorder %s311, %s312
      %p321 = scmp.eq.s32.totalorder %s44, 0
      %p322 = por %p320, %p321
      %p323 = scmp.ne.s32.totalorder %s311, %s312
      %p324 = scmp.eq.s32.totalorder %s45, 1
      %p325 = por %p323, %p324
      %p327 = scmp.ne.s32.totalorder %s312, %s326
      %p328 = scmp.eq.s32.totalorder %s45, 0
      %p329 = por %p327, %p328
      %s331 = sadd.s32 %s330, 1
      %p334 = scmp.eq.s32.totalorder %s39, 1
      %p335 = scmp.ne.s32.totalorder %s330, %s332
      %p336 = scmp.eq.s32.totalorder %s39, 0
      %p337 = por %p335, %p336
      %p338 = scmp.ne.s32.totalorder %s330, %s332
      %p339 = scmp.eq.s32.totalorder %s44, 1
      %p340 = por %p338, %p339
      %p341 = scmp.ne.s32.totalorder %s332, %s333
      %p342 = scmp.eq.s32.totalorder %s44, 0
      %p343 = por %p341, %p342
      %p344 = scmp.ne.s32.totalorder %s332, %s333
      %p345 = scmp.eq.s32.totalorder %s45, 1
      %p346 = por %p344, %p345
      %p348 = scmp.ne.s32.totalorder %s333, %s347
      %p349 = scmp.eq.s32.totalorder %s45, 0
      %p350 = por %p348, %p349
      %s352 = sadd.s32 %s351, 1
      %p355 = scmp.eq.s32.totalorder %s39, 1
      %p356 = scmp.ne.s32.totalorder %s351, %s353
      %p357 = scmp.eq.s32.totalorder %s39, 0
      %p358 = por %p356, %p357
      %p359 = scmp.ne.s32.totalorder %s351, %s353
      %p360 = scmp.eq.s32.totalorder %s44, 1
      %p361 = por %p359, %p360
      %p362 = scmp.ne.s32.totalorder %s353, %s354
      %p363 = scmp.eq.s32.totalorder %s44, 0
      %p364 = por %p362, %p363
      %p365 = scmp.ne.s32.totalorder %s353, %s354
      %p366 = scmp.eq.s32.totalorder %s45, 1
      %p367 = por %p365, %p366
      %p369 = scmp.ne.s32.totalorder %s354, %s368
      %p370 = scmp.eq.s32.totalorder %s45, 0
      %p371 = por %p369, %p370
      %s373 = sadd.s32 %s372, 1
      %p376 = scmp.eq.s32.totalorder %s39, 1
      %p377 = scmp.ne.s32.totalorder %s372, %s374
      %p378 = scmp.eq.s32.totalorder %s39, 0
      %p379 = por %p377, %p378
      %p380 = scmp.ne.s32.totalorder %s372, %s374
      %p381 = scmp.eq.s32.totalorder %s44, 1
      %p382 = por %p380, %p381
      %p383 = scmp.ne.s32.totalorder %s374, %s375
      %p384 = scmp.eq.s32.totalorder %s44, 0
      %p385 = por %p383, %p384
      %p386 = scmp.ne.s32.totalorder %s374, %s375
      %p387 = scmp.eq.s32.totalorder %s45, 1
      %p388 = por %p386, %p387
      %p390 = scmp.ne.s32.totalorder %s375, %s389
      %p391 = scmp.eq.s32.totalorder %s45, 0
      %p392 = por %p390, %p391
      %s394 = sadd.s32 %s393, 1
      %p397 = scmp.eq.s32.totalorder %s39, 1
      %p398 = scmp.ne.s32.totalorder %s393, %s395
      %p399 = scmp.eq.s32.totalorder %s39, 0
      %p400 = por %p398, %p399
      %p401 = scmp.ne.s32.totalorder %s393, %s395
      %p402 = scmp.eq.s32.totalorder %s44, 1
      %p403 = por %p401, %p402
      %p404 = scmp.ne.s32.totalorder %s395, %s396
      %p405 = scmp.eq.s32.totalorder %s44, 0
      %p406 = por %p404, %p405
      %p407 = scmp.ne.s32.totalorder %s395, %s396
      %p408 = scmp.eq.s32.totalorder %s45, 1
      %p409 = por %p407, %p408
      %p411 = scmp.ne.s32.totalorder %s396, %s410
      %p412 = scmp.eq.s32.totalorder %s45, 0
      %p413 = por %p411, %p412
      %s415 = sadd.s32 %s414, 1
      %p418 = scmp.eq.s32.totalorder %s39, 1
      %p419 = scmp.ne.s32.totalorder %s414, %s416
      %p420 = scmp.eq.s32.totalorder %s39, 0
      %p421 = por %p419, %p420
      %p422 = scmp.ne.s32.totalorder %s414, %s416
      %p423 = scmp.eq.s32.totalorder %s44, 1
      %p424 = por %p422, %p423
      %p425 = scmp.ne.s32.totalorder %s416, %s417
      %p426 = scmp.eq.s32.totalorder %s44, 0
      %p427 = por %p425, %p426
      %p428 = scmp.ne.s32.totalorder %s416, %s417
      %p429 = scmp.eq.s32.totalorder %s45, 1
      %p430 = por %p428, %p429
      %p432 = scmp.ne.s32.totalorder %s417, %s431
      %p433 = scmp.eq.s32.totalorder %s45, 0
      %p434 = por %p432, %p433
      %s435 = ssub.s32 %s39, %s46
      %p436 = scmp.eq.s32.totalorder %s435, 0
      %s438 = sadd.s32 %s437, 1
      %s439 = scalar_select %p436, %s437, %s438
      %p442 = pneg %p436
      %p443 = scmp.eq.s32.totalorder %s39, 1
      %p444 = por %p442, %p443
      %p445 = scmp.ne.s32.totalorder %s437, %s440
      %p446 = scmp.eq.s32.totalorder %s39, 0
      %p447 = por %p445, %p446
      %p448 = scmp.ne.s32.totalorder %s437, %s440
      %p449 = scmp.eq.s32.totalorder %s44, 1
      %p450 = por %p448, %p449
      %p451 = scmp.ne.s32.totalorder %s440, %s441
      %p452 = scmp.eq.s32.totalorder %s44, 0
      %p453 = por %p451, %p452
      %p454 = scmp.ne.s32.totalorder %s440, %s441
      %p455 = scmp.eq.s32.totalorder %s45, 1
      %p456 = por %p454, %p455
      %p458 = scmp.ne.s32.totalorder %s441, %s457
      %p459 = scmp.eq.s32.totalorder %s45, 0
      %p460 = por %p458, %p459
      %s461 = ssub.s32 %s39, %s46
      %p462 = scmp.eq.s32.totalorder %s461, 0
      %s464 = sadd.s32 %s463, 1
      %s465 = scalar_select %p462, %s463, %s464
      %p468 = pneg %p462
      %p469 = scmp.eq.s32.totalorder %s39, 1
      %p470 = por %p468, %p469
      %p471 = scmp.ne.s32.totalorder %s463, %s466
      %p472 = scmp.eq.s32.totalorder %s39, 0
      %p473 = por %p471, %p472
      %p474 = scmp.ne.s32.totalorder %s463, %s466
      %p475 = scmp.eq.s32.totalorder %s44, 1
      %p476 = por %p474, %p475
      %p477 = scmp.ne.s32.totalorder %s466, %s467
      %p478 = scmp.eq.s32.totalorder %s44, 0
      %p479 = por %p477, %p478
      %p480 = scmp.ne.s32.totalorder %s466, %s467
      %p481 = scmp.eq.s32.totalorder %s45, 1
      %p482 = por %p480, %p481
      %p484 = scmp.ne.s32.totalorder %s467, %s483
      %p485 = scmp.eq.s32.totalorder %s45, 0
      %p486 = por %p484, %p485
      %p487 = scmp.le.s32.totalorder 1, %s39
      %p488 = scmp.lt.s32.totalorder %s39, 3
      %p489 = pnand %p487, %p488
      %p490 = pneg %p489
      // Predicated region
      $region9: #{tpu_custom_call.1} parent=5 // pred_check
        _
      $region10: #{tpu_custom_call.1} parent=5 // pred_check_branch
        %492 = sbr.rel (%p489) target = $region12
      $region11: #{tpu_custom_call.1} parent=5 // pred_region
        %s493 = ssub.s32 %s39, 1
        // Predicated region
        $region13: #{tpu_custom_call.1} parent=11 // pred_check
          %p494 = pneg %p112
        $region14: #{tpu_custom_call.1} parent=11 // pred_check_branch
          %496 = sbr.rel (%p494) target = $region16
        $region15: #{tpu_custom_call.1} parent=11 // pred_region
          %s498 = ssub.s32 16, 16
          %499 = vsyncadd [#allocation6], %s498
          %s501 = sshll.u32 [#allocation5], 4
          %s502 = int_to_ptr.vmem [resolvable:$true] %s501
          %504 = dma.hbm_to_vmem [thread:$0]  %s2, 16, %s502, [#allocation6]
        $region16: #{tpu_custom_call.1} parent=11 // pred_fallthru
          _
        // Predicated region
        $region17: #{tpu_custom_call.1} parent=11 // pred_check
          %p505 = pneg %p133
        $region18: #{tpu_custom_call.1} parent=11 // pred_check_branch
          %507 = sbr.rel (%p505) target = $region20
        $region19: #{tpu_custom_call.1} parent=11 // pred_region
          %s509 = ssub.s32 16, 16
          %510 = vsyncadd [#allocation6], %s509
          %s512 = sshll.u32 [#allocation7], 4
          %s513 = int_to_ptr.vmem [resolvable:$true] %s512
          %515 = dma.hbm_to_vmem [thread:$0]  %s3, 16, %s513, [#allocation6]
        $region20: #{tpu_custom_call.1} parent=11 // pred_fallthru
          _
        // Predicated region
        $region21: #{tpu_custom_call.1} parent=11 // pred_check
          %p516 = pneg %p154
        $region22: #{tpu_custom_call.1} parent=11 // pred_check_branch
          %518 = sbr.rel (%p516) target = $region24
        $region23: #{tpu_custom_call.1} parent=11 // pred_region
          _
        $region24: #{tpu_custom_call.1} parent=11 // pred_fallthru
          _
        // Predicated region
        $region25: #{tpu_custom_call.1} parent=11 // pred_check
          %p519 = pneg %p175
        $region26: #{tpu_custom_call.1} parent=11 // pred_check_branch
          %521 = sbr.rel (%p519) target = $region28
        $region27: #{tpu_custom_call.1} parent=11 // pred_region
          %s523 = ssub.s32 64, 64
          %524 = vsyncadd [#allocation9], %s523
          %s525 = sshll.u32 [#allocation8], 4
          %s526 = int_to_ptr.vmem [resolvable:$true] %s525
          %531 = dma.hbm_to_vmem [thread:$0]  %s5, 64, %s526, [#allocation9], 32, 32, 2
        $region28: #{tpu_custom_call.1} parent=11 // pred_fallthru
          _
        // Predicated region
        $region29: #{tpu_custom_call.1} parent=11 // pred_check
          %p532 = pneg %p196
        $region30: #{tpu_custom_call.1} parent=11 // pred_check_branch
          %534 = sbr.rel (%p532) target = $region32
        $region31: #{tpu_custom_call.1} parent=11 // pred_region
          _
        $region32: #{tpu_custom_call.1} parent=11 // pred_fallthru
          _
        // Predicated region
        $region33: #{tpu_custom_call.1} parent=11 // pred_check
          %p535 = pneg %p217
        $region34: #{tpu_custom_call.1} parent=11 // pred_check_branch
          %537 = sbr.rel (%p535) target = $region36
        $region35: #{tpu_custom_call.1} parent=11 // pred_region
          %s539 = ssub.s32 32, 32
          %540 = vsyncadd [#allocation9], %s539
          %s541 = sshll.u32 [#allocation10], 4
          %s542 = int_to_ptr.vmem [resolvable:$true] %s541
          %547 = dma.hbm_to_vmem [thread:$0]  %s7, 32, %s542, [#allocation9], 16, 16, 1
        $region36: #{tpu_custom_call.1} parent=11 // pred_fallthru
          _
        // Predicated region
        $region37: #{tpu_custom_call.1} parent=11 // pred_check
          %p548 = pneg %p238
        $region38: #{tpu_custom_call.1} parent=11 // pred_check_branch
          %550 = sbr.rel (%p548) target = $region40
        $region39: #{tpu_custom_call.1} parent=11 // pred_region
          %s552 = ssub.s32 32, 32
          %553 = vsyncadd [#allocation12], %s552
          %s554 = sshll.u32 [#allocation11], 4
          %s555 = int_to_ptr.vmem [resolvable:$true] %s554
          %560 = dma.hbm_to_vmem [thread:$0]  %s8, 32, %s555, [#allocation12], 16, 16, 1
        $region40: #{tpu_custom_call.1} parent=11 // pred_fallthru
          _
        // Predicated region
        $region41: #{tpu_custom_call.1} parent=11 // pred_check
          %p561 = pneg %p259
        $region42: #{tpu_custom_call.1} parent=11 // pred_check_branch
          %563 = sbr.rel (%p561) target = $region44
        $region43: #{tpu_custom_call.1} parent=11 // pred_region
          %s565 = ssub.s32 32, 32
          %566 = vsyncadd [#allocation12], %s565
          %s567 = sshll.u32 [#allocation13], 4
          %s568 = int_to_ptr.vmem [resolvable:$true] %s567
          %573 = dma.hbm_to_vmem [thread:$0]  %s9, 32, %s568, [#allocation12], 16, 16, 1
        $region44: #{tpu_custom_call.1} parent=11 // pred_fallthru
          _
        // Predicated region
        $region45: #{tpu_custom_call.1} parent=11 // pred_check
          %p574 = pneg %p280
        $region46: #{tpu_custom_call.1} parent=11 // pred_check_branch
          %576 = sbr.rel (%p574) target = $region48
        $region47: #{tpu_custom_call.1} parent=11 // pred_region
          %s578 = ssub.s32 1024, 1024
          %579 = vsyncadd [#allocation15], %s578
          %s580 = sshll.u32 [#allocation14], 4
          %s581 = int_to_ptr.vmem [resolvable:$true] %s580
          %586 = dma.hbm_to_vmem [thread:$0]  %s10, 1024, %s581, [#allocation15], 64, 64, 4
        $region48: #{tpu_custom_call.1} parent=11 // pred_fallthru
          _
        // Predicated region
        $region49: #{tpu_custom_call.1} parent=11 // pred_check
          %p587 = pneg %p301
        $region50: #{tpu_custom_call.1} parent=11 // pred_check_branch
          %589 = sbr.rel (%p587) target = $region52
        $region51: #{tpu_custom_call.1} parent=11 // pred_region
          _
        $region52: #{tpu_custom_call.1} parent=11 // pred_fallthru
          _
        // Predicated region
        $region53: #{tpu_custom_call.1} parent=11 // pred_check
          %p590 = pneg %p322
        $region54: #{tpu_custom_call.1} parent=11 // pred_check_branch
          %592 = sbr.rel (%p590) target = $region56
        $region55: #{tpu_custom_call.1} parent=11 // pred_region
          _
        $region56: #{tpu_custom_call.1} parent=11 // pred_fallthru
          _
        // Predicated region
        $region57: #{tpu_custom_call.1} parent=11 // pred_check
          %p593 = pneg %p343
        $region58: #{tpu_custom_call.1} parent=11 // pred_check_branch
          %595 = sbr.rel (%p593) target = $region60
        $region59: #{tpu_custom_call.1} parent=11 // pred_region
          _
        $region60: #{tpu_custom_call.1} parent=11 // pred_fallthru
          _
        // Predicated region
        $region61: #{tpu_custom_call.1} parent=11 // pred_check
          %p596 = pneg %p364
        $region62: #{tpu_custom_call.1} parent=11 // pred_check_branch
          %598 = sbr.rel (%p596) target = $region64
        $region63: #{tpu_custom_call.1} parent=11 // pred_region
          _
        $region64: #{tpu_custom_call.1} parent=11 // pred_fallthru
          _
        // Predicated region
        $region65: #{tpu_custom_call.1} parent=11 // pred_check
          %p599 = pneg %p385
        $region66: #{tpu_custom_call.1} parent=11 // pred_check_branch
          %601 = sbr.rel (%p599) target = $region68
        $region67: #{tpu_custom_call.1} parent=11 // pred_region
          _
        $region68: #{tpu_custom_call.1} parent=11 // pred_fallthru
          _
        // Predicated region
        $region69: #{tpu_custom_call.1} parent=11 // pred_check
          %p602 = pneg %p406
        $region70: #{tpu_custom_call.1} parent=11 // pred_check_branch
          %604 = sbr.rel (%p602) target = $region72
        $region71: #{tpu_custom_call.1} parent=11 // pred_region
          _
        $region72: #{tpu_custom_call.1} parent=11 // pred_fallthru
          _
        // Predicated region
        $region73: #{tpu_custom_call.1} parent=11 // pred_check
          %p605 = pneg %p427
        $region74: #{tpu_custom_call.1} parent=11 // pred_check_branch
          %607 = sbr.rel (%p605) target = $region76
        $region75: #{tpu_custom_call.1} parent=11 // pred_region
          _
        $region76: #{tpu_custom_call.1} parent=11 // pred_fallthru
          _
      $region12: #{tpu_custom_call.1} parent=5 // pred_fallthru
        _
      %p608 = scmp.lt.s32.totalorder %s39, 2
      // Predicated region
      $region77: #{tpu_custom_call.1} parent=5 // pred_check
        %p609 = pneg %p608
      $region78: #{tpu_custom_call.1} parent=5 // pred_check_branch
        %611 = sbr.rel (%p609) target = $region80
      $region79: #{tpu_custom_call.1} parent=5 // pred_region
        // Predicated region
        $region81: #{tpu_custom_call.1} parent=79 // pred_check
          %p612 = pneg %p59
        $region82: #{tpu_custom_call.1} parent=79 // pred_check_branch
          %614 = sbr.rel (%p612) target = $region84
        $region83: #{tpu_custom_call.1} parent=79 // pred_region
          %s615 = sand.u32 %s49, 1
          %s616 = scalar_lea.sflag [#allocation3], %s615
          %s617 = sand.u32 %s49, 1
          %s618 = smul.addr %s617, 16
          %s619 = scalar_lea.vmem [#allocation2], %s618
          %s621 = ssub.s32 256, 256
          %622 = vsyncadd %s616, %s621
          %s623 = smul.addr %s39, 2
          %s624 = smul.addr %s623, 128
          %s625 = scalar_lea.hbm %s0, %s624
          %s626 = sshll.u32 %s619, 4
          %s627 = int_to_ptr.vmem [resolvable:$true] %s626
          %632 = dma.hbm_to_vmem [thread:$0]  %s625, 256, %s627, %s616, 128, 128, 8
        $region84: #{tpu_custom_call.1} parent=79 // pred_fallthru
          _
        // Predicated region
        $region85: #{tpu_custom_call.1} parent=79 // pred_check
          %p633 = pneg %p85
        $region86: #{tpu_custom_call.1} parent=79 // pred_check_branch
          %635 = sbr.rel (%p633) target = $region88
        $region87: #{tpu_custom_call.1} parent=79 // pred_region
          %p636 = scmp.lt.s32.totalorder %s39, 1
          %s637 = scalar_select %p636, %s39, 1
          %s638 = scalar_lea.vmem %s1, %s637
        $region88: #{tpu_custom_call.1} parent=79 // pred_fallthru
          _
      $region80: #{tpu_custom_call.1} parent=5 // pred_fallthru
        _
      %p639 = scmp.le.s32.totalorder 1, %s39
      %p640 = scmp.lt.s32.totalorder %s39, 3
      %p641 = pnand %p639, %p640
      %p642 = pneg %p641
      // Predicated region
      $region89: #{tpu_custom_call.1} parent=5 // pred_check
        _
      $region90: #{tpu_custom_call.1} parent=5 // pred_check_branch
        %644 = sbr.rel (%p641) target = $region92
      $region91: #{tpu_custom_call.1} parent=5 // pred_region
        %s645 = ssub.s32 %s39, 1
        %s646 = sand.u32 %s52, 1
        %s647 = scalar_lea.sflag [#allocation3], %s646
        %s648 = sand.u32 %s52, 1
        %s649 = smul.addr %s648, 16
        %s650 = scalar_lea.vmem [#allocation2], %s649
        // Predicated region
        $region93: #{tpu_custom_call.1} parent=91 // pred_check
          %p651 = pneg %p65
        $region94: #{tpu_custom_call.1} parent=91 // pred_check_branch
          %653 = sbr.rel (%p651) target = $region96
        $region95: #{tpu_custom_call.1} parent=91 // pred_region
          %654 = dma.done %s647, 256
        $region96: #{tpu_custom_call.1} parent=91 // pred_fallthru
          _
        // Predicated region
        $region97: #{tpu_custom_call.1} parent=91 // pred_check
          %p655 = pneg %p112
        $region98: #{tpu_custom_call.1} parent=91 // pred_check_branch
          %657 = sbr.rel (%p655) target = $region100
        $region99: #{tpu_custom_call.1} parent=91 // pred_region
          %658 = dma.done [#allocation6], 16
        $region100: #{tpu_custom_call.1} parent=91 // pred_fallthru
          _
        // Predicated region
        $region101: #{tpu_custom_call.1} parent=91 // pred_check
          %p659 = pneg %p133
        $region102: #{tpu_custom_call.1} parent=91 // pred_check_branch
          %661 = sbr.rel (%p659) target = $region104
        $region103: #{tpu_custom_call.1} parent=91 // pred_region
          %662 = dma.done [#allocation6], 16
        $region104: #{tpu_custom_call.1} parent=91 // pred_fallthru
          _
        // Predicated region
        $region105: #{tpu_custom_call.1} parent=91 // pred_check
          %p663 = pneg %p175
        $region106: #{tpu_custom_call.1} parent=91 // pred_check_branch
          %665 = sbr.rel (%p663) target = $region108
        $region107: #{tpu_custom_call.1} parent=91 // pred_region
          %666 = dma.done [#allocation9], 64
        $region108: #{tpu_custom_call.1} parent=91 // pred_fallthru
          _
        // Predicated region
        $region109: #{tpu_custom_call.1} parent=91 // pred_check
          %p667 = pneg %p217
        $region110: #{tpu_custom_call.1} parent=91 // pred_check_branch
          %669 = sbr.rel (%p667) target = $region112
        $region111: #{tpu_custom_call.1} parent=91 // pred_region
          %670 = dma.done [#allocation9], 32
        $region112: #{tpu_custom_call.1} parent=91 // pred_fallthru
          _
        // Predicated region
        $region113: #{tpu_custom_call.1} parent=91 // pred_check
          %p671 = pneg %p238
        $region114: #{tpu_custom_call.1} parent=91 // pred_check_branch
          %673 = sbr.rel (%p671) target = $region116
        $region115: #{tpu_custom_call.1} parent=91 // pred_region
          %674 = dma.done [#allocation12], 32
        $region116: #{tpu_custom_call.1} parent=91 // pred_fallthru
          _
        // Predicated region
        $region117: #{tpu_custom_call.1} parent=91 // pred_check
          %p675 = pneg %p259
        $region118: #{tpu_custom_call.1} parent=91 // pred_check_branch
          %677 = sbr.rel (%p675) target = $region120
        $region119: #{tpu_custom_call.1} parent=91 // pred_region
          %678 = dma.done [#allocation12], 32
        $region120: #{tpu_custom_call.1} parent=91 // pred_fallthru
          _
        // Predicated region
        $region121: #{tpu_custom_call.1} parent=91 // pred_check
          %p679 = pneg %p280
        $region122: #{tpu_custom_call.1} parent=91 // pred_check_branch
          %681 = sbr.rel (%p679) target = $region124
        $region123: #{tpu_custom_call.1} parent=91 // pred_region
          %682 = dma.done [#allocation15], 1024
        $region124: #{tpu_custom_call.1} parent=91 // pred_fallthru
          _
        %s683 = sand.u32 %s52, 1
        %s684 = scalar_lea.sflag [#allocation3], %s683
        %s685 = sand.u32 %s52, 1
        %s686 = smul.addr %s685, 16
        %s687 = scalar_lea.vmem [#allocation2], %s686
        %p688 = pneg %p65
        %p689 = pneg %p62
        %p690 = scmp.lt.s32.totalorder %s44, 1
        %s691 = scalar_select %p690, %s44, 1
        %s692 = scalar_lea.vmem %s1, %s691
        %p693 = pneg %p91
        %p694 = pneg %p88
        %p695 = pneg %p112
        %p696 = pneg %p109
        %p697 = pneg %p133
        %p698 = pneg %p130
        %p699 = pneg %p154
        %p700 = pneg %p151
        %p701 = pneg %p175
        %p702 = pneg %p172
        %p703 = pneg %p196
        %p704 = pneg %p193
        %p705 = pneg %p217
        %p706 = pneg %p214
        %p707 = pneg %p238
        %p708 = pneg %p235
        %p709 = pneg %p259
        %p710 = pneg %p256
        %p711 = pneg %p280
        %p712 = pneg %p277
        %p713 = pneg %p301
        %p714 = pneg %p298
        %p715 = pneg %p322
        %p716 = pneg %p319
        %p717 = pneg %p343
        %p718 = pneg %p340
        %p719 = pneg %p364
        %p720 = pneg %p361
        %p721 = pneg %p385
        %p722 = pneg %p382
        %p723 = pneg %p406
        %p724 = pneg %p403
        %p725 = pneg %p427
        %p726 = pneg %p424
        %p727 = pneg %p453
        %p728 = pneg %p450
        %s729 = sand.u32 %s440, 1
        %s730 = scalar_lea.sflag [#allocation4], %s729
        %s731 = sand.u32 %s440, 1
        %s732 = smul.addr %s731, 16
        %s733 = scalar_lea.vmem [#allocation16], %s732
        %p734 = pneg %p479
        %p735 = pneg %p476
        %s736 = sand.u32 %s466, 1
        %s737 = scalar_lea.sflag [#allocation18], %s736
        %s738 = sand.u32 %s466, 1
        %s739 = scalar_lea.vmem [#allocation17], %s738
        %p740 = scmp.lt.s32.totalorder %s44, 1
        %s741 = scalar_select %p740, %s44, 1
        %s742 = scalar_lea.vmem %s1, %s741
        %v744 = vld [vmem:[%s650] sm:$0xff]
        %v745 = vld [vmem:[%s650 + $0x8] sm:$0xff]
        %v746 = vld [vmem:[#allocation5] sm:$0x1]
        %v747 = vld [vmem:[#allocation7] sm:$0x1]
        %vm748 = vcmask 523264
        %v749 = vsel %vm748, %v744, 0.0
        %750 = vadd.xlane.f32.xlu0 %v749
        %v751 = vpop.xlane.xlu0 %750
        %v752 = vsel %vm748, %v745, 0.0
        %753 = vadd.xlane.f32.xlu0 %v752
        %v754 = vpop.xlane.xlu0 %753
        %v755 = vrcp.pop 64.0
        %v756 = vmul.f32 %v751, %v755
        %v757 = vmul.f32 %v754, %v755
        %v758 = vsub.f32 %v744, %v756
        %v759 = vsub.f32 %v745, %v757
        %v760 = vmul.f32 %v758, %v758
        %v761 = vmul.f32 %v759, %v759
        %v762 = vsel %vm748, %v760, 0.0
        %763 = vadd.xlane.f32.xlu0 %v762
        %v764 = vpop.xlane.xlu0 %763
        %v765 = vsel %vm748, %v761, 0.0
        %766 = vadd.xlane.f32.xlu0 %v765
        %v767 = vpop.xlane.xlu0 %766
        %v768 = vmul.f32 %v764, %v755
        %v769 = vmul.f32 %v767, %v755
        %v770 = vadd.f32 %v768, 1e-05
        %v771 = vadd.f32 %v769, 1e-05
        %v772 = vrsqrt.pop %v770
        %v773 = vrsqrt.pop %v771
        %v774 = vmul.f32 %v758, %v772
        %v775 = vmul.f32 %v759, %v773
        %v777 = vlaneseq
        %v778 = vshrl.u32 %v777, 7
        %v779 = vsub.s32 0, %v778
        %v780 = vrot.slane %v746, %v779
        %v782 = vmul.f32 %v774, %v780
        %v783 = vmul.f32 %v775, %v780
        %v785 = vlaneseq
        %v786 = vshrl.u32 %v785, 7
        %v787 = vsub.s32 0, %v786
        %v788 = vrot.slane %v747, %v787
        %v790 = vadd.f32 %v782, %v788
        %v791 = vadd.f32 %v783, %v788
        %v792 = vld [vmem:[%s742] sm:$0x1]
        %v793 = vpack.c.bf16 %v791, %v790
        %v794 = vld [vmem:[%s4] sm:$0xff]
        %v795 = vld [vmem:[%s4 + $0x8] sm:$0xff]
        %v796 = vld [vmem:[%s4 + $0x10] sm:$0xff]
        %v797 = vld [vmem:[%s4 + $0x18] sm:$0xff]
        %v798 = vld [vmem:[%s4 + $0x20] sm:$0xff]
        %v799 = vld [vmem:[%s4 + $0x28] sm:$0xff]
        %v800 = vld [vmem:[%s4 + $0x30] sm:$0xff]
        %v801 = vld [vmem:[%s4 + $0x38] sm:$0xff]
        %v802 = vld [vmem:[#allocation8] sm:$0x3]
        %v804 = vlaneseq
        %v805 = vshrl.u32 %v804, 7
        %v806 = vsub.s32 0, %v805
        %v807 = vrot.slane %v802, %v806
        %v808 = vlaneseq
        %v809 = vshrl.u32 %v808, 7
        %v810 = vsub.s32 1, %v809
        %v811 = vrot.slane %v802, %v810
        %v822 = vunpack.c.l.b16 %v794
        %v823 = vunpack.c.h.b16 %v794
        %v824 = vunpack.c.l.b16 %v795
        %v825 = vunpack.c.h.b16 %v795
        %v826 = vunpack.c.l.b16 %v796
        %v827 = vunpack.c.h.b16 %v796
        %v828 = vunpack.c.l.b16 %v797
        %v829 = vunpack.c.h.b16 %v797
        %v830 = vunpack.c.l.b16 %v798
        %v831 = vunpack.c.h.b16 %v798
        %v832 = vunpack.c.l.b16 %v799
        %v833 = vunpack.c.h.b16 %v799
        %v834 = vunpack.c.l.b16 %v800
        %v835 = vunpack.c.h.b16 %v800
        %v836 = vunpack.c.l.b16 %v801
        %v837 = vunpack.c.h.b16 %v801
        %v838 = vpack.c.b16 %v824, %v822
        %v839 = vpack.c.b16 %v825, %v823
        %v840 = vpack.c.b16 %v828, %v826
        %v841 = vpack.c.b16 %v829, %v827
        %v842 = vpack.c.b16 %v832, %v830
        %v843 = vpack.c.b16 %v833, %v831
        %v844 = vpack.c.b16 %v836, %v834
        %v845 = vpack.c.b16 %v837, %v835
        %v855 = vsel %vm748, %v793, 0
        %857 = vmatprep.subr.bf16.mxu0 %v839
        %858 = vmatpush1.bf16.msra.mxu0 %v838
        %859 = vmatprep.subr.bf16.mxu0 %v841
        %860 = vmatpush1.bf16.msra.mxu0 %v840
        %861 = vmatprep.subr.bf16.mxu0 %v843
        %862 = vmatpush1.bf16.msra.mxu0 %v842
        %863 = vmatprep.subr.bf16.mxu0 %v845
        %864 = vmatpush1.bf16.msra.mxu0 %v844
        %865 = vmatprep.subr.bf16.mxu0 0
        %866 = vmatpush1.bf16.msra.mxu0 0
        %867 = vmatprep.subr.bf16.mxu0 0
        %868 = vmatpush1.bf16.msra.mxu0 0
        %869 = vmatprep.subr.bf16.mxu0 0
        %870 = vmatpush1.bf16.msra.mxu0 0
        %871 = vmatprep.subr.bf16.mxu0 0
        %872 = vmatpush1.bf16.msra.mxu0 0
        %873 = vmatprep.subr.bf16.mxu0 0
        %874 = vmatpush1.bf16.msra.mxu0 0
        %875 = vmatprep.subr.bf16.mxu0 0
        %876 = vmatpush1.bf16.msra.mxu0 0
        %877 = vmatprep.subr.bf16.mxu0 0
        %878 = vmatpush1.bf16.msra.mxu0 0
        %879 = vmatprep.subr.bf16.mxu0 0
        %880 = vmatpush1.bf16.msra.mxu0 0
        %881 = vmatprep.subr.bf16.mxu0 0
        %882 = vmatpush1.bf16.msra.mxu0 0
        %883 = vmatprep.subr.bf16.mxu0 0
        %884 = vmatpush1.bf16.msra.mxu0 0
        %885 = vmatprep.subr.bf16.mxu0 0
        %886 = vmatpush1.bf16.msra.mxu0 0
        %887 = vmatprep.subr.bf16.mxu0 0
        %888 = vmatpush1.bf16.msra.mxu0 0
        %889 = vmatprep.mubr.bf16.mxu0 0
        %890 = vmatmul.mubr.bf16.gmra.mrb[0].mxu0 %v855
        %v891 = vpop.f32.mrb[0].mxu0
        %v892 = vadd.f32 %v807, %v891
        %v893 = vpop.f32.mrb[0].mxu0
        %v894 = vadd.f32 %v811, %v893
        %v895 = vpop.f32.mrb[0].mxu0
        %v896 = vadd.f32 %v807, %v895
        %v897 = vpop.f32.mrb[0].mxu0
        %v898 = vadd.f32 %v811, %v897
        %899 = vdwg.mxu0
        %v900 = vpack.c.bf16 %v896, %v892
        %902 = vrot.lane.b32.xlu0 %v900, 64
        %v903 = vpop.permute.xlu0 %902
        %vm904 = vcmask 261120
        %v906 = vsel %vm904, %v900, 0
        %v909 = vsel %vm904, %v903, 0
        %911 = vmatprep.subr.bf16.mxu0 0
        %912 = vmatpush1.bf16.xpose.msra.mxu0 %v909
        %913 = vmatprep.subr.bf16.mxu0 0
        %914 = vmatpush1.bf16.xpose.msra.mxu0 0
        %915 = vmatprep.subr.bf16.mxu0 0
        %916 = vmatpush1.bf16.xpose.msra.mxu0 0
        %917 = vmatprep.subr.bf16.mxu0 0
        %918 = vmatpush1.bf16.xpose.msra.mxu0 0
        %919 = vmatprep.subr.bf16.mxu0 0
        %920 = vmatpush1.bf16.xpose.msra.mxu0 0
        %921 = vmatprep.subr.bf16.mxu0 0
        %922 = vmatpush1.bf16.xpose.msra.mxu0 0
        %923 = vmatprep.subr.bf16.mxu0 0
        %924 = vmatpush1.bf16.xpose.msra.mxu0 0
        %925 = vmatprep.subr.bf16.mxu0 0
        %926 = vmatpush1.bf16.xpose.msra.mxu0 0
        %927 = vmatprep.subr.bf16.mxu0 0
        %928 = vmatpush1.bf16.xpose.msra.mxu0 0
        %929 = vmatprep.subr.bf16.mxu0 0
        %930 = vmatpush1.bf16.xpose.msra.mxu0 0
        %931 = vmatprep.subr.bf16.mxu0 0
        %932 = vmatpush1.bf16.xpose.msra.mxu0 0
        %933 = vmatprep.subr.bf16.mxu0 0
        %934 = vmatpush1.bf16.xpose.msra.mxu0 0
        %935 = vmatprep.subr.bf16.mxu0 0
        %936 = vmatpush1.bf16.xpose.msra.mxu0 0
        %937 = vmatprep.subr.bf16.mxu0 0
        %938 = vmatpush1.bf16.xpose.msra.mxu0 0
        %939 = vmatprep.subr.bf16.mxu0 0
        %940 = vmatpush1.bf16.xpose.msra.mxu0 0
        %941 = vmatprep.subr.bf16.mxu0 0
        %942 = vmatpush1.bf16.xpose.msra.mxu0 0
        %943 = vmatprep.mubr.bf16.mxu0 0
        %944 = vmatmul.mubr.bf16.gmra.mrb[0].mxu0 %v906
        %v945 = vpop.f32.mrb[0].mxu0
        %v946 = vadd.f32 0.0, %v945
        %v947 = vpop.f32.mrb[0].mxu0
        %v948 = vpop.f32.mrb[0].mxu0
        %v949 = vadd.f32 0.0, %v948
        %v950 = vpop.f32.mrb[0].mxu0
        %951 = vdwg.mxu0
        %v952 = vmul.f32 %v946, 0.17677669
        %v953 = vmul.f32 %v949, 0.17677669
        %v955 = vlaneseq
        %v956 = vshrl.u32 %v955, 7
        %v957 = vsub.s32 0, %v956
        %v958 = vrot.slane %v792, %v957
        %v960 = vadd.f32 %v952, %v958
        %v961 = vadd.f32 %v953, %v958
        %vm962 = vcmask 130048
        %v963 = vsel %vm962, %v960, -inf
        %964 = vmax.xlane.f32.xlu0 %v963
        %v965 = vpop.xlane.xlu0 %964
        %v966 = vsel %vm962, %v961, -inf
        %967 = vmax.xlane.f32.xlu0 %v966
        %v968 = vpop.xlane.xlu0 %967
        %v969 = vsub.f32 %v960, %v965
        %v970 = vsub.f32 %v961, %v968
        %v971 = vmul.f32 %v969, 1.442695
        %v972 = vpow.pop %v971
        %v973 = vmul.f32 %v970, 1.442695
        %v974 = vpow.pop %v973
        %v975 = vsel %vm962, %v972, 0.0
        %976 = vadd.xlane.f32.xlu0 %v975
        %v977 = vpop.xlane.xlu0 %976
        %v978 = vsel %vm962, %v974, 0.0
        %979 = vadd.xlane.f32.xlu0 %v978
        %v980 = vpop.xlane.xlu0 %979
        %v981 = vrcp.pop %v977
        %v982 = vrcp.pop %v980
        %v983 = vmul.f32 %v972, %v981
        %v984 = vmul.f32 %v974, %v982
        %v985 = vpack.c.bf16 %v984, %v983
        %v986 = vpack.c.bf16 %v898, %v894
        %v988 = vsel %vm962, %v985, 0
        %990 = vmatprep.subr.bf16.mxu0 0
        %991 = vmatpush1.bf16.msra.mxu0 %v986
        %992 = vmatprep.subr.bf16.mxu0 0
        %993 = vmatpush1.bf16.msra.mxu0 0
        %994 = vmatprep.subr.bf16.mxu0 0
        %995 = vmatpush1.bf16.msra.mxu0 0
        %996 = vmatprep.subr.bf16.mxu0 0
        %997 = vmatpush1.bf16.msra.mxu0 0
        %998 = vmatprep.subr.bf16.mxu0 0
        %999 = vmatpush1.bf16.msra.mxu0 0
        %1000 = vmatprep.subr.bf16.mxu0 0
        %1001 = vmatpush1.bf16.msra.mxu0 0
        %1002 = vmatprep.subr.bf16.mxu0 0
        %1003 = vmatpush1.bf16.msra.mxu0 0
        %1004 = vmatprep.subr.bf16.mxu0 0
        %1005 = vmatpush1.bf16.msra.mxu0 0
        %1006 = vmatprep.subr.bf16.mxu0 0
        %1007 = vmatpush1.bf16.msra.mxu0 0
        %1008 = vmatprep.subr.bf16.mxu0 0
        %1009 = vmatpush1.bf16.msra.mxu0 0
        %1010 = vmatprep.subr.bf16.mxu0 0
        %1011 = vmatpush1.bf16.msra.mxu0 0
        %1012 = vmatprep.subr.bf16.mxu0 0
        %1013 = vmatpush1.bf16.msra.mxu0 0
        %1014 = vmatprep.subr.bf16.mxu0 0
        %1015 = vmatpush1.bf16.msra.mxu0 0
        %1016 = vmatprep.subr.bf16.mxu0 0
        %1017 = vmatpush1.bf16.msra.mxu0 0
        %1018 = vmatprep.subr.bf16.mxu0 0
        %1019 = vmatpush1.bf16.msra.mxu0 0
        %1020 = vmatprep.subr.bf16.mxu0 0
        %1021 = vmatpush1.bf16.msra.mxu0 0
        %1022 = vmatprep.mubr.bf16.mxu0 0
        %1023 = vmatmul.mubr.bf16.gmra.mrb[0].mxu0 %v988
        %v1024 = vpop.f32.mrb[0].mxu0
        %v1025 = vadd.f32 0.0, %v1024
        %v1026 = vpop.f32.mrb[0].mxu0
        %v1027 = vpop.f32.mrb[0].mxu0
        %v1028 = vadd.f32 0.0, %v1027
        %v1029 = vpop.f32.mrb[0].mxu0
        %1030 = vdwg.mxu0
        %1031 = vrot.lane.b32.xlu0 %v900, 96
        %v1032 = vpop.permute.xlu0 %1031
        %1033 = vrot.lane.b32.xlu0 %v900, 32
        %v1034 = vpop.permute.xlu0 %1033
        %v1036 = vsel %vm904, %v1032, 0
        %v1039 = vsel %vm904, %v1034, 0
        %1041 = vmatprep.subr.bf16.mxu0 0
        %1042 = vmatpush1.bf16.xpose.msra.mxu0 %v1039
        %1043 = vmatprep.subr.bf16.mxu0 0
        %1044 = vmatpush1.bf16.xpose.msra.mxu0 0
        %1045 = vmatprep.subr.bf16.mxu0 0
        %1046 = vmatpush1.bf16.xpose.msra.mxu0 0
        %1047 = vmatprep.subr.bf16.mxu0 0
        %1048 = vmatpush1.bf16.xpose.msra.mxu0 0
        %1049 = vmatprep.subr.bf16.mxu0 0
        %1050 = vmatpush1.bf16.xpose.msra.mxu0 0
        %1051 = vmatprep.subr.bf16.mxu0 0
        %1052 = vmatpush1.bf16.xpose.msra.mxu0 0
        %1053 = vmatprep.subr.bf16.mxu0 0
        %1054 = vmatpush1.bf16.xpose.msra.mxu0 0
        %1055 = vmatprep.subr.bf16.mxu0 0
        %1056 = vmatpush1.bf16.xpose.msra.mxu0 0
        %1057 = vmatprep.subr.bf16.mxu0 0
        %1058 = vmatpush1.bf16.xpose.msra.mxu0 0
        %1059 = vmatprep.subr.bf16.mxu0 0
        %1060 = vmatpush1.bf16.xpose.msra.mxu0 0
        %1061 = vmatprep.subr.bf16.mxu0 0
        %1062 = vmatpush1.bf16.xpose.msra.mxu0 0
        %1063 = vmatprep.subr.bf16.mxu0 0
        %1064 = vmatpush1.bf16.xpose.msra.mxu0 0
        %1065 = vmatprep.subr.bf16.mxu0 0
        %1066 = vmatpush1.bf16.xpose.msra.mxu0 0
        %1067 = vmatprep.subr.bf16.mxu0 0
        %1068 = vmatpush1.bf16.xpose.msra.mxu0 0
        %1069 = vmatprep.subr.bf16.mxu0 0
        %1070 = vmatpush1.bf16.xpose.msra.mxu0 0
        %1071 = vmatprep.subr.bf16.mxu0 0
        %1072 = vmatpush1.bf16.xpose.msra.mxu0 0
        %1073 = vmatprep.mubr.bf16.mxu0 0
        %1074 = vmatmul.mubr.bf16.gmra.mrb[0].mxu0 %v1036
        %v1075 = vpop.f32.mrb[0].mxu0
        %v1076 = vadd.f32 0.0, %v1075
        %v1077 = vpop.f32.mrb[0].mxu0
        %v1078 = vpop.f32.mrb[0].mxu0
        %v1079 = vadd.f32 0.0, %v1078
        %v1080 = vpop.f32.mrb[0].mxu0
        %1081 = vdwg.mxu0
        %v1082 = vmul.f32 %v1076, 0.17677669
        %v1083 = vmul.f32 %v1079, 0.17677669
        %v1084 = vadd.f32 %v1082, %v958
        %v1085 = vadd.f32 %v1083, %v958
        %v1086 = vsel %vm962, %v1084, -inf
        %1087 = vmax.xlane.f32.xlu0 %v1086
        %v1088 = vpop.xlane.xlu0 %1087
        %v1089 = vsel %vm962, %v1085, -inf
        %1090 = vmax.xlane.f32.xlu0 %v1089
        %v1091 = vpop.xlane.xlu0 %1090
        %v1092 = vsub.f32 %v1084, %v1088
        %v1093 = vsub.f32 %v1085, %v1091
        %v1094 = vmul.f32 %v1092, 1.442695
        %v1095 = vpow.pop %v1094
        %v1096 = vmul.f32 %v1093, 1.442695
        %v1097 = vpow.pop %v1096
        %v1098 = vsel %vm962, %v1095, 0.0
        %1099 = vadd.xlane.f32.xlu0 %v1098
        %v1100 = vpop.xlane.xlu0 %1099
        %v1101 = vsel %vm962, %v1097, 0.0
        %1102 = vadd.xlane.f32.xlu0 %v1101
        %v1103 = vpop.xlane.xlu0 %1102
        %v1104 = vrcp.pop %v1100
        %v1105 = vrcp.pop %v1103
        %v1106 = vmul.f32 %v1095, %v1104
        %v1107 = vmul.f32 %v1097, %v1105
        %v1108 = vpack.c.bf16 %v1107, %v1106
        %1110 = vrot.lane.b32.xlu0 %v986, 96
        %v1111 = vpop.permute.xlu0 %1110
        %v1114 = vsel %vm962, %v1108, 0
        %1116 = vmatprep.subr.bf16.mxu0 0
        %1117 = vmatpush1.bf16.msra.mxu0 %v1111
        %1118 = vmatprep.subr.bf16.mxu0 0
        %1119 = vmatpush1.bf16.msra.mxu0 0
        %1120 = vmatprep.subr.bf16.mxu0 0
        %1121 = vmatpush1.bf16.msra.mxu0 0
        %1122 = vmatprep.subr.bf16.mxu0 0
        %1123 = vmatpush1.bf16.msra.mxu0 0
        %1124 = vmatprep.subr.bf16.mxu0 0
        %1125 = vmatpush1.bf16.msra.mxu0 0
        %1126 = vmatprep.subr.bf16.mxu0 0
        %1127 = vmatpush1.bf16.msra.mxu0 0
        %1128 = vmatprep.subr.bf16.mxu0 0
        %1129 = vmatpush1.bf16.msra.mxu0 0
        %1130 = vmatprep.subr.bf16.mxu0 0
        %1131 = vmatpush1.bf16.msra.mxu0 0
        %1132 = vmatprep.subr.bf16.mxu0 0
        %1133 = vmatpush1.bf16.msra.mxu0 0
        %1134 = vmatprep.subr.bf16.mxu0 0
        %1135 = vmatpush1.bf16.msra.mxu0 0
        %1136 = vmatprep.subr.bf16.mxu0 0
        %1137 = vmatpush1.bf16.msra.mxu0 0
        %1138 = vmatprep.subr.bf16.mxu0 0
        %1139 = vmatpush1.bf16.msra.mxu0 0
        %1140 = vmatprep.subr.bf16.mxu0 0
        %1141 = vmatpush1.bf16.msra.mxu0 0
        %1142 = vmatprep.subr.bf16.mxu0 0
        %1143 = vmatpush1.bf16.msra.mxu0 0
        %1144 = vmatprep.subr.bf16.mxu0 0
        %1145 = vmatpush1.bf16.msra.mxu0 0
        %1146 = vmatprep.subr.bf16.mxu0 0
        %1147 = vmatpush1.bf16.msra.mxu0 0
        %1148 = vmatprep.mubr.bf16.mxu0 0
        %1149 = vmatmul.mubr.bf16.gmra.mrb[0].mxu0 %v1114
        %v1150 = vpop.f32.mrb[0].mxu0
        %v1151 = vadd.f32 0.0, %v1150
        %v1152 = vpop.f32.mrb[0].mxu0
        %v1153 = vpop.f32.mrb[0].mxu0
        %v1154 = vadd.f32 0.0, %v1153
        %v1155 = vpop.f32.mrb[0].mxu0
        %1156 = vdwg.mxu0
        %1159 = vrot.lane.b32.xlu0 %v1151, 32
        %v1160 = vpop.permute.xlu0 %1159
        %1161 = vrot.lane.b32.xlu0 %v1154, 32
        %v1162 = vpop.permute.xlu0 %1161
        %v1165 = vsel %vm904, %v1025, %v1160
        %v1166 = vsel %vm904, %v1028, %v1162
        %v1167 = vpack.c.bf16 %v1166, %v1165
        %v1168 = vld [vmem:[%s6] sm:$0xf]
        %v1169 = vld [vmem:[%s6 + $0x4] sm:$0xf]
        %v1170 = vld [vmem:[%s6 + $0x8] sm:$0xf]
        %v1171 = vld [vmem:[%s6 + $0xc] sm:$0xf]
        %v1172 = vld [vmem:[%s6 + $0x10] sm:$0xf]
        %v1173 = vld [vmem:[%s6 + $0x14] sm:$0xf]
        %v1174 = vld [vmem:[%s6 + $0x18] sm:$0xf]
        %v1175 = vld [vmem:[%s6 + $0x1c] sm:$0xf]
        %v1176 = vld [vmem:[#allocation10] sm:$0x1]
        %v1178 = vlaneseq
        %v1179 = vshrl.u32 %v1178, 7
        %v1180 = vsub.s32 0, %v1179
        %v1181 = vrot.slane %v1176, %v1180
        %v1191 = vunpack.c.l.b16 %v1168
        %v1192 = vunpack.c.l.b16 %v1169
        %v1193 = vunpack.c.l.b16 %v1170
        %v1194 = vunpack.c.l.b16 %v1171
        %v1195 = vunpack.c.l.b16 %v1172
        %v1196 = vunpack.c.l.b16 %v1173
        %v1197 = vunpack.c.l.b16 %v1174
        %v1198 = vunpack.c.l.b16 %v1175
        %v1199 = vpack.c.b16 %v1192, %v1191
        %v1200 = vpack.c.b16 %v1194, %v1193
        %v1201 = vpack.c.b16 %v1196, %v1195
        %v1202 = vpack.c.b16 %v1198, %v1197
        %v1208 = vsel %vm748, %v1167, 0
        %1210 = vmatprep.subr.bf16.mxu0 0
        %1211 = vmatpush1.bf16.msra.mxu0 %v1199
        %1212 = vmatprep.subr.bf16.mxu0 0
        %1213 = vmatpush1.bf16.msra.mxu0 %v1200
        %1214 = vmatprep.subr.bf16.mxu0 0
        %1215 = vmatpush1.bf16.msra.mxu0 %v1201
        %1216 = vmatprep.subr.bf16.mxu0 0
        %1217 = vmatpush1.bf16.msra.mxu0 %v1202
        %1218 = vmatprep.subr.bf16.mxu0 0
        %1219 = vmatpush1.bf16.msra.mxu0 0
        %1220 = vmatprep.subr.bf16.mxu0 0
        %1221 = vmatpush1.bf16.msra.mxu0 0
        %1222 = vmatprep.subr.bf16.mxu0 0
        %1223 = vmatpush1.bf16.msra.mxu0 0
        %1224 = vmatprep.subr.bf16.mxu0 0
        %1225 = vmatpush1.bf16.msra.mxu0 0
        %1226 = vmatprep.subr.bf16.mxu0 0
        %1227 = vmatpush1.bf16.msra.mxu0 0
        %1228 = vmatprep.subr.bf16.mxu0 0
        %1229 = vmatpush1.bf16.msra.mxu0 0
        %1230 = vmatprep.subr.bf16.mxu0 0
        %1231 = vmatpush1.bf16.msra.mxu0 0
        %1232 = vmatprep.subr.bf16.mxu0 0
        %1233 = vmatpush1.bf16.msra.mxu0 0
        %1234 = vmatprep.subr.bf16.mxu0 0
        %1235 = vmatpush1.bf16.msra.mxu0 0
        %1236 = vmatprep.subr.bf16.mxu0 0
        %1237 = vmatpush1.bf16.msra.mxu0 0
        %1238 = vmatprep.subr.bf16.mxu0 0
        %1239 = vmatpush1.bf16.msra.mxu0 0
        %1240 = vmatprep.subr.bf16.mxu0 0
        %1241 = vmatpush1.bf16.msra.mxu0 0
        %1242 = vmatprep.mubr.bf16.mxu0 0
        %1243 = vmatmul.mubr.bf16.gmra.mrb[0].mxu0 %v1208
        %v1244 = vpop.f32.mrb[0].mxu0
        %v1245 = vadd.f32 %v1181, %v1244
        %v1246 = vpop.f32.mrb[0].mxu0
        %v1247 = vpop.f32.mrb[0].mxu0
        %v1248 = vadd.f32 %v1181, %v1247
        %v1249 = vpop.f32.mrb[0].mxu0
        %1250 = vdwg.mxu0
        %v1251 = vadd.f32 %v1245, %v790
        %v1252 = vadd.f32 %v1248, %v791
        %v1253 = vld [vmem:[#allocation11] sm:$0x1]
        %v1254 = vld [vmem:[#allocation13] sm:$0x1]
        %v1255 = vsel %vm748, %v1251, 0.0
        %1256 = vadd.xlane.f32.xlu0 %v1255
        %v1257 = vpop.xlane.xlu0 %1256
        %v1258 = vsel %vm748, %v1252, 0.0
        %1259 = vadd.xlane.f32.xlu0 %v1258
        %v1260 = vpop.xlane.xlu0 %1259
        %v1261 = vmul.f32 %v1257, %v755
        %v1262 = vmul.f32 %v1260, %v755
        %v1263 = vsub.f32 %v1251, %v1261
        %v1264 = vsub.f32 %v1252, %v1262
        %v1265 = vmul.f32 %v1263, %v1263
        %v1266 = vmul.f32 %v1264, %v1264
        %v1267 = vsel %vm748, %v1265, 0.0
        %1268 = vadd.xlane.f32.xlu0 %v1267
        %v1269 = vpop.xlane.xlu0 %1268
        %v1270 = vsel %vm748, %v1266, 0.0
        %1271 = vadd.xlane.f32.xlu0 %v1270
        %v1272 = vpop.xlane.xlu0 %1271
        %v1273 = vmul.f32 %v1269, %v755
        %v1274 = vmul.f32 %v1272, %v755
        %v1275 = vadd.f32 %v1273, 1e-05
        %v1276 = vadd.f32 %v1274, 1e-05
        %v1277 = vrsqrt.pop %v1275
        %v1278 = vrsqrt.pop %v1276
        %v1279 = vmul.f32 %v1263, %v1277
        %v1280 = vmul.f32 %v1264, %v1278
        %v1282 = vlaneseq
        %v1283 = vshrl.u32 %v1282, 7
        %v1284 = vsub.s32 0, %v1283
        %v1285 = vrot.slane %v1253, %v1284
        %v1287 = vmul.f32 %v1279, %v1285
        %v1288 = vmul.f32 %v1280, %v1285
        %v1290 = vlaneseq
        %v1291 = vshrl.u32 %v1290, 7
        %v1292 = vsub.s32 0, %v1291
        %v1293 = vrot.slane %v1254, %v1292
        %v1295 = vadd.f32 %v1287, %v1293
        %v1296 = vadd.f32 %v1288, %v1293
        %v1297 = vpack.c.bf16 %v1296, %v1295
        %v1298 = vld [vmem:[#allocation14] sm:$0xf]
        %v1299 = vld [vmem:[#allocation14 + $0x4] sm:$0xf]
        %v1300 = vld [vmem:[#allocation14 + $0x8] sm:$0xf]
        %v1301 = vld [vmem:[#allocation14 + $0xc] sm:$0xf]
        %v1302 = vld [vmem:[#allocation14 + $0x10] sm:$0xf]
        %v1303 = vld [vmem:[#allocation14 + $0x14] sm:$0xf]
        %v1304 = vld [vmem:[#allocation14 + $0x18] sm:$0xf]
        %v1305 = vld [vmem:[#allocation14 + $0x1c] sm:$0xf]
        %v1306 = vld [vmem:[%s11] sm:$0x1]
        %v1308 = vlaneseq
        %v1309 = vshrl.u32 %v1308, 7
        %v1310 = vsub.s32 0, %v1309
        %v1311 = vrot.slane %v1306, %v1310
        %v1321 = vunpack.c.l.b16 %v1298
        %v1322 = vunpack.c.l.b16 %v1299
        %v1323 = vunpack.c.l.b16 %v1300
        %v1324 = vunpack.c.l.b16 %v1301
        %v1325 = vunpack.c.l.b16 %v1302
        %v1326 = vunpack.c.l.b16 %v1303
        %v1327 = vunpack.c.l.b16 %v1304
        %v1328 = vunpack.c.l.b16 %v1305
        %v1329 = vpack.c.b16 %v1322, %v1321
        %v1330 = vpack.c.b16 %v1324, %v1323
        %v1331 = vpack.c.b16 %v1326, %v1325
        %v1332 = vpack.c.b16 %v1328, %v1327
        %v1338 = vsel %vm748, %v1297, 0
        %1340 = vmatprep.subr.bf16.mxu0 0
        %1341 = vmatpush1.bf16.msra.mxu0 %v1329
        %1342 = vmatprep.subr.bf16.mxu0 0
        %1343 = vmatpush1.bf16.msra.mxu0 %v1330
        %1344 = vmatprep.subr.bf16.mxu0 0
        %1345 = vmatpush1.bf16.msra.mxu0 %v1331
        %1346 = vmatprep.subr.bf16.mxu0 0
        %1347 = vmatpush1.bf16.msra.mxu0 %v1332
        %1348 = vmatprep.subr.bf16.mxu0 0
        %1349 = vmatpush1.bf16.msra.mxu0 0
        %1350 = vmatprep.subr.bf16.mxu0 0
        %1351 = vmatpush1.bf16.msra.mxu0 0
        %1352 = vmatprep.subr.bf16.mxu0 0
        %1353 = vmatpush1.bf16.msra.mxu0 0
        %1354 = vmatprep.subr.bf16.mxu0 0
        %1355 = vmatpush1.bf16.msra.mxu0 0
        %1356 = vmatprep.subr.bf16.mxu0 0
        %1357 = vmatpush1.bf16.msra.mxu0 0
        %1358 = vmatprep.subr.bf16.mxu0 0
        %1359 = vmatpush1.bf16.msra.mxu0 0
        %1360 = vmatprep.subr.bf16.mxu0 0
        %1361 = vmatpush1.bf16.msra.mxu0 0
        %1362 = vmatprep.subr.bf16.mxu0 0
        %1363 = vmatpush1.bf16.msra.mxu0 0
        %1364 = vmatprep.subr.bf16.mxu0 0
        %1365 = vmatpush1.bf16.msra.mxu0 0
        %1366 = vmatprep.subr.bf16.mxu0 0
        %1367 = vmatpush1.bf16.msra.mxu0 0
        %1368 = vmatprep.subr.bf16.mxu0 0
        %1369 = vmatpush1.bf16.msra.mxu0 0
        %1370 = vmatprep.subr.bf16.mxu0 0
        %1371 = vmatpush1.bf16.msra.mxu0 0
        %1372 = vmatprep.mubr.bf16.mxu0 0
        %1373 = vmatmul.mubr.bf16.gmra.mrb[0].mxu0 %v1338
        %v1374 = vpop.f32.mrb[0].mxu0
        %v1375 = vadd.f32 %v1311, %v1374
        %v1376 = vpop.f32.mrb[0].mxu0
        %v1377 = vpop.f32.mrb[0].mxu0
        %v1378 = vadd.f32 %v1311, %v1377
        %v1379 = vpop.f32.mrb[0].mxu0
        %1380 = vdwg.mxu0
        %v1381 = vmul.f32 %v1375, 0.5
        %v1382 = vmul.f32 %v1378, 0.5
        %v1383 = vmul.f32 %v1375, 0.044715
        %v1384 = vmul.f32 %v1378, 0.044715
        %v1385 = vmul.f32 %v1383, %v1375
        %v1386 = vmul.f32 %v1384, %v1378
        %v1387 = vmul.f32 %v1385, %v1375
        %v1388 = vmul.f32 %v1386, %v1378
        %v1389 = vadd.f32 %v1375, %v1387
        %v1390 = vadd.f32 %v1378, %v1388
        %v1391 = vmul.f32 %v1389, 0.7978846
        %v1392 = vmul.f32 %v1390, 0.7978846
        %v1393 = vtanh.pop %v1391
        %v1394 = vtanh.pop %v1392
        %v1395 = vadd.f32 %v1393, 1.0
        %v1396 = vadd.f32 %v1394, 1.0
        %v1397 = vmul.f32 %v1381, %v1395
        %v1398 = vmul.f32 %v1382, %v1396
        %v1399 = vpack.c.bf16 %v1398, %v1397
        %v1400 = vld [vmem:[%s12] sm:$0xf]
        %v1401 = vld [vmem:[%s12 + $0x4] sm:$0xf]
        %v1402 = vld [vmem:[%s12 + $0x8] sm:$0xf]
        %v1403 = vld [vmem:[%s12 + $0xc] sm:$0xf]
        %v1404 = vld [vmem:[%s12 + $0x10] sm:$0xf]
        %v1405 = vld [vmem:[%s12 + $0x14] sm:$0xf]
        %v1406 = vld [vmem:[%s12 + $0x18] sm:$0xf]
        %v1407 = vld [vmem:[%s12 + $0x1c] sm:$0xf]
        %v1408 = vld [vmem:[%s12 + $0x20] sm:$0xf]
        %v1409 = vld [vmem:[%s12 + $0x24] sm:$0xf]
        %v1410 = vld [vmem:[%s12 + $0x28] sm:$0xf]
        %v1411 = vld [vmem:[%s12 + $0x2c] sm:$0xf]
        %v1412 = vld [vmem:[%s12 + $0x30] sm:$0xf]
        %v1413 = vld [vmem:[%s12 + $0x34] sm:$0xf]
        %v1414 = vld [vmem:[%s12 + $0x38] sm:$0xf]
        %v1415 = vld [vmem:[%s12 + $0x3c] sm:$0xf]
        %v1416 = vld [vmem:[%s13] sm:$0x1]
        %v1418 = vlaneseq
        %v1419 = vshrl.u32 %v1418, 7
        %v1420 = vsub.s32 0, %v1419
        %v1421 = vrot.slane %v1416, %v1420
        %v1439 = vunpack.c.l.b16 %v1400
        %v1440 = vunpack.c.l.b16 %v1401
        %v1441 = vunpack.c.l.b16 %v1402
        %v1442 = vunpack.c.l.b16 %v1403
        %v1443 = vunpack.c.l.b16 %v1404
        %v1444 = vunpack.c.l.b16 %v1405
        %v1445 = vunpack.c.l.b16 %v1406
        %v1446 = vunpack.c.l.b16 %v1407
        %v1447 = vunpack.c.l.b16 %v1408
        %v1448 = vunpack.c.l.b16 %v1409
        %v1449 = vunpack.c.l.b16 %v1410
        %v1450 = vunpack.c.l.b16 %v1411
        %v1451 = vunpack.c.l.b16 %v1412
        %v1452 = vunpack.c.l.b16 %v1413
        %v1453 = vunpack.c.l.b16 %v1414
        %v1454 = vunpack.c.l.b16 %v1415
        %v1455 = vpack.c.b16 %v1440, %v1439
        %v1456 = vpack.c.b16 %v1442, %v1441
        %v1457 = vpack.c.b16 %v1444, %v1443
        %v1458 = vpack.c.b16 %v1446, %v1445
        %v1459 = vpack.c.b16 %v1448, %v1447
        %v1460 = vpack.c.b16 %v1450, %v1449
        %v1461 = vpack.c.b16 %v1452, %v1451
        %v1462 = vpack.c.b16 %v1454, %v1453
        %1471 = vmatprep.subr.bf16.mxu0 0
        %1472 = vmatpush1.bf16.msra.mxu0 %v1455
        %1473 = vmatprep.subr.bf16.mxu0 0
        %1474 = vmatpush1.bf16.msra.mxu0 %v1456
        %1475 = vmatprep.subr.bf16.mxu0 0
        %1476 = vmatpush1.bf16.msra.mxu0 %v1457
        %1477 = vmatprep.subr.bf16.mxu0 0
        %1478 = vmatpush1.bf16.msra.mxu0 %v1458
        %1479 = vmatprep.subr.bf16.mxu0 0
        %1480 = vmatpush1.bf16.msra.mxu0 %v1459
        %1481 = vmatprep.subr.bf16.mxu0 0
        %1482 = vmatpush1.bf16.msra.mxu0 %v1460
        %1483 = vmatprep.subr.bf16.mxu0 0
        %1484 = vmatpush1.bf16.msra.mxu0 %v1461
        %1485 = vmatprep.subr.bf16.mxu0 0
        %1486 = vmatpush1.bf16.msra.mxu0 %v1462
        %1487 = vmatprep.subr.bf16.mxu0 0
        %1488 = vmatpush1.bf16.msra.mxu0 0
        %1489 = vmatprep.subr.bf16.mxu0 0
        %1490 = vmatpush1.bf16.msra.mxu0 0
        %1491 = vmatprep.subr.bf16.mxu0 0
        %1492 = vmatpush1.bf16.msra.mxu0 0
        %1493 = vmatprep.subr.bf16.mxu0 0
        %1494 = vmatpush1.bf16.msra.mxu0 0
        %1495 = vmatprep.subr.bf16.mxu0 0
        %1496 = vmatpush1.bf16.msra.mxu0 0
        %1497 = vmatprep.subr.bf16.mxu0 0
        %1498 = vmatpush1.bf16.msra.mxu0 0
        %1499 = vmatprep.subr.bf16.mxu0 0
        %1500 = vmatpush1.bf16.msra.mxu0 0
        %1501 = vmatprep.subr.bf16.mxu0 0
        %1502 = vmatpush1.bf16.msra.mxu0 0
        %1503 = vmatprep.mubr.bf16.mxu0 0
        %1504 = vmatmul.mubr.bf16.gmra.mrb[0].mxu0 %v1399
        %v1505 = vpop.f32.mrb[0].mxu0
        %v1506 = vadd.f32 %v1421, %v1505
        %v1507 = vpop.f32.mrb[0].mxu0
        %v1508 = vpop.f32.mrb[0].mxu0
        %v1509 = vadd.f32 %v1421, %v1508
        %v1510 = vpop.f32.mrb[0].mxu0
        %1511 = vdwg.mxu0
        %v1512 = vadd.f32 %v1506, %v1295
        %v1513 = vadd.f32 %v1509, %v1296
        %v1514 = vld [vmem:[%s14] sm:$0x1]
        %v1515 = vld [vmem:[%s15] sm:$0x1]
        %v1516 = vsel %vm748, %v1512, 0.0
        %1517 = vadd.xlane.f32.xlu0 %v1516
        %v1518 = vpop.xlane.xlu0 %1517
        %v1519 = vsel %vm748, %v1513, 0.0
        %1520 = vadd.xlane.f32.xlu0 %v1519
        %v1521 = vpop.xlane.xlu0 %1520
        %v1522 = vmul.f32 %v1518, %v755
        %v1523 = vmul.f32 %v1521, %v755
        %v1524 = vsub.f32 %v1512, %v1522
        %v1525 = vsub.f32 %v1513, %v1523
        %v1526 = vmul.f32 %v1524, %v1524
        %v1527 = vmul.f32 %v1525, %v1525
        %v1528 = vsel %vm748, %v1526, 0.0
        %1529 = vadd.xlane.f32.xlu0 %v1528
        %v1530 = vpop.xlane.xlu0 %1529
        %v1531 = vsel %vm748, %v1527, 0.0
        %1532 = vadd.xlane.f32.xlu0 %v1531
        %v1533 = vpop.xlane.xlu0 %1532
        %v1534 = vmul.f32 %v1530, %v755
        %v1535 = vmul.f32 %v1533, %v755
        %v1536 = vadd.f32 %v1534, 1e-05
        %v1537 = vadd.f32 %v1535, 1e-05
        %v1538 = vrsqrt.pop %v1536
        %v1539 = vrsqrt.pop %v1537
        %v1540 = vmul.f32 %v1524, %v1538
        %v1541 = vmul.f32 %v1525, %v1539
        %v1543 = vlaneseq
        %v1544 = vshrl.u32 %v1543, 7
        %v1545 = vsub.s32 0, %v1544
        %v1546 = vrot.slane %v1514, %v1545
        %v1548 = vmul.f32 %v1540, %v1546
        %v1549 = vmul.f32 %v1541, %v1546
        %v1551 = vlaneseq
        %v1552 = vshrl.u32 %v1551, 7
        %v1553 = vsub.s32 0, %v1552
        %v1554 = vrot.slane %v1515, %v1553
        %v1556 = vadd.f32 %v1548, %v1554
        %v1557 = vadd.f32 %v1549, %v1554
        %v1558 = vpack.c.bf16 %v1557, %v1556
        %s1559 = scalar_lea.vmem %s4, 64
        %v1560 = vld [vmem:[%s1559] sm:$0xff]
        %v1561 = vld [vmem:[%s1559 + $0x8] sm:$0xff]
        %v1562 = vld [vmem:[%s1559 + $0x10] sm:$0xff]
        %v1563 = vld [vmem:[%s1559 + $0x18] sm:$0xff]
        %v1564 = vld [vmem:[%s1559 + $0x20] sm:$0xff]
        %v1565 = vld [vmem:[%s1559 + $0x28] sm:$0xff]
        %v1566 = vld [vmem:[%s1559 + $0x30] sm:$0xff]
        %v1567 = vld [vmem:[%s1559 + $0x38] sm:$0xff]
        %s1568 = scalar_lea.vmem [#allocation8], 2
        %v1569 = vld [vmem:[%s1568] sm:$0x3]
        %v1571 = vlaneseq
        %v1572 = vshrl.u32 %v1571, 7
        %v1573 = vsub.s32 0, %v1572
        %v1574 = vrot.slane %v1569, %v1573
        %v1575 = vlaneseq
        %v1576 = vshrl.u32 %v1575, 7
        %v1577 = vsub.s32 1, %v1576
        %v1578 = vrot.slane %v1569, %v1577
        %v1589 = vunpack.c.l.b16 %v1560
        %v1590 = vunpack.c.h.b16 %v1560
        %v1591 = vunpack.c.l.b16 %v1561
        %v1592 = vunpack.c.h.b16 %v1561
        %v1593 = vunpack.c.l.b16 %v1562
        %v1594 = vunpack.c.h.b16 %v1562
        %v1595 = vunpack.c.l.b16 %v1563
        %v1596 = vunpack.c.h.b16 %v1563
        %v1597 = vunpack.c.l.b16 %v1564
        %v1598 = vunpack.c.h.b16 %v1564
        %v1599 = vunpack.c.l.b16 %v1565
        %v1600 = vunpack.c.h.b16 %v1565
        %v1601 = vunpack.c.l.b16 %v1566
        %v1602 = vunpack.c.h.b16 %v1566
        %v1603 = vunpack.c.l.b16 %v1567
        %v1604 = vunpack.c.h.b16 %v1567
        %v1605 = vpack.c.b16 %v1591, %v1589
        %v1606 = vpack.c.b16 %v1592, %v1590
        %v1607 = vpack.c.b16 %v1595, %v1593
        %v1608 = vpack.c.b16 %v1596, %v1594
        %v1609 = vpack.c.b16 %v1599, %v1597
        %v1610 = vpack.c.b16 %v1600, %v1598
        %v1611 = vpack.c.b16 %v1603, %v1601
        %v1612 = vpack.c.b16 %v1604, %v1602
        %v1622 = vsel %vm748, %v1558, 0
        %1624 = vmatprep.subr.bf16.mxu0 %v1606
        %1625 = vmatpush1.bf16.msra.mxu0 %v1605
        %1626 = vmatprep.subr.bf16.mxu0 %v1608
        %1627 = vmatpush1.bf16.msra.mxu0 %v1607
        %1628 = vmatprep.subr.bf16.mxu0 %v1610
        %1629 = vmatpush1.bf16.msra.mxu0 %v1609
        %1630 = vmatprep.subr.bf16.mxu0 %v1612
        %1631 = vmatpush1.bf16.msra.mxu0 %v1611
        %1632 = vmatprep.subr.bf16.mxu0 0
        %1633 = vmatpush1.bf16.msra.mxu0 0
        %1634 = vmatprep.subr.bf16.mxu0 0
        %1635 = vmatpush1.bf16.msra.mxu0 0
        %1636 = vmatprep.subr.bf16.mxu0 0
        %1637 = vmatpush1.bf16.msra.mxu0 0
        %1638 = vmatprep.subr.bf16.mxu0 0
        %1639 = vmatpush1.bf16.msra.mxu0 0
        %1640 = vmatprep.subr.bf16.mxu0 0
        %1641 = vmatpush1.bf16.msra.mxu0 0
        %1642 = vmatprep.subr.bf16.mxu0 0
        %1643 = vmatpush1.bf16.msra.mxu0 0
        %1644 = vmatprep.subr.bf16.mxu0 0
        %1645 = vmatpush1.bf16.msra.mxu0 0
        %1646 = vmatprep.subr.bf16.mxu0 0
        %1647 = vmatpush1.bf16.msra.mxu0 0
        %1648 = vmatprep.subr.bf16.mxu0 0
        %1649 = vmatpush1.bf16.msra.mxu0 0
        %1650 = vmatprep.subr.bf16.mxu0 0
        %1651 = vmatpush1.bf16.msra.mxu0 0
        %1652 = vmatprep.subr.bf16.mxu0 0
        %1653 = vmatpush1.bf16.msra.mxu0 0
        %1654 = vmatprep.subr.bf16.mxu0 0
        %1655 = vmatpush1.bf16.msra.mxu0 0
        %1656 = vmatprep.mubr.bf16.mxu0 0
        %1657 = vmatmul.mubr.bf16.gmra.mrb[0].mxu0 %v1622
        %v1658 = vpop.f32.mrb[0].mxu0
        %v1659 = vadd.f32 %v1574, %v1658
        %v1660 = vpop.f32.mrb[0].mxu0
        %v1661 = vadd.f32 %v1578, %v1660
        %v1662 = vpop.f32.mrb[0].mxu0
        %v1663 = vadd.f32 %v1574, %v1662
        %v1664 = vpop.f32.mrb[0].mxu0
        %v1665 = vadd.f32 %v1578, %v1664
        %1666 = vdwg.mxu0
        %v1667 = vpack.c.bf16 %v1663, %v1659
        %1669 = vrot.lane.b32.xlu0 %v1667, 64
        %v1670 = vpop.permute.xlu0 %1669
        %v1672 = vsel %vm904, %v1667, 0
        %v1675 = vsel %vm904, %v1670, 0
        %1677 = vmatprep.subr.bf16.mxu0 0
        %1678 = vmatpush1.bf16.xpose.msra.mxu0 %v1675
        %1679 = vmatprep.subr.bf16.mxu0 0
        %1680 = vmatpush1.bf16.xpose.msra.mxu0 0
        %1681 = vmatprep.subr.bf16.mxu0 0
        %1682 = vmatpush1.bf16.xpose.msra.mxu0 0
        %1683 = vmatprep.subr.bf16.mxu0 0
        %1684 = vmatpush1.bf16.xpose.msra.mxu0 0
        %1685 = vmatprep.subr.bf16.mxu0 0
        %1686 = vmatpush1.bf16.xpose.msra.mxu0 0
        %1687 = vmatprep.subr.bf16.mxu0 0
        %1688 = vmatpush1.bf16.xpose.msra.mxu0 0
        %1689 = vmatprep.subr.bf16.mxu0 0
        %1690 = vmatpush1.bf16.xpose.msra.mxu0 0
        %1691 = vmatprep.subr.bf16.mxu0 0
        %1692 = vmatpush1.bf16.xpose.msra.mxu0 0
        %1693 = vmatprep.subr.bf16.mxu0 0
        %1694 = vmatpush1.bf16.xpose.msra.mxu0 0
        %1695 = vmatprep.subr.bf16.mxu0 0
        %1696 = vmatpush1.bf16.xpose.msra.mxu0 0
        %1697 = vmatprep.subr.bf16.mxu0 0
        %1698 = vmatpush1.bf16.xpose.msra.mxu0 0
        %1699 = vmatprep.subr.bf16.mxu0 0
        %1700 = vmatpush1.bf16.xpose.msra.mxu0 0
        %1701 = vmatprep.subr.bf16.mxu0 0
        %1702 = vmatpush1.bf16.xpose.msra.mxu0 0
        %1703 = vmatprep.subr.bf16.mxu0 0
        %1704 = vmatpush1.bf16.xpose.msra.mxu0 0
        %1705 = vmatprep.subr.bf16.mxu0 0
        %1706 = vmatpush1.bf16.xpose.msra.mxu0 0
        %1707 = vmatprep.subr.bf16.mxu0 0
        %1708 = vmatpush1.bf16.xpose.msra.mxu0 0
        %1709 = vmatprep.mubr.bf16.mxu0 0
        %1710 = vmatmul.mubr.bf16.gmra.mrb[0].mxu0 %v1672
        %v1711 = vpop.f32.mrb[0].mxu0
        %v1712 = vadd.f32 0.0, %v1711
        %v1713 = vpop.f32.mrb[0].mxu0
        %v1714 = vpop.f32.mrb[0].mxu0
        %v1715 = vadd.f32 0.0, %v1714
        %v1716 = vpop.f32.mrb[0].mxu0
        %1717 = vdwg.mxu0
        %v1718 = vmul.f32 %v1712, 0.17677669
        %v1719 = vmul.f32 %v1715, 0.17677669
        %v1720 = vadd.f32 %v1718, %v958
        %v1721 = vadd.f32 %v1719, %v958
        %v1722 = vsel %vm962, %v1720, -inf
        %1723 = vmax.xlane.f32.xlu0 %v1722
        %v1724 = vpop.xlane.xlu0 %1723
        %v1725 = vsel %vm962, %v1721, -inf
        %1726 = vmax.xlane.f32.xlu0 %v1725
        %v1727 = vpop.xlane.xlu0 %1726
        %v1728 = vsub.f32 %v1720, %v1724
        %v1729 = vsub.f32 %v1721, %v1727
        %v1730 = vmul.f32 %v1728, 1.442695
        %v1731 = vpow.pop %v1730
        %v1732 = vmul.f32 %v1729, 1.442695
        %v1733 = vpow.pop %v1732
        %v1734 = vsel %vm962, %v1731, 0.0
        %1735 = vadd.xlane.f32.xlu0 %v1734
        %v1736 = vpop.xlane.xlu0 %1735
        %v1737 = vsel %vm962, %v1733, 0.0
        %1738 = vadd.xlane.f32.xlu0 %v1737
        %v1739 = vpop.xlane.xlu0 %1738
        %v1740 = vrcp.pop %v1736
        %v1741 = vrcp.pop %v1739
        %v1742 = vmul.f32 %v1731, %v1740
        %v1743 = vmul.f32 %v1733, %v1741
        %v1744 = vpack.c.bf16 %v1743, %v1742
        %v1745 = vpack.c.bf16 %v1665, %v1661
        %v1747 = vsel %vm962, %v1744, 0
        %1749 = vmatprep.subr.bf16.mxu0 0
        %1750 = vmatpush1.bf16.msra.mxu0 %v1745
        %1751 = vmatprep.subr.bf16.mxu0 0
        %1752 = vmatpush1.bf16.msra.mxu0 0
        %1753 = vmatprep.subr.bf16.mxu0 0
        %1754 = vmatpush1.bf16.msra.mxu0 0
        %1755 = vmatprep.subr.bf16.mxu0 0
        %1756 = vmatpush1.bf16.msra.mxu0 0
        %1757 = vmatprep.subr.bf16.mxu0 0
        %1758 = vmatpush1.bf16.msra.mxu0 0
        %1759 = vmatprep.subr.bf16.mxu0 0
        %1760 = vmatpush1.bf16.msra.mxu0 0
        %1761 = vmatprep.subr.bf16.mxu0 0
        %1762 = vmatpush1.bf16.msra.mxu0 0
        %1763 = vmatprep.subr.bf16.mxu0 0
        %1764 = vmatpush1.bf16.msra.mxu0 0
        %1765 = vmatprep.subr.bf16.mxu0 0
        %1766 = vmatpush1.bf16.msra.mxu0 0
        %1767 = vmatprep.subr.bf16.mxu0 0
        %1768 = vmatpush1.bf16.msra.mxu0 0
        %1769 = vmatprep.subr.bf16.mxu0 0
        %1770 = vmatpush1.bf16.msra.mxu0 0
        %1771 = vmatprep.subr.bf16.mxu0 0
        %1772 = vmatpush1.bf16.msra.mxu0 0
        %1773 = vmatprep.subr.bf16.mxu0 0
        %1774 = vmatpush1.bf16.msra.mxu0 0
        %1775 = vmatprep.subr.bf16.mxu0 0
        %1776 = vmatpush1.bf16.msra.mxu0 0
        %1777 = vmatprep.subr.bf16.mxu0 0
        %1778 = vmatpush1.bf16.msra.mxu0 0
        %1779 = vmatprep.subr.bf16.mxu0 0
        %1780 = vmatpush1.bf16.msra.mxu0 0
        %1781 = vmatprep.mubr.bf16.mxu0 0
        %1782 = vmatmul.mubr.bf16.gmra.mrb[0].mxu0 %v1747
        %v1783 = vpop.f32.mrb[0].mxu0
        %v1784 = vadd.f32 0.0, %v1783
        %v1785 = vpop.f32.mrb[0].mxu0
        %v1786 = vpop.f32.mrb[0].mxu0
        %v1787 = vadd.f32 0.0, %v1786
        %v1788 = vpop.f32.mrb[0].mxu0
        %1789 = vdwg.mxu0
        %1790 = vrot.lane.b32.xlu0 %v1667, 96
        %v1791 = vpop.permute.xlu0 %1790
        %1792 = vrot.lane.b32.xlu0 %v1667, 32
        %v1793 = vpop.permute.xlu0 %1792
        %v1795 = vsel %vm904, %v1791, 0
        %v1798 = vsel %vm904, %v1793, 0
        %1800 = vmatprep.subr.bf16.mxu0 0
        %1801 = vmatpush1.bf16.xpose.msra.mxu0 %v1798
        %1802 = vmatprep.subr.bf16.mxu0 0
        %1803 = vmatpush1.bf16.xpose.msra.mxu0 0
        %1804 = vmatprep.subr.bf16.mxu0 0
        %1805 = vmatpush1.bf16.xpose.msra.mxu0 0
        %1806 = vmatprep.subr.bf16.mxu0 0
        %1807 = vmatpush1.bf16.xpose.msra.mxu0 0
        %1808 = vmatprep.subr.bf16.mxu0 0
        %1809 = vmatpush1.bf16.xpose.msra.mxu0 0
        %1810 = vmatprep.subr.bf16.mxu0 0
        %1811 = vmatpush1.bf16.xpose.msra.mxu0 0
        %1812 = vmatprep.subr.bf16.mxu0 0
        %1813 = vmatpush1.bf16.xpose.msra.mxu0 0
        %1814 = vmatprep.subr.bf16.mxu0 0
        %1815 = vmatpush1.bf16.xpose.msra.mxu0 0
        %1816 = vmatprep.subr.bf16.mxu0 0
        %1817 = vmatpush1.bf16.xpose.msra.mxu0 0
        %1818 = vmatprep.subr.bf16.mxu0 0
        %1819 = vmatpush1.bf16.xpose.msra.mxu0 0
        %1820 = vmatprep.subr.bf16.mxu0 0
        %1821 = vmatpush1.bf16.xpose.msra.mxu0 0
        %1822 = vmatprep.subr.bf16.mxu0 0
        %1823 = vmatpush1.bf16.xpose.msra.mxu0 0
        %1824 = vmatprep.subr.bf16.mxu0 0
        %1825 = vmatpush1.bf16.xpose.msra.mxu0 0
        %1826 = vmatprep.subr.bf16.mxu0 0
        %1827 = vmatpush1.bf16.xpose.msra.mxu0 0
        %1828 = vmatprep.subr.bf16.mxu0 0
        %1829 = vmatpush1.bf16.xpose.msra.mxu0 0
        %1830 = vmatprep.subr.bf16.mxu0 0
        %1831 = vmatpush1.bf16.xpose.msra.mxu0 0
        %1832 = vmatprep.mubr.bf16.mxu0 0
        %1833 = vmatmul.mubr.bf16.gmra.mrb[0].mxu0 %v1795
        %v1834 = vpop.f32.mrb[0].mxu0
        %v1835 = vadd.f32 0.0, %v1834
        %v1836 = vpop.f32.mrb[0].mxu0
        %v1837 = vpop.f32.mrb[0].mxu0
        %v1838 = vadd.f32 0.0, %v1837
        %v1839 = vpop.f32.mrb[0].mxu0
        %1840 = vdwg.mxu0
        %v1841 = vmul.f32 %v1835, 0.17677669
        %v1842 = vmul.f32 %v1838, 0.17677669
        %v1843 = vadd.f32 %v1841, %v958
        %v1844 = vadd.f32 %v1842, %v958
        %v1845 = vsel %vm962, %v1843, -inf
        %1846 = vmax.xlane.f32.xlu0 %v1845
        %v1847 = vpop.xlane.xlu0 %1846
        %v1848 = vsel %vm962, %v1844, -inf
        %1849 = vmax.xlane.f32.xlu0 %v1848
        %v1850 = vpop.xlane.xlu0 %1849
        %v1851 = vsub.f32 %v1843, %v1847
        %v1852 = vsub.f32 %v1844, %v1850
        %v1853 = vmul.f32 %v1851, 1.442695
        %v1854 = vpow.pop %v1853
        %v1855 = vmul.f32 %v1852, 1.442695
        %v1856 = vpow.pop %v1855
        %v1857 = vsel %vm962, %v1854, 0.0
        %1858 = vadd.xlane.f32.xlu0 %v1857
        %v1859 = vpop.xlane.xlu0 %1858
        %v1860 = vsel %vm962, %v1856, 0.0
        %1861 = vadd.xlane.f32.xlu0 %v1860
        %v1862 = vpop.xlane.xlu0 %1861
        %v1863 = vrcp.pop %v1859
        %v1864 = vrcp.pop %v1862
        %v1865 = vmul.f32 %v1854, %v1863
        %v1866 = vmul.f32 %v1856, %v1864
        %v1867 = vpack.c.bf16 %v1866, %v1865
        %1869 = vrot.lane.b32.xlu0 %v1745, 96
        %v1870 = vpop.permute.xlu0 %1869
        %v1873 = vsel %vm962, %v1867, 0
        %1875 = vmatprep.subr.bf16.mxu0 0
        %1876 = vmatpush1.bf16.msra.mxu0 %v1870
        %1877 = vmatprep.subr.bf16.mxu0 0
        %1878 = vmatpush1.bf16.msra.mxu0 0
        %1879 = vmatprep.subr.bf16.mxu0 0
        %1880 = vmatpush1.bf16.msra.mxu0 0
        %1881 = vmatprep.subr.bf16.mxu0 0
        %1882 = vmatpush1.bf16.msra.mxu0 0
        %1883 = vmatprep.subr.bf16.mxu0 0
        %1884 = vmatpush1.bf16.msra.mxu0 0
        %1885 = vmatprep.subr.bf16.mxu0 0
        %1886 = vmatpush1.bf16.msra.mxu0 0
        %1887 = vmatprep.subr.bf16.mxu0 0
        %1888 = vmatpush1.bf16.msra.mxu0 0
        %1889 = vmatprep.subr.bf16.mxu0 0
        %1890 = vmatpush1.bf16.msra.mxu0 0
        %1891 = vmatprep.subr.bf16.mxu0 0
        %1892 = vmatpush1.bf16.msra.mxu0 0
        %1893 = vmatprep.subr.bf16.mxu0 0
        %1894 = vmatpush1.bf16.msra.mxu0 0
        %1895 = vmatprep.subr.bf16.mxu0 0
        %1896 = vmatpush1.bf16.msra.mxu0 0
        %1897 = vmatprep.subr.bf16.mxu0 0
        %1898 = vmatpush1.bf16.msra.mxu0 0
        %1899 = vmatprep.subr.bf16.mxu0 0
        %1900 = vmatpush1.bf16.msra.mxu0 0
        %1901 = vmatprep.subr.bf16.mxu0 0
        %1902 = vmatpush1.bf16.msra.mxu0 0
        %1903 = vmatprep.subr.bf16.mxu0 0
        %1904 = vmatpush1.bf16.msra.mxu0 0
        %1905 = vmatprep.subr.bf16.mxu0 0
        %1906 = vmatpush1.bf16.msra.mxu0 0
        %1907 = vmatprep.mubr.bf16.mxu0 0
        %1908 = vmatmul.mubr.bf16.gmra.mrb[0].mxu0 %v1873
        %v1909 = vpop.f32.mrb[0].mxu0
        %v1910 = vadd.f32 0.0, %v1909
        %v1911 = vpop.f32.mrb[0].mxu0
        %v1912 = vpop.f32.mrb[0].mxu0
        %v1913 = vadd.f32 0.0, %v1912
        %v1914 = vpop.f32.mrb[0].mxu0
        %1915 = vdwg.mxu0
        %1918 = vrot.lane.b32.xlu0 %v1910, 32
        %v1919 = vpop.permute.xlu0 %1918
        %1920 = vrot.lane.b32.xlu0 %v1913, 32
        %v1921 = vpop.permute.xlu0 %1920
        %v1924 = vsel %vm904, %v1784, %v1919
        %v1925 = vsel %vm904, %v1787, %v1921
        %v1926 = vpack.c.bf16 %v1925, %v1924
        %s1927 = scalar_lea.vmem %s6, 32
        %v1928 = vld [vmem:[%s1927] sm:$0xf]
        %v1929 = vld [vmem:[%s1927 + $0x4] sm:$0xf]
        %v1930 = vld [vmem:[%s1927 + $0x8] sm:$0xf]
        %v1931 = vld [vmem:[%s1927 + $0xc] sm:$0xf]
        %v1932 = vld [vmem:[%s1927 + $0x10] sm:$0xf]
        %v1933 = vld [vmem:[%s1927 + $0x14] sm:$0xf]
        %v1934 = vld [vmem:[%s1927 + $0x18] sm:$0xf]
        %v1935 = vld [vmem:[%s1927 + $0x1c] sm:$0xf]
        %s1936 = scalar_lea.vmem [#allocation10], 1
        %v1937 = vld [vmem:[%s1936] sm:$0x1]
        %v1939 = vlaneseq
        %v1940 = vshrl.u32 %v1939, 7
        %v1941 = vsub.s32 0, %v1940
        %v1942 = vrot.slane %v1937, %v1941
        %v1952 = vunpack.c.l.b16 %v1928
        %v1953 = vunpack.c.l.b16 %v1929
        %v1954 = vunpack.c.l.b16 %v1930
        %v1955 = vunpack.c.l.b16 %v1931
        %v1956 = vunpack.c.l.b16 %v1932
        %v1957 = vunpack.c.l.b16 %v1933
        %v1958 = vunpack.c.l.b16 %v1934
        %v1959 = vunpack.c.l.b16 %v1935
        %v1960 = vpack.c.b16 %v1953, %v1952
        %v1961 = vpack.c.b16 %v1955, %v1954
        %v1962 = vpack.c.b16 %v1957, %v1956
        %v1963 = vpack.c.b16 %v1959, %v1958
        %v1969 = vsel %vm748, %v1926, 0
        %1971 = vmatprep.subr.bf16.mxu0 0
        %1972 = vmatpush1.bf16.msra.mxu0 %v1960
        %1973 = vmatprep.subr.bf16.mxu0 0
        %1974 = vmatpush1.bf16.msra.mxu0 %v1961
        %1975 = vmatprep.subr.bf16.mxu0 0
        %1976 = vmatpush1.bf16.msra.mxu0 %v1962
        %1977 = vmatprep.subr.bf16.mxu0 0
        %1978 = vmatpush1.bf16.msra.mxu0 %v1963
        %1979 = vmatprep.subr.bf16.mxu0 0
        %1980 = vmatpush1.bf16.msra.mxu0 0
        %1981 = vmatprep.subr.bf16.mxu0 0
        %1982 = vmatpush1.bf16.msra.mxu0 0
        %1983 = vmatprep.subr.bf16.mxu0 0
        %1984 = vmatpush1.bf16.msra.mxu0 0
        %1985 = vmatprep.subr.bf16.mxu0 0
        %1986 = vmatpush1.bf16.msra.mxu0 0
        %1987 = vmatprep.subr.bf16.mxu0 0
        %1988 = vmatpush1.bf16.msra.mxu0 0
        %1989 = vmatprep.subr.bf16.mxu0 0
        %1990 = vmatpush1.bf16.msra.mxu0 0
        %1991 = vmatprep.subr.bf16.mxu0 0
        %1992 = vmatpush1.bf16.msra.mxu0 0
        %1993 = vmatprep.subr.bf16.mxu0 0
        %1994 = vmatpush1.bf16.msra.mxu0 0
        %1995 = vmatprep.subr.bf16.mxu0 0
        %1996 = vmatpush1.bf16.msra.mxu0 0
        %1997 = vmatprep.subr.bf16.mxu0 0
        %1998 = vmatpush1.bf16.msra.mxu0 0
        %1999 = vmatprep.subr.bf16.mxu0 0
        %2000 = vmatpush1.bf16.msra.mxu0 0
        %2001 = vmatprep.subr.bf16.mxu0 0
        %2002 = vmatpush1.bf16.msra.mxu0 0
        %2003 = vmatprep.mubr.bf16.mxu0 0
        %2004 = vmatmul.mubr.bf16.gmra.mrb[0].mxu0 %v1969
        %v2005 = vpop.f32.mrb[0].mxu0
        %v2006 = vadd.f32 %v1942, %v2005
        %v2007 = vpop.f32.mrb[0].mxu0
        %v2008 = vpop.f32.mrb[0].mxu0
        %v2009 = vadd.f32 %v1942, %v2008
        %v2010 = vpop.f32.mrb[0].mxu0
        %2011 = vdwg.mxu0
        %v2012 = vadd.f32 %v2006, %v1556
        %v2013 = vadd.f32 %v2009, %v1557
        %s2014 = scalar_lea.vmem [#allocation11], 1
        %v2015 = vld [vmem:[%s2014] sm:$0x1]
        %s2016 = scalar_lea.vmem [#allocation13], 1
        %v2017 = vld [vmem:[%s2016] sm:$0x1]
        %v2018 = vsel %vm748, %v2012, 0.0
        %2019 = vadd.xlane.f32.xlu0 %v2018
        %v2020 = vpop.xlane.xlu0 %2019
        %v2021 = vsel %vm748, %v2013, 0.0
        %2022 = vadd.xlane.f32.xlu0 %v2021
        %v2023 = vpop.xlane.xlu0 %2022
        %v2024 = vmul.f32 %v2020, %v755
        %v2025 = vmul.f32 %v2023, %v755
        %v2026 = vsub.f32 %v2012, %v2024
        %v2027 = vsub.f32 %v2013, %v2025
        %v2028 = vmul.f32 %v2026, %v2026
        %v2029 = vmul.f32 %v2027, %v2027
        %v2030 = vsel %vm748, %v2028, 0.0
        %2031 = vadd.xlane.f32.xlu0 %v2030
        %v2032 = vpop.xlane.xlu0 %2031
        %v2033 = vsel %vm748, %v2029, 0.0
        %2034 = vadd.xlane.f32.xlu0 %v2033
        %v2035 = vpop.xlane.xlu0 %2034
        %v2036 = vmul.f32 %v2032, %v755
        %v2037 = vmul.f32 %v2035, %v755
        %v2038 = vadd.f32 %v2036, 1e-05
        %v2039 = vadd.f32 %v2037, 1e-05
        %v2040 = vrsqrt.pop %v2038
        %v2041 = vrsqrt.pop %v2039
        %v2042 = vmul.f32 %v2026, %v2040
        %v2043 = vmul.f32 %v2027, %v2041
        %v2045 = vlaneseq
        %v2046 = vshrl.u32 %v2045, 7
        %v2047 = vsub.s32 0, %v2046
        %v2048 = vrot.slane %v2015, %v2047
        %v2050 = vmul.f32 %v2042, %v2048
        %v2051 = vmul.f32 %v2043, %v2048
        %v2053 = vlaneseq
        %v2054 = vshrl.u32 %v2053, 7
        %v2055 = vsub.s32 0, %v2054
        %v2056 = vrot.slane %v2017, %v2055
        %v2058 = vadd.f32 %v2050, %v2056
        %v2059 = vadd.f32 %v2051, %v2056
        %v2060 = vpack.c.bf16 %v2059, %v2058
        %s2061 = scalar_lea.vmem [#allocation14], 32
        %v2062 = vld [vmem:[%s2061] sm:$0xf]
        %v2063 = vld [vmem:[%s2061 + $0x4] sm:$0xf]
        %v2064 = vld [vmem:[%s2061 + $0x8] sm:$0xf]
        %v2065 = vld [vmem:[%s2061 + $0xc] sm:$0xf]
        %v2066 = vld [vmem:[%s2061 + $0x10] sm:$0xf]
        %v2067 = vld [vmem:[%s2061 + $0x14] sm:$0xf]
        %v2068 = vld [vmem:[%s2061 + $0x18] sm:$0xf]
        %v2069 = vld [vmem:[%s2061 + $0x1c] sm:$0xf]
        %s2070 = scalar_lea.vmem %s11, 1
        %v2071 = vld [vmem:[%s2070] sm:$0x1]
        %v2073 = vlaneseq
        %v2074 = vshrl.u32 %v2073, 7
        %v2075 = vsub.s32 0, %v2074
        %v2076 = vrot.slane %v2071, %v2075
        %v2086 = vunpack.c.l.b16 %v2062
        %v2087 = vunpack.c.l.b16 %v2063
        %v2088 = vunpack.c.l.b16 %v2064
        %v2089 = vunpack.c.l.b16 %v2065
        %v2090 = vunpack.c.l.b16 %v2066
        %v2091 = vunpack.c.l.b16 %v2067
        %v2092 = vunpack.c.l.b16 %v2068
        %v2093 = vunpack.c.l.b16 %v2069
        %v2094 = vpack.c.b16 %v2087, %v2086
        %v2095 = vpack.c.b16 %v2089, %v2088
        %v2096 = vpack.c.b16 %v2091, %v2090
        %v2097 = vpack.c.b16 %v2093, %v2092
        %v2103 = vsel %vm748, %v2060, 0
        %2105 = vmatprep.subr.bf16.mxu0 0
        %2106 = vmatpush1.bf16.msra.mxu0 %v2094
        %2107 = vmatprep.subr.bf16.mxu0 0
        %2108 = vmatpush1.bf16.msra.mxu0 %v2095
        %2109 = vmatprep.subr.bf16.mxu0 0
        %2110 = vmatpush1.bf16.msra.mxu0 %v2096
        %2111 = vmatprep.subr.bf16.mxu0 0
        %2112 = vmatpush1.bf16.msra.mxu0 %v2097
        %2113 = vmatprep.subr.bf16.mxu0 0
        %2114 = vmatpush1.bf16.msra.mxu0 0
        %2115 = vmatprep.subr.bf16.mxu0 0
        %2116 = vmatpush1.bf16.msra.mxu0 0
        %2117 = vmatprep.subr.bf16.mxu0 0
        %2118 = vmatpush1.bf16.msra.mxu0 0
        %2119 = vmatprep.subr.bf16.mxu0 0
        %2120 = vmatpush1.bf16.msra.mxu0 0
        %2121 = vmatprep.subr.bf16.mxu0 0
        %2122 = vmatpush1.bf16.msra.mxu0 0
        %2123 = vmatprep.subr.bf16.mxu0 0
        %2124 = vmatpush1.bf16.msra.mxu0 0
        %2125 = vmatprep.subr.bf16.mxu0 0
        %2126 = vmatpush1.bf16.msra.mxu0 0
        %2127 = vmatprep.subr.bf16.mxu0 0
        %2128 = vmatpush1.bf16.msra.mxu0 0
        %2129 = vmatprep.subr.bf16.mxu0 0
        %2130 = vmatpush1.bf16.msra.mxu0 0
        %2131 = vmatprep.subr.bf16.mxu0 0
        %2132 = vmatpush1.bf16.msra.mxu0 0
        %2133 = vmatprep.subr.bf16.mxu0 0
        %2134 = vmatpush1.bf16.msra.mxu0 0
        %2135 = vmatprep.subr.bf16.mxu0 0
        %2136 = vmatpush1.bf16.msra.mxu0 0
        %2137 = vmatprep.mubr.bf16.mxu0 0
        %2138 = vmatmul.mubr.bf16.gmra.mrb[0].mxu0 %v2103
        %v2139 = vpop.f32.mrb[0].mxu0
        %v2140 = vadd.f32 %v2076, %v2139
        %v2141 = vpop.f32.mrb[0].mxu0
        %v2142 = vpop.f32.mrb[0].mxu0
        %v2143 = vadd.f32 %v2076, %v2142
        %v2144 = vpop.f32.mrb[0].mxu0
        %2145 = vdwg.mxu0
        %v2146 = vmul.f32 %v2140, 0.5
        %v2147 = vmul.f32 %v2143, 0.5
        %v2148 = vmul.f32 %v2140, 0.044715
        %v2149 = vmul.f32 %v2143, 0.044715
        %v2150 = vmul.f32 %v2148, %v2140
        %v2151 = vmul.f32 %v2149, %v2143
        %v2152 = vmul.f32 %v2150, %v2140
        %v2153 = vmul.f32 %v2151, %v2143
        %v2154 = vadd.f32 %v2140, %v2152
        %v2155 = vadd.f32 %v2143, %v2153
        %v2156 = vmul.f32 %v2154, 0.7978846
        %v2157 = vmul.f32 %v2155, 0.7978846
        %v2158 = vtanh.pop %v2156
        %v2159 = vtanh.pop %v2157
        %v2160 = vadd.f32 %v2158, 1.0
        %v2161 = vadd.f32 %v2159, 1.0
        %v2162 = vmul.f32 %v2146, %v2160
        %v2163 = vmul.f32 %v2147, %v2161
        %v2164 = vpack.c.bf16 %v2163, %v2162
        %s2165 = scalar_lea.vmem %s12, 64
        %v2166 = vld [vmem:[%s2165] sm:$0xf]
        %v2167 = vld [vmem:[%s2165 + $0x4] sm:$0xf]
        %v2168 = vld [vmem:[%s2165 + $0x8] sm:$0xf]
        %v2169 = vld [vmem:[%s2165 + $0xc] sm:$0xf]
        %v2170 = vld [vmem:[%s2165 + $0x10] sm:$0xf]
        %v2171 = vld [vmem:[%s2165 + $0x14] sm:$0xf]
        %v2172 = vld [vmem:[%s2165 + $0x18] sm:$0xf]
        %v2173 = vld [vmem:[%s2165 + $0x1c] sm:$0xf]
        %v2174 = vld [vmem:[%s2165 + $0x20] sm:$0xf]
        %v2175 = vld [vmem:[%s2165 + $0x24] sm:$0xf]
        %v2176 = vld [vmem:[%s2165 + $0x28] sm:$0xf]
        %v2177 = vld [vmem:[%s2165 + $0x2c] sm:$0xf]
        %v2178 = vld [vmem:[%s2165 + $0x30] sm:$0xf]
        %v2179 = vld [vmem:[%s2165 + $0x34] sm:$0xf]
        %v2180 = vld [vmem:[%s2165 + $0x38] sm:$0xf]
        %v2181 = vld [vmem:[%s2165 + $0x3c] sm:$0xf]
        %s2182 = scalar_lea.vmem %s13, 1
        %v2183 = vld [vmem:[%s2182] sm:$0x1]
        %v2185 = vlaneseq
        %v2186 = vshrl.u32 %v2185, 7
        %v2187 = vsub.s32 0, %v2186
        %v2188 = vrot.slane %v2183, %v2187
        %v2206 = vunpack.c.l.b16 %v2166
        %v2207 = vunpack.c.l.b16 %v2167
        %v2208 = vunpack.c.l.b16 %v2168
        %v2209 = vunpack.c.l.b16 %v2169
        %v2210 = vunpack.c.l.b16 %v2170
        %v2211 = vunpack.c.l.b16 %v2171
        %v2212 = vunpack.c.l.b16 %v2172
        %v2213 = vunpack.c.l.b16 %v2173
        %v2214 = vunpack.c.l.b16 %v2174
        %v2215 = vunpack.c.l.b16 %v2175
        %v2216 = vunpack.c.l.b16 %v2176
        %v2217 = vunpack.c.l.b16 %v2177
        %v2218 = vunpack.c.l.b16 %v2178
        %v2219 = vunpack.c.l.b16 %v2179
        %v2220 = vunpack.c.l.b16 %v2180
        %v2221 = vunpack.c.l.b16 %v2181
        %v2222 = vpack.c.b16 %v2207, %v2206
        %v2223 = vpack.c.b16 %v2209, %v2208
        %v2224 = vpack.c.b16 %v2211, %v2210
        %v2225 = vpack.c.b16 %v2213, %v2212
        %v2226 = vpack.c.b16 %v2215, %v2214
        %v2227 = vpack.c.b16 %v2217, %v2216
        %v2228 = vpack.c.b16 %v2219, %v2218
        %v2229 = vpack.c.b16 %v2221, %v2220
        %2238 = vmatprep.subr.bf16.mxu0 0
        %2239 = vmatpush1.bf16.msra.mxu0 %v2222
        %2240 = vmatprep.subr.bf16.mxu0 0
        %2241 = vmatpush1.bf16.msra.mxu0 %v2223
        %2242 = vmatprep.subr.bf16.mxu0 0
        %2243 = vmatpush1.bf16.msra.mxu0 %v2224
        %2244 = vmatprep.subr.bf16.mxu0 0
        %2245 = vmatpush1.bf16.msra.mxu0 %v2225
        %2246 = vmatprep.subr.bf16.mxu0 0
        %2247 = vmatpush1.bf16.msra.mxu0 %v2226
        %2248 = vmatprep.subr.bf16.mxu0 0
        %2249 = vmatpush1.bf16.msra.mxu0 %v2227
        %2250 = vmatprep.subr.bf16.mxu0 0
        %2251 = vmatpush1.bf16.msra.mxu0 %v2228
        %2252 = vmatprep.subr.bf16.mxu0 0
        %2253 = vmatpush1.bf16.msra.mxu0 %v2229
        %2254 = vmatprep.subr.bf16.mxu0 0
        %2255 = vmatpush1.bf16.msra.mxu0 0
        %2256 = vmatprep.subr.bf16.mxu0 0
        %2257 = vmatpush1.bf16.msra.mxu0 0
        %2258 = vmatprep.subr.bf16.mxu0 0
        %2259 = vmatpush1.bf16.msra.mxu0 0
        %2260 = vmatprep.subr.bf16.mxu0 0
        %2261 = vmatpush1.bf16.msra.mxu0 0
        %2262 = vmatprep.subr.bf16.mxu0 0
        %2263 = vmatpush1.bf16.msra.mxu0 0
        %2264 = vmatprep.subr.bf16.mxu0 0
        %2265 = vmatpush1.bf16.msra.mxu0 0
        %2266 = vmatprep.subr.bf16.mxu0 0
        %2267 = vmatpush1.bf16.msra.mxu0 0
        %2268 = vmatprep.subr.bf16.mxu0 0
        %2269 = vmatpush1.bf16.msra.mxu0 0
        %2270 = vmatprep.mubr.bf16.mxu0 0
        %2271 = vmatmul.mubr.bf16.gmra.mrb[0].mxu0 %v2164
        %v2272 = vpop.f32.mrb[0].mxu0
        %v2273 = vadd.f32 %v2188, %v2272
        %v2274 = vpop.f32.mrb[0].mxu0
        %v2275 = vpop.f32.mrb[0].mxu0
        %v2276 = vadd.f32 %v2188, %v2275
        %v2277 = vpop.f32.mrb[0].mxu0
        %2278 = vdwg.mxu0
        %v2279 = vadd.f32 %v2273, %v2058
        %v2280 = vadd.f32 %v2276, %v2059
        %s2281 = scalar_lea.vmem %s14, 1
        %v2282 = vld [vmem:[%s2281] sm:$0x1]
        %s2283 = scalar_lea.vmem %s15, 1
        %v2284 = vld [vmem:[%s2283] sm:$0x1]
        %v2285 = vsel %vm748, %v2279, 0.0
        %2286 = vadd.xlane.f32.xlu0 %v2285
        %v2287 = vpop.xlane.xlu0 %2286
        %v2288 = vsel %vm748, %v2280, 0.0
        %2289 = vadd.xlane.f32.xlu0 %v2288
        %v2290 = vpop.xlane.xlu0 %2289
        %v2291 = vmul.f32 %v2287, %v755
        %v2292 = vmul.f32 %v2290, %v755
        %v2293 = vsub.f32 %v2279, %v2291
        %v2294 = vsub.f32 %v2280, %v2292
        %v2295 = vmul.f32 %v2293, %v2293
        %v2296 = vmul.f32 %v2294, %v2294
        %v2297 = vsel %vm748, %v2295, 0.0
        %2298 = vadd.xlane.f32.xlu0 %v2297
        %v2299 = vpop.xlane.xlu0 %2298
        %v2300 = vsel %vm748, %v2296, 0.0
        %2301 = vadd.xlane.f32.xlu0 %v2300
        %v2302 = vpop.xlane.xlu0 %2301
        %v2303 = vmul.f32 %v2299, %v755
        %v2304 = vmul.f32 %v2302, %v755
        %v2305 = vadd.f32 %v2303, 1e-05
        %v2306 = vadd.f32 %v2304, 1e-05
        %v2307 = vrsqrt.pop %v2305
        %v2308 = vrsqrt.pop %v2306
        %v2309 = vmul.f32 %v2293, %v2307
        %v2310 = vmul.f32 %v2294, %v2308
        %v2312 = vlaneseq
        %v2313 = vshrl.u32 %v2312, 7
        %v2314 = vsub.s32 0, %v2313
        %v2315 = vrot.slane %v2282, %v2314
        %v2317 = vmul.f32 %v2309, %v2315
        %v2318 = vmul.f32 %v2310, %v2315
        %v2320 = vlaneseq
        %v2321 = vshrl.u32 %v2320, 7
        %v2322 = vsub.s32 0, %v2321
        %v2323 = vrot.slane %v2284, %v2322
        %v2325 = vadd.f32 %v2317, %v2323
        %v2326 = vadd.f32 %v2318, %v2323
        %2327 = vst.msk [vmem:[%s733] sm:$0xff] %vm748, %v2325
        %2328 = vst.msk [vmem:[%s733 + $0x8] sm:$0xff] %vm748, %v2326
        %v2329 = vpack.c.bf16 %v2325, %v2325
        %v2330 = vld [vmem:[%s16] sm:$0xf]
        %v2331 = vld [vmem:[%s16 + $0x4] sm:$0xf]
        %v2332 = vld [vmem:[%s16 + $0x8] sm:$0xf]
        %v2333 = vld [vmem:[%s16 + $0xc] sm:$0xf]
        %v2334 = vld [vmem:[%s16 + $0x10] sm:$0xf]
        %v2335 = vld [vmem:[%s16 + $0x14] sm:$0xf]
        %v2336 = vld [vmem:[%s16 + $0x18] sm:$0xf]
        %v2337 = vld [vmem:[%s16 + $0x1c] sm:$0xf]
        %v2338 = vld [vmem:[%s17] sm:$0x1]
        %v2347 = vunpack.c.l.b16 %v2330
        %v2348 = vunpack.c.l.b16 %v2331
        %v2349 = vunpack.c.l.b16 %v2332
        %v2350 = vunpack.c.l.b16 %v2333
        %v2351 = vunpack.c.l.b16 %v2334
        %v2352 = vunpack.c.l.b16 %v2335
        %v2353 = vunpack.c.l.b16 %v2336
        %v2354 = vunpack.c.l.b16 %v2337
        %v2355 = vpack.c.b16 %v2348, %v2347
        %v2356 = vpack.c.b16 %v2350, %v2349
        %v2357 = vpack.c.b16 %v2352, %v2351
        %v2358 = vpack.c.b16 %v2354, %v2353
        %v2364 = vsel %vm748, %v2329, 0
        %2366 = vmatprep.subr.bf16.mxu0 0
        %2367 = vmatpush1.bf16.msra.mxu0 %v2355
        %2368 = vmatprep.subr.bf16.mxu0 0
        %2369 = vmatpush1.bf16.msra.mxu0 %v2356
        %2370 = vmatprep.subr.bf16.mxu0 0
        %2371 = vmatpush1.bf16.msra.mxu0 %v2357
        %2372 = vmatprep.subr.bf16.mxu0 0
        %2373 = vmatpush1.bf16.msra.mxu0 %v2358
        %2374 = vmatprep.subr.bf16.mxu0 0
        %2375 = vmatpush1.bf16.msra.mxu0 0
        %2376 = vmatprep.subr.bf16.mxu0 0
        %2377 = vmatpush1.bf16.msra.mxu0 0
        %2378 = vmatprep.subr.bf16.mxu0 0
        %2379 = vmatpush1.bf16.msra.mxu0 0
        %2380 = vmatprep.subr.bf16.mxu0 0
        %2381 = vmatpush1.bf16.msra.mxu0 0
        %2382 = vmatprep.subr.bf16.mxu0 0
        %2383 = vmatpush1.bf16.msra.mxu0 0
        %2384 = vmatprep.subr.bf16.mxu0 0
        %2385 = vmatpush1.bf16.msra.mxu0 0
        %2386 = vmatprep.subr.bf16.mxu0 0
        %2387 = vmatpush1.bf16.msra.mxu0 0
        %2388 = vmatprep.subr.bf16.mxu0 0
        %2389 = vmatpush1.bf16.msra.mxu0 0
        %2390 = vmatprep.subr.bf16.mxu0 0
        %2391 = vmatpush1.bf16.msra.mxu0 0
        %2392 = vmatprep.subr.bf16.mxu0 0
        %2393 = vmatpush1.bf16.msra.mxu0 0
        %2394 = vmatprep.subr.bf16.mxu0 0
        %2395 = vmatpush1.bf16.msra.mxu0 0
        %2396 = vmatprep.subr.bf16.mxu0 0
        %2397 = vmatpush1.bf16.msra.mxu0 0
        %2398 = vmatprep.mubr.bf16.mxu0 0
        %2399 = vmatmul.mubr.bf16.gmra.mrb[0].mxu0 %v2364
        %v2400 = vpop.f32.mrb[0].mxu0
        %v2401 = vadd.f32 %v2338, %v2400
        %v2402 = vpop.f32.mrb[0].mxu0
        %v2403 = vpop.f32.mrb[0].mxu0
        %v2404 = vpop.f32.mrb[0].mxu0
        %2405 = vdwg.mxu0
        %v2406 = vtanh.pop %v2401
        %vm2407 = vcmask 516096
        %2408 = vst.msk [vmem:[%s739] sm:$0x1] %vm2407, %v2406
        %s2409 = sand.u32 %s440, 1
        %s2410 = scalar_lea.sflag [#allocation4], %s2409
        %s2411 = sand.u32 %s440, 1
        %s2412 = smul.addr %s2411, 16
        %s2413 = scalar_lea.vmem [#allocation16], %s2412
        %s2414 = sand.u32 %s466, 1
        %s2415 = scalar_lea.sflag [#allocation18], %s2414
        %s2416 = sand.u32 %s466, 1
        %s2417 = scalar_lea.vmem [#allocation17], %s2416
        // Predicated region
        $region125: #{tpu_custom_call.1} parent=91 // pred_check
          %p2418 = pneg %p450
        $region126: #{tpu_custom_call.1} parent=91 // pred_check_branch
          %2420 = sbr.rel (%p2418) target = $region128
        $region127: #{tpu_custom_call.1} parent=91 // pred_region
          %s2422 = ssub.s32 256, 256
          %2423 = vsyncadd %s2410, %s2422
          %s2424 = smul.addr %s44, 2
          %s2425 = smul.addr %s2424, 128
          %s2426 = scalar_lea.hbm %s18, %s2425
          %s2427 = sshll.u32 %s2413, 4
          %s2428 = int_to_ptr.vmem [resolvable:$true] %s2427
          %2433 = dma.vmem_to_hbm [thread:$0]  %s2428, 256, %s2426, %s2410, 128, 128, 8
        $region128: #{tpu_custom_call.1} parent=91 // pred_fallthru
          _
        // Predicated region
        $region129: #{tpu_custom_call.1} parent=91 // pred_check
          %p2434 = pneg %p476
        $region130: #{tpu_custom_call.1} parent=91 // pred_check_branch
          %2436 = sbr.rel (%p2434) target = $region132
        $region131: #{tpu_custom_call.1} parent=91 // pred_region
          %s2438 = ssub.s32 16, 16
          %2439 = vsyncadd %s2415, %s2438
          %s2440 = smul.addr %s44, 16
          %s2441 = scalar_lea.hbm %s19, %s2440
          %s2443 = sshll.u32 %s2417, 4
          %s2444 = int_to_ptr.vmem [resolvable:$true] %s2443
          %2446 = dma.vmem_to_hbm [thread:$0]  %s2444, 16, %s2441, %s2415
        $region132: #{tpu_custom_call.1} parent=91 // pred_fallthru
          _
      $region92: #{tpu_custom_call.1} parent=5 // pred_fallthru
        _
      %p2447 = scmp.le.s32.totalorder 2, %s39
      // Predicated region
      $region133: #{tpu_custom_call.1} parent=5 // pred_check
        %p2448 = pneg %p2447
      $region134: #{tpu_custom_call.1} parent=5 // pred_check_branch
        %2450 = sbr.rel (%p2448) target = $region136
      $region135: #{tpu_custom_call.1} parent=5 // pred_region
        %s2451 = ssub.s32 %s39, 2
        // Predicated region
        $region137: #{tpu_custom_call.1} parent=135 // pred_check
          %p2452 = pneg %p456
        $region138: #{tpu_custom_call.1} parent=135 // pred_check_branch
          %2454 = sbr.rel (%p2452) target = $region140
        $region139: #{tpu_custom_call.1} parent=135 // pred_region
          %s2455 = sand.u32 %s441, 1
          %s2456 = scalar_lea.sflag [#allocation4], %s2455
          %s2457 = sand.u32 %s441, 1
          %s2458 = smul.addr %s2457, 16
          %s2459 = scalar_lea.vmem [#allocation16], %s2458
          %2460 = dma.done %s2456, 256
        $region140: #{tpu_custom_call.1} parent=135 // pred_fallthru
          _
        // Predicated region
        $region141: #{tpu_custom_call.1} parent=135 // pred_check
          %p2461 = pneg %p482
        $region142: #{tpu_custom_call.1} parent=135 // pred_check_branch
          %2463 = sbr.rel (%p2461) target = $region144
        $region143: #{tpu_custom_call.1} parent=135 // pred_region
          %s2464 = sand.u32 %s467, 1
          %s2465 = scalar_lea.sflag [#allocation18], %s2464
          %s2466 = sand.u32 %s467, 1
          %s2467 = scalar_lea.vmem [#allocation17], %s2466
          %2468 = dma.done %s2465, 16
        $region144: #{tpu_custom_call.1} parent=135 // pred_fallthru
          _
      $region136: #{tpu_custom_call.1} parent=5 // pred_fallthru
        _
    $region6: #{tpu_custom_call.1} parent=1 // loop_footer
      %s43 = sadd.s32 1, %s39
    $region7: #{tpu_custom_call.1} parent=1 // loop_footer_branch
      %38 = sbr.rel target = $region3
    $region8: #{tpu_custom_call.1} parent=1 // loop_exit
      _
    %2469 = vsyncpa [#allocation3], 1
    %s2470 = scalar_lea.sflag [#allocation3], 1
    %2471 = vsyncpa %s2470, 1
    %2472 = vsyncpa [#allocation6], 1
    %2473 = vsyncpa [#allocation9], 1
    %2474 = vsyncpa [#allocation12], 1
    %2475 = vsyncpa [#allocation15], 1
    %2476 = vsyncpa [#allocation4], 1
    %s2477 = scalar_lea.sflag [#allocation4], 1
    %2478 = vsyncpa %s2477, 1
    %2479 = vsyncpa [#allocation18], 1
    %s2480 = scalar_lea.sflag [#allocation18], 1
    %2481 = vsyncpa %s2480, 1

</llo_original>
